<compile_context>
chip_gen: v6e
topology: v6e:2x2x1
jax: 0.10.0
libtpu: 0.0.40
codegen_flags: <defaults>
</compile_context>

<pallas_src>
import jax
import jax.numpy as jnp
from jax.experimental import pallas as pl
from jax.experimental.pallas import tpu as pltpu

H = 128          # out_ch_final / LSTM hidden size
IN_CH = 2
C11 = 8          # out_ch_x11
C12 = 10         # out_ch_x12
C21 = 8          # out_ch_x21
C22 = 1          # out_ch_x22
FC_IN = 10       # fc_in  (== centerline length L)
SUB = 8          # TPU sublane multiple


def _round_up(x, m):
    return ((x + m - 1) // m) * m


def _make_encoder_kernel(B, traj_num, traj_pad, T, center_num, center_pad):
    MT = B * traj_pad        # padded, batched trajectory count (tile-aligned)
    f32 = jnp.float32

    def kernel(x1_ref, x2_ref,
               w11t_ref, b11_ref, w13cat_ref, b13_ref,
               wih_t_ref, whh_t_ref, b_lstm_ref,
               w21big_ref, b21big_ref, wcf_ref, bfc2_ref,
               out_ref):
        # ---------------- trajectory branch: all B*traj_pad trajectories batched ----------
        # time-major rows: row = t*MT + (b*traj_pad + j); pad rows are zero on input
        x = x1_ref[...]                                  # (T*MT, IN_CH)
        w11t = w11t_ref[...]                             # (IN_CH, C11)
        # 1x1 conv + tanh on the VPU (K=2 contraction is not worth an MXU round trip)
        y1 = jnp.tanh(x[:, 0:1] * w11t[0:1, :]
                      + x[:, 1:2] * w11t[1:2, :]
                      + b11_ref[...])                    # (T*MT, C11)

        # k=3, pad=1 conv along time: neighbours are +-MT rows away; MT % 8 == 0 so the
        # zero-padded shift concats are tile-aligned (free views, no sublane repack).
        zrow = jnp.zeros((MT, C11), f32)
        y_m1 = jnp.concatenate([zrow, y1[:(T - 1) * MT, :]], axis=0)   # y[t-1]
        y_p1 = jnp.concatenate([y1[MT:, :], zrow], axis=0)             # y[t+1]
        # fused k=3 conv: one (T*MT, 24) @ (24, C12) matmul instead of three tiny dots
        ycat = jnp.concatenate([y_m1, y1, y_p1], axis=1)               # (T*MT, 3*C11)
        y2 = jnp.tanh(jnp.dot(ycat, w13cat_ref[...], preferred_element_type=f32)
                      + b13_ref[...])                    # (T*MT, C12)

        # LSTM input projection for ALL timesteps & trajectories in one matmul (time-major).
        gx = jnp.dot(y2, wih_t_ref[...], preferred_element_type=f32) + b_lstm_ref[...]   # (T*MT, 4H)

        # Batched recurrence: one (MT, H) @ (H, 4H) matmul per step, fully unrolled (T static).
        whh_t = whh_t_ref[...]                           # (H, 4H)
        h = jnp.zeros((MT, H), f32)
        c = jnp.zeros((MT, H), f32)
        for t in range(T):
            g = gx[t * MT:(t + 1) * MT, :] + jnp.dot(h, whh_t, preferred_element_type=f32)  # (MT, 4H)
            i_g = jax.nn.sigmoid(g[:, 0:H])
            f_g = jax.nn.sigmoid(g[:, H:2 * H])
            g_g = jnp.tanh(g[:, 2 * H:3 * H])
            o_g = jax.nn.sigmoid(g[:, 3 * H:4 * H])
            c = f_g * c + i_g * g_g
            h = o_g * jnp.tanh(c)
        traj_rows = c                                    # (MT, H); torch keeps the final *cell* state
                                                         # ("h_c" in the reference is c_n)

        # ---------------- centerline branch: fully fused (2 matmuls, no channel loop) ------
        # y_all[n, c*L+l] = tanh(sum_ic w21[c,ic]*x2[n,ic,l] + b21[c])
        y_all = jnp.tanh(jnp.dot(x2_ref[...], w21big_ref[...], preferred_element_type=f32)
                         + b21big_ref[...])              # (NT, C21*L)
        # k=3 conv + Linear folded (exactly) into one (C21*L, H) matrix + bias
        center_rows = jnp.dot(y_all, wcf_ref[...], preferred_element_type=f32) + bfc2_ref[...]  # (NT, H)

        # ---------------- batched masked softmax attention over traj+center rows -----------
        tr = traj_rows.reshape(B, traj_pad, H)           # tile-aligned per-batch groups (free reshape)
        ce = center_rows.reshape(B, center_pad, H)
        mask_t = jax.lax.broadcasted_iota(jnp.int32, (1, traj_pad, H), 1) < traj_num
        mask_c = jax.lax.broadcasted_iota(jnp.int32, (1, center_pad, H), 1) < center_num
        m = jnp.maximum(
            jnp.max(jnp.where(mask_t, tr, -jnp.inf), axis=1, keepdims=True),
            jnp.max(jnp.where(mask_c, ce, -jnp.inf), axis=1, keepdims=True))   # (B, 1, H)
        et = jnp.where(mask_t, jnp.exp(tr - m), 0.0)     # pad rows contribute exactly 0
        ec = jnp.where(mask_c, jnp.exp(ce - m), 0.0)
        num = jnp.sum(et * tr, axis=1) + jnp.sum(ec * ce, axis=1)              # (B, H)
        den = jnp.sum(et, axis=1) + jnp.sum(ec, axis=1)                        # (B, H)
        out_ref[...] = num / den                         # single lane-dense (B, 128) store

    return kernel


def encoder_forward(x1, x2, params):
    B, traj_num, T, in_ch = x1.shape
    _, center_num, in_ch2, L = x2.shape
    assert in_ch == IN_CH and in_ch2 == IN_CH and L == FC_IN

    traj_pad = _round_up(traj_num, SUB)
    center_pad = _round_up(center_num, SUB)
    MT = B * traj_pad
    NT = B * center_pad

    # Layout plumbing (plain XLA, outside the kernel):
    #   trajectories -> zero-padded to traj_pad per batch, then time-major rows (T*MT, IN_CH)
    #   centerlines  -> zero-padded to center_pad per batch, channels flattened into lanes (NT, IN_CH*L)
    x1p = jnp.zeros((B, traj_pad, T, IN_CH), jnp.float32).at[:, :traj_num].set(x1.astype(jnp.float32))
    x1t = jnp.transpose(x1p, (2, 0, 1, 3)).reshape(T * MT, IN_CH)
    x2p = jnp.zeros((B, center_pad, IN_CH, L), jnp.float32).at[:, :center_num].set(x2.astype(jnp.float32))
    x2m = x2p.reshape(NT, IN_CH * L)

    weight_names = ('w11t', 'b11', 'w13cat', 'b13', 'wih_t', 'whh_t', 'b_lstm',
                    'w21big', 'b21big', 'wcf', 'bfc2')
    weight_args = [params[k] for k in weight_names]

    kernel = _make_encoder_kernel(B, traj_num, traj_pad, T, center_num, center_pad)
    vmem_spec = pl.BlockSpec(memory_space=pltpu.MemorySpace.VMEM)
    n_in = 2 + len(weight_args)

    out = pl.pallas_call(
        kernel,
        out_shape=jax.ShapeDtypeStruct((B, H), jnp.float32),
        in_specs=[vmem_spec] * n_in,
        out_specs=vmem_spec,
        # headroom for gx as B grows (within physical VMEM on v5e/v6e/v7x)
        compiler_params=pltpu.CompilerParams(vmem_limit_bytes=32 * 1024 * 1024),
    )(x1t, x2m, *weight_args)

    return out.reshape(1, B, H)   # == torch final_out.unsqueeze(0)


def init_params(key):
    ks = jax.random.split(key, 16)

    def nrm(k, shape, scale=0.1):
        return jax.random.normal(k, shape, jnp.float32) * scale

    # torch-native parameter shapes
    w11 = nrm(ks[0], (C11, IN_CH, 1));   b11 = nrm(ks[1], (C11,))
    w13 = nrm(ks[2], (C12, C11, 3));     b13 = nrm(ks[3], (C12,))
    w_ih = nrm(ks[4], (4 * H, C12));     w_hh = nrm(ks[5], (4 * H, H))
    b_ih = nrm(ks[6], (4 * H,));         b_hh = nrm(ks[7], (4 * H,))
    w21 = nrm(ks[8], (C21, IN_CH, 1));   b21 = nrm(ks[9], (C21,))
    w23 = nrm(ks[10], (C22, C21, 3));    b23 = nrm(ks[11], (C22,))
    w_fc = nrm(ks[12], (H, FC_IN));      b_fc = nrm(ks[13], (H,))

    L = FC_IN

    # --- trajectory branch ---------------------------------------------------------------
    w11t = jnp.transpose(w11[:, :, 0])                        # (IN_CH, C11)
    # fused k=3 conv weight: row k*C11 + c = W13[o, c, k]  (matches [y[t-1]|y[t]|y[t+1]] lane concat)
    w13cat = jnp.transpose(w13, (2, 1, 0)).reshape(3 * C11, C12)

    # --- centerline branch: fold 1x1 conv into (IN_CH*L, C21*L) block-diag matrix,
    #     and fold the k=3 conv + Linear (exactly) into one (C21*L, H) matrix + bias -------
    eyeL = jnp.eye(L, dtype=jnp.float32)
    # w21big[ic*L + l, c*L + l'] = w21[c, ic] * delta(l, l')
    w21big = jnp.einsum('ci,lm->ilcm', w21[:, :, 0], eyeL).reshape(IN_CH * L, C21 * L)
    b21big = jnp.repeat(b21, L).reshape(1, C21 * L)           # [c*L + l] = b21[c]

    w_fcT = w_fc.T                                            # (L, H)
    zrow = jnp.zeros((1, H), jnp.float32)
    # shifted_k[k, j, h] = w_fc[h, j - (k-1)] (zero where out of range), matching conv padding=1
    shifted_k = jnp.stack([
        jnp.concatenate([w_fcT[1:], zrow], axis=0),           # k=0 -> picks w_fc[:, j+1]
        w_fcT,                                                # k=1 -> picks w_fc[:, j]
        jnp.concatenate([zrow, w_fcT[:-1]], axis=0),          # k=2 -> picks w_fc[:, j-1]
    ], axis=0)                                                # (3, L, H)
    # wcf[c*L + j, h] = sum_k w23[0, c, k] * w_fc[h, j - k + 1]
    wcf = jnp.einsum('ck,kjh->cjh', w23[0], shifted_k).reshape(C21 * L, H)
    bfc2 = (b_fc + b23[0] * jnp.sum(w_fc, axis=1)).reshape(1, H)

    return dict(
        w11t=w11t,
        b11=b11.reshape(1, C11),
        w13cat=w13cat,
        b13=b13.reshape(1, C12),
        wih_t=w_ih.T,                                         # (C12, 4H), gate order i,f,g,o
        whh_t=w_hh.T,                                         # (H, 4H)
        b_lstm=(b_ih + b_hh).reshape(1, 4 * H),
        w21big=w21big,
        b21big=b21big,
        wcf=wcf,
        bfc2=bfc2,
    )


if __name__ == "__main__":
    key = jax.random.PRNGKey(0)
    kp, kx1, kx2 = jax.random.split(key, 3)

    params = init_params(kp)

    B, traj_num, T = 2, 3, 8
    center_num, L = 2, FC_IN   # centerline length must equal fc_in=10 (as in the torch module)

    x1 = jax.random.normal(kx1, (B, traj_num, T, IN_CH), jnp.float32)
    x2 = jax.random.normal(kx2, (B, center_num, IN_CH, L), jnp.float32)

    out = encoder_forward(x1, x2, params)
    out = jax.block_until_ready(out)
    assert out.shape == (1, B, H)
    assert bool(jnp.all(jnp.isfinite(out)))
    print("KERNEL_OK")
</pallas_src>

<mosaic_0001>
module attributes {stable_mosaic.version = 11 : i64} {
  func.func @kernel(%arg0: memref<128x2xf32, #tpu.memory_space<vmem>>, %arg1: memref<16x20xf32, #tpu.memory_space<vmem>>, %arg2: memref<2x8xf32, #tpu.memory_space<vmem>>, %arg3: memref<1x8xf32, #tpu.memory_space<vmem>>, %arg4: memref<24x10xf32, #tpu.memory_space<vmem>>, %arg5: memref<1x10xf32, #tpu.memory_space<vmem>>, %arg6: memref<10x512xf32, #tpu.memory_space<vmem>>, %arg7: memref<128x512xf32, #tpu.memory_space<vmem>>, %arg8: memref<1x512xf32, #tpu.memory_space<vmem>>, %arg9: memref<20x80xf32, #tpu.memory_space<vmem>>, %arg10: memref<1x80xf32, #tpu.memory_space<vmem>>, %arg11: memref<80x128xf32, #tpu.memory_space<vmem>>, %arg12: memref<1x128xf32, #tpu.memory_space<vmem>>, %arg13: memref<2x128xf32, #tpu.memory_space<vmem>>) attributes {dimension_semantics = [], scalar_prefetch = 0 : i64, scratch_operands = 0 : i64, tpu.core_type = #tpu.core_type<tc>} {
    %c0 = arith.constant 0 : index
    %c0_0 = arith.constant 0 : index
    %0 = vector.load %arg0[%c0, %c0_0] : memref<128x2xf32, #tpu.memory_space<vmem>>, vector<128x2xf32>
    %c0_1 = arith.constant 0 : index
    %c0_2 = arith.constant 0 : index
    %1 = vector.load %arg2[%c0_1, %c0_2] : memref<2x8xf32, #tpu.memory_space<vmem>>, vector<2x8xf32>
    %2 = vector.extract_strided_slice %0 {offsets = [0, 0], sizes = [128, 1], strides = [1, 1]} : vector<128x2xf32> to vector<128x1xf32>
    %3 = vector.extract_strided_slice %1 {offsets = [0, 0], sizes = [1, 8], strides = [1, 1]} : vector<2x8xf32> to vector<1x8xf32>
    %4 = vector.broadcast %2 : vector<128x1xf32> to vector<128x8xf32>
    %5 = vector.broadcast %3 : vector<1x8xf32> to vector<128x8xf32>
    %6 = arith.mulf %4, %5 : vector<128x8xf32>
    %7 = vector.extract_strided_slice %0 {offsets = [0, 1], sizes = [128, 1], strides = [1, 1]} : vector<128x2xf32> to vector<128x1xf32>
    %8 = vector.extract_strided_slice %1 {offsets = [1, 0], sizes = [1, 8], strides = [1, 1]} : vector<2x8xf32> to vector<1x8xf32>
    %9 = vector.broadcast %7 : vector<128x1xf32> to vector<128x8xf32>
    %10 = vector.broadcast %8 : vector<1x8xf32> to vector<128x8xf32>
    %11 = arith.mulf %9, %10 : vector<128x8xf32>
    %12 = arith.addf %6, %11 : vector<128x8xf32>
    %c0_3 = arith.constant 0 : index
    %c0_4 = arith.constant 0 : index
    %13 = vector.load %arg3[%c0_3, %c0_4] : memref<1x8xf32, #tpu.memory_space<vmem>>, vector<1x8xf32>
    %14 = vector.broadcast %13 : vector<1x8xf32> to vector<128x8xf32>
    %15 = arith.addf %12, %14 : vector<128x8xf32>
    %16 = math.tanh %15 : vector<128x8xf32>
    %cst = arith.constant 0.000000e+00 : f32
    %17 = vector.broadcast %cst : f32 to vector<16x8xf32>
    %18 = vector.extract_strided_slice %16 {offsets = [0, 0], sizes = [112, 8], strides = [1, 1]} : vector<128x8xf32> to vector<112x8xf32>
    %19 = tpu.concatenate %17, %18 in 0 : vector<16x8xf32>, vector<112x8xf32> -> vector<128x8xf32>
    %20 = vector.extract_strided_slice %16 {offsets = [16, 0], sizes = [112, 8], strides = [1, 1]} : vector<128x8xf32> to vector<112x8xf32>
    %21 = tpu.concatenate %20, %17 in 0 : vector<112x8xf32>, vector<16x8xf32> -> vector<128x8xf32>
    %22 = tpu.concatenate %19, %16, %21 in 1 : vector<128x8xf32>, vector<128x8xf32>, vector<128x8xf32> -> vector<128x24xf32>
    %c0_5 = arith.constant 0 : index
    %c0_6 = arith.constant 0 : index
    %23 = vector.load %arg4[%c0_5, %c0_6] : memref<24x10xf32, #tpu.memory_space<vmem>>, vector<24x10xf32>
    %cst_7 = arith.constant dense<0.000000e+00> : vector<128x10xf32>
    %24 = tpu.matmul %22, %23, %cst_7 {dimension_numbers = #tpu.dot_dimension_numbers<[1], [0], [0], [1], [0, 0, 1, 1], [], []>} : vector<128x24xf32>, vector<24x10xf32>, vector<128x10xf32> -> vector<128x10xf32>
    %c0_8 = arith.constant 0 : index
    %c0_9 = arith.constant 0 : index
    %25 = vector.load %arg5[%c0_8, %c0_9] : memref<1x10xf32, #tpu.memory_space<vmem>>, vector<1x10xf32>
    %26 = vector.broadcast %25 : vector<1x10xf32> to vector<128x10xf32>
    %27 = arith.addf %24, %26 : vector<128x10xf32>
    %28 = math.tanh %27 : vector<128x10xf32>
    %c0_10 = arith.constant 0 : index
    %c0_11 = arith.constant 0 : index
    %29 = vector.load %arg6[%c0_10, %c0_11] : memref<10x512xf32, #tpu.memory_space<vmem>>, vector<10x512xf32>
    %cst_12 = arith.constant dense<0.000000e+00> : vector<128x512xf32>
    %30 = tpu.matmul %28, %29, %cst_12 {dimension_numbers = #tpu.dot_dimension_numbers<[1], [0], [0], [1], [0, 0, 1, 1], [], []>} : vector<128x10xf32>, vector<10x512xf32>, vector<128x512xf32> -> vector<128x512xf32>
    %c0_13 = arith.constant 0 : index
    %c0_14 = arith.constant 0 : index
    %31 = vector.load %arg8[%c0_13, %c0_14] : memref<1x512xf32, #tpu.memory_space<vmem>>, vector<1x512xf32>
    %32 = vector.broadcast %31 : vector<1x512xf32> to vector<128x512xf32>
    %33 = arith.addf %30, %32 : vector<128x512xf32>
    %c0_15 = arith.constant 0 : index
    %c0_16 = arith.constant 0 : index
    %34 = vector.load %arg7[%c0_15, %c0_16] : memref<128x512xf32, #tpu.memory_space<vmem>>, vector<128x512xf32>
    %cst_17 = arith.constant 0.000000e+00 : f32
    %35 = vector.broadcast %cst_17 : f32 to vector<16x128xf32>
    %cst_18 = arith.constant 0.000000e+00 : f32
    %36 = vector.broadcast %cst_18 : f32 to vector<16x128xf32>
    %37 = vector.extract_strided_slice %33 {offsets = [0, 0], sizes = [16, 512], strides = [1, 1]} : vector<128x512xf32> to vector<16x512xf32>
    %cst_19 = arith.constant dense<0.000000e+00> : vector<16x512xf32>
    %38 = tpu.matmul %35, %34, %cst_19 {dimension_numbers = #tpu.dot_dimension_numbers<[1], [0], [0], [1], [0, 0, 1, 1], [], []>} : vector<16x128xf32>, vector<128x512xf32>, vector<16x512xf32> -> vector<16x512xf32>
    %39 = arith.addf %37, %38 : vector<16x512xf32>
    %40 = vector.extract_strided_slice %39 {offsets = [0, 0], sizes = [16, 128], strides = [1, 1]} : vector<16x512xf32> to vector<16x128xf32>
    %41 = arith.negf %40 : vector<16x128xf32>
    %42 = math.exp %41 : vector<16x128xf32>
    %cst_20 = arith.constant 1.000000e+00 : f32
    %43 = vector.broadcast %cst_20 : f32 to vector<16x128xf32>
    %44 = arith.addf %43, %42 : vector<16x128xf32>
    %45 = arith.divf %43, %44 : vector<16x128xf32>
    %46 = vector.extract_strided_slice %39 {offsets = [0, 128], sizes = [16, 128], strides = [1, 1]} : vector<16x512xf32> to vector<16x128xf32>
    %47 = arith.negf %46 : vector<16x128xf32>
    %48 = math.exp %47 : vector<16x128xf32>
    %cst_21 = arith.constant 1.000000e+00 : f32
    %49 = vector.broadcast %cst_21 : f32 to vector<16x128xf32>
    %50 = arith.addf %49, %48 : vector<16x128xf32>
    %51 = arith.divf %49, %50 : vector<16x128xf32>
    %52 = vector.extract_strided_slice %39 {offsets = [0, 256], sizes = [16, 128], strides = [1, 1]} : vector<16x512xf32> to vector<16x128xf32>
    %53 = math.tanh %52 : vector<16x128xf32>
    %54 = vector.extract_strided_slice %39 {offsets = [0, 384], sizes = [16, 128], strides = [1, 1]} : vector<16x512xf32> to vector<16x128xf32>
    %55 = arith.negf %54 : vector<16x128xf32>
    %56 = math.exp %55 : vector<16x128xf32>
    %cst_22 = arith.constant 1.000000e+00 : f32
    %57 = vector.broadcast %cst_22 : f32 to vector<16x128xf32>
    %58 = arith.addf %57, %56 : vector<16x128xf32>
    %59 = arith.divf %57, %58 : vector<16x128xf32>
    %60 = arith.mulf %51, %36 : vector<16x128xf32>
    %61 = arith.mulf %45, %53 : vector<16x128xf32>
    %62 = arith.addf %60, %61 : vector<16x128xf32>
    %63 = math.tanh %62 : vector<16x128xf32>
    %64 = arith.mulf %59, %63 : vector<16x128xf32>
    %65 = vector.extract_strided_slice %33 {offsets = [16, 0], sizes = [16, 512], strides = [1, 1]} : vector<128x512xf32> to vector<16x512xf32>
    %cst_23 = arith.constant dense<0.000000e+00> : vector<16x512xf32>
    %66 = tpu.matmul %64, %34, %cst_23 {dimension_numbers = #tpu.dot_dimension_numbers<[1], [0], [0], [1], [0, 0, 1, 1], [], []>} : vector<16x128xf32>, vector<128x512xf32>, vector<16x512xf32> -> vector<16x512xf32>
    %67 = arith.addf %65, %66 : vector<16x512xf32>
    %68 = vector.extract_strided_slice %67 {offsets = [0, 0], sizes = [16, 128], strides = [1, 1]} : vector<16x512xf32> to vector<16x128xf32>
    %69 = arith.negf %68 : vector<16x128xf32>
    %70 = math.exp %69 : vector<16x128xf32>
    %cst_24 = arith.constant 1.000000e+00 : f32
    %71 = vector.broadcast %cst_24 : f32 to vector<16x128xf32>
    %72 = arith.addf %71, %70 : vector<16x128xf32>
    %73 = arith.divf %71, %72 : vector<16x128xf32>
    %74 = vector.extract_strided_slice %67 {offsets = [0, 128], sizes = [16, 128], strides = [1, 1]} : vector<16x512xf32> to vector<16x128xf32>
    %75 = arith.negf %74 : vector<16x128xf32>
    %76 = math.exp %75 : vector<16x128xf32>
    %cst_25 = arith.constant 1.000000e+00 : f32
    %77 = vector.broadcast %cst_25 : f32 to vector<16x128xf32>
    %78 = arith.addf %77, %76 : vector<16x128xf32>
    %79 = arith.divf %77, %78 : vector<16x128xf32>
    %80 = vector.extract_strided_slice %67 {offsets = [0, 256], sizes = [16, 128], strides = [1, 1]} : vector<16x512xf32> to vector<16x128xf32>
    %81 = math.tanh %80 : vector<16x128xf32>
    %82 = vector.extract_strided_slice %67 {offsets = [0, 384], sizes = [16, 128], strides = [1, 1]} : vector<16x512xf32> to vector<16x128xf32>
    %83 = arith.negf %82 : vector<16x128xf32>
    %84 = math.exp %83 : vector<16x128xf32>
    %cst_26 = arith.constant 1.000000e+00 : f32
    %85 = vector.broadcast %cst_26 : f32 to vector<16x128xf32>
    %86 = arith.addf %85, %84 : vector<16x128xf32>
    %87 = arith.divf %85, %86 : vector<16x128xf32>
    %88 = arith.mulf %79, %62 : vector<16x128xf32>
    %89 = arith.mulf %73, %81 : vector<16x128xf32>
    %90 = arith.addf %88, %89 : vector<16x128xf32>
    %91 = math.tanh %90 : vector<16x128xf32>
    %92 = arith.mulf %87, %91 : vector<16x128xf32>
    %93 = vector.extract_strided_slice %33 {offsets = [32, 0], sizes = [16, 512], strides = [1, 1]} : vector<128x512xf32> to vector<16x512xf32>
    %cst_27 = arith.constant dense<0.000000e+00> : vector<16x512xf32>
    %94 = tpu.matmul %92, %34, %cst_27 {dimension_numbers = #tpu.dot_dimension_numbers<[1], [0], [0], [1], [0, 0, 1, 1], [], []>} : vector<16x128xf32>, vector<128x512xf32>, vector<16x512xf32> -> vector<16x512xf32>
    %95 = arith.addf %93, %94 : vector<16x512xf32>
    %96 = vector.extract_strided_slice %95 {offsets = [0, 0], sizes = [16, 128], strides = [1, 1]} : vector<16x512xf32> to vector<16x128xf32>
    %97 = arith.negf %96 : vector<16x128xf32>
    %98 = math.exp %97 : vector<16x128xf32>
    %cst_28 = arith.constant 1.000000e+00 : f32
    %99 = vector.broadcast %cst_28 : f32 to vector<16x128xf32>
    %100 = arith.addf %99, %98 : vector<16x128xf32>
    %101 = arith.divf %99, %100 : vector<16x128xf32>
    %102 = vector.extract_strided_slice %95 {offsets = [0, 128], sizes = [16, 128], strides = [1, 1]} : vector<16x512xf32> to vector<16x128xf32>
    %103 = arith.negf %102 : vector<16x128xf32>
    %104 = math.exp %103 : vector<16x128xf32>
    %cst_29 = arith.constant 1.000000e+00 : f32
    %105 = vector.broadcast %cst_29 : f32 to vector<16x128xf32>
    %106 = arith.addf %105, %104 : vector<16x128xf32>
    %107 = arith.divf %105, %106 : vector<16x128xf32>
    %108 = vector.extract_strided_slice %95 {offsets = [0, 256], sizes = [16, 128], strides = [1, 1]} : vector<16x512xf32> to vector<16x128xf32>
    %109 = math.tanh %108 : vector<16x128xf32>
    %110 = vector.extract_strided_slice %95 {offsets = [0, 384], sizes = [16, 128], strides = [1, 1]} : vector<16x512xf32> to vector<16x128xf32>
    %111 = arith.negf %110 : vector<16x128xf32>
    %112 = math.exp %111 : vector<16x128xf32>
    %cst_30 = arith.constant 1.000000e+00 : f32
    %113 = vector.broadcast %cst_30 : f32 to vector<16x128xf32>
    %114 = arith.addf %113, %112 : vector<16x128xf32>
    %115 = arith.divf %113, %114 : vector<16x128xf32>
    %116 = arith.mulf %107, %90 : vector<16x128xf32>
    %117 = arith.mulf %101, %109 : vector<16x128xf32>
    %118 = arith.addf %116, %117 : vector<16x128xf32>
    %119 = math.tanh %118 : vector<16x128xf32>
    %120 = arith.mulf %115, %119 : vector<16x128xf32>
    %121 = vector.extract_strided_slice %33 {offsets = [48, 0], sizes = [16, 512], strides = [1, 1]} : vector<128x512xf32> to vector<16x512xf32>
    %cst_31 = arith.constant dense<0.000000e+00> : vector<16x512xf32>
    %122 = tpu.matmul %120, %34, %cst_31 {dimension_numbers = #tpu.dot_dimension_numbers<[1], [0], [0], [1], [0, 0, 1, 1], [], []>} : vector<16x128xf32>, vector<128x512xf32>, vector<16x512xf32> -> vector<16x512xf32>
    %123 = arith.addf %121, %122 : vector<16x512xf32>
    %124 = vector.extract_strided_slice %123 {offsets = [0, 0], sizes = [16, 128], strides = [1, 1]} : vector<16x512xf32> to vector<16x128xf32>
    %125 = arith.negf %124 : vector<16x128xf32>
    %126 = math.exp %125 : vector<16x128xf32>
    %cst_32 = arith.constant 1.000000e+00 : f32
    %127 = vector.broadcast %cst_32 : f32 to vector<16x128xf32>
    %128 = arith.addf %127, %126 : vector<16x128xf32>
    %129 = arith.divf %127, %128 : vector<16x128xf32>
    %130 = vector.extract_strided_slice %123 {offsets = [0, 128], sizes = [16, 128], strides = [1, 1]} : vector<16x512xf32> to vector<16x128xf32>
    %131 = arith.negf %130 : vector<16x128xf32>
    %132 = math.exp %131 : vector<16x128xf32>
    %cst_33 = arith.constant 1.000000e+00 : f32
    %133 = vector.broadcast %cst_33 : f32 to vector<16x128xf32>
    %134 = arith.addf %133, %132 : vector<16x128xf32>
    %135 = arith.divf %133, %134 : vector<16x128xf32>
    %136 = vector.extract_strided_slice %123 {offsets = [0, 256], sizes = [16, 128], strides = [1, 1]} : vector<16x512xf32> to vector<16x128xf32>
    %137 = math.tanh %136 : vector<16x128xf32>
    %138 = vector.extract_strided_slice %123 {offsets = [0, 384], sizes = [16, 128], strides = [1, 1]} : vector<16x512xf32> to vector<16x128xf32>
    %139 = arith.negf %138 : vector<16x128xf32>
    %140 = math.exp %139 : vector<16x128xf32>
    %cst_34 = arith.constant 1.000000e+00 : f32
    %141 = vector.broadcast %cst_34 : f32 to vector<16x128xf32>
    %142 = arith.addf %141, %140 : vector<16x128xf32>
    %143 = arith.divf %141, %142 : vector<16x128xf32>
    %144 = arith.mulf %135, %118 : vector<16x128xf32>
    %145 = arith.mulf %129, %137 : vector<16x128xf32>
    %146 = arith.addf %144, %145 : vector<16x128xf32>
    %147 = math.tanh %146 : vector<16x128xf32>
    %148 = arith.mulf %143, %147 : vector<16x128xf32>
    %149 = vector.extract_strided_slice %33 {offsets = [64, 0], sizes = [16, 512], strides = [1, 1]} : vector<128x512xf32> to vector<16x512xf32>
    %cst_35 = arith.constant dense<0.000000e+00> : vector<16x512xf32>
    %150 = tpu.matmul %148, %34, %cst_35 {dimension_numbers = #tpu.dot_dimension_numbers<[1], [0], [0], [1], [0, 0, 1, 1], [], []>} : vector<16x128xf32>, vector<128x512xf32>, vector<16x512xf32> -> vector<16x512xf32>
    %151 = arith.addf %149, %150 : vector<16x512xf32>
    %152 = vector.extract_strided_slice %151 {offsets = [0, 0], sizes = [16, 128], strides = [1, 1]} : vector<16x512xf32> to vector<16x128xf32>
    %153 = arith.negf %152 : vector<16x128xf32>
    %154 = math.exp %153 : vector<16x128xf32>
    %cst_36 = arith.constant 1.000000e+00 : f32
    %155 = vector.broadcast %cst_36 : f32 to vector<16x128xf32>
    %156 = arith.addf %155, %154 : vector<16x128xf32>
    %157 = arith.divf %155, %156 : vector<16x128xf32>
    %158 = vector.extract_strided_slice %151 {offsets = [0, 128], sizes = [16, 128], strides = [1, 1]} : vector<16x512xf32> to vector<16x128xf32>
    %159 = arith.negf %158 : vector<16x128xf32>
    %160 = math.exp %159 : vector<16x128xf32>
    %cst_37 = arith.constant 1.000000e+00 : f32
    %161 = vector.broadcast %cst_37 : f32 to vector<16x128xf32>
    %162 = arith.addf %161, %160 : vector<16x128xf32>
    %163 = arith.divf %161, %162 : vector<16x128xf32>
    %164 = vector.extract_strided_slice %151 {offsets = [0, 256], sizes = [16, 128], strides = [1, 1]} : vector<16x512xf32> to vector<16x128xf32>
    %165 = math.tanh %164 : vector<16x128xf32>
    %166 = vector.extract_strided_slice %151 {offsets = [0, 384], sizes = [16, 128], strides = [1, 1]} : vector<16x512xf32> to vector<16x128xf32>
    %167 = arith.negf %166 : vector<16x128xf32>
    %168 = math.exp %167 : vector<16x128xf32>
    %cst_38 = arith.constant 1.000000e+00 : f32
    %169 = vector.broadcast %cst_38 : f32 to vector<16x128xf32>
    %170 = arith.addf %169, %168 : vector<16x128xf32>
    %171 = arith.divf %169, %170 : vector<16x128xf32>
    %172 = arith.mulf %163, %146 : vector<16x128xf32>
    %173 = arith.mulf %157, %165 : vector<16x128xf32>
    %174 = arith.addf %172, %173 : vector<16x128xf32>
    %175 = math.tanh %174 : vector<16x128xf32>
    %176 = arith.mulf %171, %175 : vector<16x128xf32>
    %177 = vector.extract_strided_slice %33 {offsets = [80, 0], sizes = [16, 512], strides = [1, 1]} : vector<128x512xf32> to vector<16x512xf32>
    %cst_39 = arith.constant dense<0.000000e+00> : vector<16x512xf32>
    %178 = tpu.matmul %176, %34, %cst_39 {dimension_numbers = #tpu.dot_dimension_numbers<[1], [0], [0], [1], [0, 0, 1, 1], [], []>} : vector<16x128xf32>, vector<128x512xf32>, vector<16x512xf32> -> vector<16x512xf32>
    %179 = arith.addf %177, %178 : vector<16x512xf32>
    %180 = vector.extract_strided_slice %179 {offsets = [0, 0], sizes = [16, 128], strides = [1, 1]} : vector<16x512xf32> to vector<16x128xf32>
    %181 = arith.negf %180 : vector<16x128xf32>
    %182 = math.exp %181 : vector<16x128xf32>
    %cst_40 = arith.constant 1.000000e+00 : f32
    %183 = vector.broadcast %cst_40 : f32 to vector<16x128xf32>
    %184 = arith.addf %183, %182 : vector<16x128xf32>
    %185 = arith.divf %183, %184 : vector<16x128xf32>
    %186 = vector.extract_strided_slice %179 {offsets = [0, 128], sizes = [16, 128], strides = [1, 1]} : vector<16x512xf32> to vector<16x128xf32>
    %187 = arith.negf %186 : vector<16x128xf32>
    %188 = math.exp %187 : vector<16x128xf32>
    %cst_41 = arith.constant 1.000000e+00 : f32
    %189 = vector.broadcast %cst_41 : f32 to vector<16x128xf32>
    %190 = arith.addf %189, %188 : vector<16x128xf32>
    %191 = arith.divf %189, %190 : vector<16x128xf32>
    %192 = vector.extract_strided_slice %179 {offsets = [0, 256], sizes = [16, 128], strides = [1, 1]} : vector<16x512xf32> to vector<16x128xf32>
    %193 = math.tanh %192 : vector<16x128xf32>
    %194 = vector.extract_strided_slice %179 {offsets = [0, 384], sizes = [16, 128], strides = [1, 1]} : vector<16x512xf32> to vector<16x128xf32>
    %195 = arith.negf %194 : vector<16x128xf32>
    %196 = math.exp %195 : vector<16x128xf32>
    %cst_42 = arith.constant 1.000000e+00 : f32
    %197 = vector.broadcast %cst_42 : f32 to vector<16x128xf32>
    %198 = arith.addf %197, %196 : vector<16x128xf32>
    %199 = arith.divf %197, %198 : vector<16x128xf32>
    %200 = arith.mulf %191, %174 : vector<16x128xf32>
    %201 = arith.mulf %185, %193 : vector<16x128xf32>
    %202 = arith.addf %200, %201 : vector<16x128xf32>
    %203 = math.tanh %202 : vector<16x128xf32>
    %204 = arith.mulf %199, %203 : vector<16x128xf32>
    %205 = vector.extract_strided_slice %33 {offsets = [96, 0], sizes = [16, 512], strides = [1, 1]} : vector<128x512xf32> to vector<16x512xf32>
    %cst_43 = arith.constant dense<0.000000e+00> : vector<16x512xf32>
    %206 = tpu.matmul %204, %34, %cst_43 {dimension_numbers = #tpu.dot_dimension_numbers<[1], [0], [0], [1], [0, 0, 1, 1], [], []>} : vector<16x128xf32>, vector<128x512xf32>, vector<16x512xf32> -> vector<16x512xf32>
    %207 = arith.addf %205, %206 : vector<16x512xf32>
    %208 = vector.extract_strided_slice %207 {offsets = [0, 0], sizes = [16, 128], strides = [1, 1]} : vector<16x512xf32> to vector<16x128xf32>
    %209 = arith.negf %208 : vector<16x128xf32>
    %210 = math.exp %209 : vector<16x128xf32>
    %cst_44 = arith.constant 1.000000e+00 : f32
    %211 = vector.broadcast %cst_44 : f32 to vector<16x128xf32>
    %212 = arith.addf %211, %210 : vector<16x128xf32>
    %213 = arith.divf %211, %212 : vector<16x128xf32>
    %214 = vector.extract_strided_slice %207 {offsets = [0, 128], sizes = [16, 128], strides = [1, 1]} : vector<16x512xf32> to vector<16x128xf32>
    %215 = arith.negf %214 : vector<16x128xf32>
    %216 = math.exp %215 : vector<16x128xf32>
    %cst_45 = arith.constant 1.000000e+00 : f32
    %217 = vector.broadcast %cst_45 : f32 to vector<16x128xf32>
    %218 = arith.addf %217, %216 : vector<16x128xf32>
    %219 = arith.divf %217, %218 : vector<16x128xf32>
    %220 = vector.extract_strided_slice %207 {offsets = [0, 256], sizes = [16, 128], strides = [1, 1]} : vector<16x512xf32> to vector<16x128xf32>
    %221 = math.tanh %220 : vector<16x128xf32>
    %222 = vector.extract_strided_slice %207 {offsets = [0, 384], sizes = [16, 128], strides = [1, 1]} : vector<16x512xf32> to vector<16x128xf32>
    %223 = arith.negf %222 : vector<16x128xf32>
    %224 = math.exp %223 : vector<16x128xf32>
    %cst_46 = arith.constant 1.000000e+00 : f32
    %225 = vector.broadcast %cst_46 : f32 to vector<16x128xf32>
    %226 = arith.addf %225, %224 : vector<16x128xf32>
    %227 = arith.divf %225, %226 : vector<16x128xf32>
    %228 = arith.mulf %219, %202 : vector<16x128xf32>
    %229 = arith.mulf %213, %221 : vector<16x128xf32>
    %230 = arith.addf %228, %229 : vector<16x128xf32>
    %231 = math.tanh %230 : vector<16x128xf32>
    %232 = arith.mulf %227, %231 : vector<16x128xf32>
    %233 = vector.extract_strided_slice %33 {offsets = [112, 0], sizes = [16, 512], strides = [1, 1]} : vector<128x512xf32> to vector<16x512xf32>
    %cst_47 = arith.constant dense<0.000000e+00> : vector<16x512xf32>
    %234 = tpu.matmul %232, %34, %cst_47 {dimension_numbers = #tpu.dot_dimension_numbers<[1], [0], [0], [1], [0, 0, 1, 1], [], []>} : vector<16x128xf32>, vector<128x512xf32>, vector<16x512xf32> -> vector<16x512xf32>
    %235 = arith.addf %233, %234 : vector<16x512xf32>
    %236 = vector.extract_strided_slice %235 {offsets = [0, 0], sizes = [16, 128], strides = [1, 1]} : vector<16x512xf32> to vector<16x128xf32>
    %237 = arith.negf %236 : vector<16x128xf32>
    %238 = math.exp %237 : vector<16x128xf32>
    %cst_48 = arith.constant 1.000000e+00 : f32
    %239 = vector.broadcast %cst_48 : f32 to vector<16x128xf32>
    %240 = arith.addf %239, %238 : vector<16x128xf32>
    %241 = arith.divf %239, %240 : vector<16x128xf32>
    %242 = vector.extract_strided_slice %235 {offsets = [0, 128], sizes = [16, 128], strides = [1, 1]} : vector<16x512xf32> to vector<16x128xf32>
    %243 = arith.negf %242 : vector<16x128xf32>
    %244 = math.exp %243 : vector<16x128xf32>
    %cst_49 = arith.constant 1.000000e+00 : f32
    %245 = vector.broadcast %cst_49 : f32 to vector<16x128xf32>
    %246 = arith.addf %245, %244 : vector<16x128xf32>
    %247 = arith.divf %245, %246 : vector<16x128xf32>
    %248 = vector.extract_strided_slice %235 {offsets = [0, 256], sizes = [16, 128], strides = [1, 1]} : vector<16x512xf32> to vector<16x128xf32>
    %249 = math.tanh %248 : vector<16x128xf32>
    %250 = arith.mulf %247, %230 : vector<16x128xf32>
    %251 = arith.mulf %241, %249 : vector<16x128xf32>
    %252 = arith.addf %250, %251 : vector<16x128xf32>
    %c0_50 = arith.constant 0 : index
    %c0_51 = arith.constant 0 : index
    %253 = vector.load %arg1[%c0_50, %c0_51] : memref<16x20xf32, #tpu.memory_space<vmem>>, vector<16x20xf32>
    %c0_52 = arith.constant 0 : index
    %c0_53 = arith.constant 0 : index
    %254 = vector.load %arg9[%c0_52, %c0_53] : memref<20x80xf32, #tpu.memory_space<vmem>>, vector<20x80xf32>
    %cst_54 = arith.constant dense<0.000000e+00> : vector<16x80xf32>
    %255 = tpu.matmul %253, %254, %cst_54 {dimension_numbers = #tpu.dot_dimension_numbers<[1], [0], [0], [1], [0, 0, 1, 1], [], []>} : vector<16x20xf32>, vector<20x80xf32>, vector<16x80xf32> -> vector<16x80xf32>
    %c0_55 = arith.constant 0 : index
    %c0_56 = arith.constant 0 : index
    %256 = vector.load %arg10[%c0_55, %c0_56] : memref<1x80xf32, #tpu.memory_space<vmem>>, vector<1x80xf32>
    %257 = vector.broadcast %256 : vector<1x80xf32> to vector<16x80xf32>
    %258 = arith.addf %255, %257 : vector<16x80xf32>
    %259 = math.tanh %258 : vector<16x80xf32>
    %c0_57 = arith.constant 0 : index
    %c0_58 = arith.constant 0 : index
    %260 = vector.load %arg11[%c0_57, %c0_58] : memref<80x128xf32, #tpu.memory_space<vmem>>, vector<80x128xf32>
    %cst_59 = arith.constant dense<0.000000e+00> : vector<16x128xf32>
    %261 = tpu.matmul %259, %260, %cst_59 {dimension_numbers = #tpu.dot_dimension_numbers<[1], [0], [0], [1], [0, 0, 1, 1], [], []>} : vector<16x80xf32>, vector<80x128xf32>, vector<16x128xf32> -> vector<16x128xf32>
    %c0_60 = arith.constant 0 : index
    %c0_61 = arith.constant 0 : index
    %262 = vector.load %arg12[%c0_60, %c0_61] : memref<1x128xf32, #tpu.memory_space<vmem>>, vector<1x128xf32>
    %263 = vector.broadcast %262 : vector<1x128xf32> to vector<16x128xf32>
    %264 = arith.addf %261, %263 : vector<16x128xf32>
    %265 = vector.shape_cast %252 : vector<16x128xf32> to vector<2x8x128xf32>
    %266 = vector.shape_cast %264 : vector<16x128xf32> to vector<2x8x128xf32>
    %267 = tpu.iota {dimensions = array<i32: 1>} : vector<1x8x128xi32>
    %c3_i32 = arith.constant 3 : i32
    %268 = vector.broadcast %c3_i32 : i32 to vector<1x8x128xi32>
    %269 = arith.cmpi slt, %267, %268 : vector<1x8x128xi32>
    %270 = tpu.iota {dimensions = array<i32: 1>} : vector<1x8x128xi32>
    %c2_i32 = arith.constant 2 : i32
    %271 = vector.broadcast %c2_i32 : i32 to vector<1x8x128xi32>
    %272 = arith.cmpi slt, %270, %271 : vector<1x8x128xi32>
    %cst_62 = arith.constant 0xFF800000 : f32
    %273 = vector.shape_cast %269 : vector<1x8x128xi1> to vector<1x8x128xi1>
    %274 = vector.broadcast %273 : vector<1x8x128xi1> to vector<2x8x128xi1>
    %275 = vector.broadcast %cst_62 : f32 to vector<2x8x128xf32>
    %276 = arith.select %274, %265, %275 : vector<2x8x128xi1>, vector<2x8x128xf32>
    %cst_63 = arith.constant dense<0xFF800000> : vector<2x128xf32>
    %277 = vector.multi_reduction <maximumf>, %276, %cst_63 [1] : vector<2x8x128xf32> to vector<2x128xf32>
    %278 = vector.shape_cast %277 : vector<2x128xf32> to vector<2x1x128xf32>
    %cst_64 = arith.constant 0xFF800000 : f32
    %279 = vector.shape_cast %272 : vector<1x8x128xi1> to vector<1x8x128xi1>
    %280 = vector.broadcast %279 : vector<1x8x128xi1> to vector<2x8x128xi1>
    %281 = vector.broadcast %cst_64 : f32 to vector<2x8x128xf32>
    %282 = arith.select %280, %266, %281 : vector<2x8x128xi1>, vector<2x8x128xf32>
    %cst_65 = arith.constant dense<0xFF800000> : vector<2x128xf32>
    %283 = vector.multi_reduction <maximumf>, %282, %cst_65 [1] : vector<2x8x128xf32> to vector<2x128xf32>
    %284 = vector.shape_cast %283 : vector<2x128xf32> to vector<2x1x128xf32>
    %285 = arith.maximumf %278, %284 : vector<2x1x128xf32>
    %286 = vector.broadcast %285 : vector<2x1x128xf32> to vector<2x8x128xf32>
    %287 = arith.subf %265, %286 : vector<2x8x128xf32>
    %288 = math.exp %287 : vector<2x8x128xf32>
    %cst_66 = arith.constant 0.000000e+00 : f32
    %289 = vector.shape_cast %269 : vector<1x8x128xi1> to vector<1x8x128xi1>
    %290 = vector.broadcast %289 : vector<1x8x128xi1> to vector<2x8x128xi1>
    %291 = vector.broadcast %cst_66 : f32 to vector<2x8x128xf32>
    %292 = arith.select %290, %288, %291 : vector<2x8x128xi1>, vector<2x8x128xf32>
    %293 = vector.broadcast %285 : vector<2x1x128xf32> to vector<2x8x128xf32>
    %294 = arith.subf %266, %293 : vector<2x8x128xf32>
    %295 = math.exp %294 : vector<2x8x128xf32>
    %cst_67 = arith.constant 0.000000e+00 : f32
    %296 = vector.shape_cast %272 : vector<1x8x128xi1> to vector<1x8x128xi1>
    %297 = vector.broadcast %296 : vector<1x8x128xi1> to vector<2x8x128xi1>
    %298 = vector.broadcast %cst_67 : f32 to vector<2x8x128xf32>
    %299 = arith.select %297, %295, %298 : vector<2x8x128xi1>, vector<2x8x128xf32>
    %300 = arith.mulf %292, %265 : vector<2x8x128xf32>
    %cst_68 = arith.constant dense<0.000000e+00> : vector<2x128xf32>
    %301 = vector.multi_reduction <add>, %300, %cst_68 [1] : vector<2x8x128xf32> to vector<2x128xf32>
    %302 = arith.mulf %299, %266 : vector<2x8x128xf32>
    %cst_69 = arith.constant dense<0.000000e+00> : vector<2x128xf32>
    %303 = vector.multi_reduction <add>, %302, %cst_69 [1] : vector<2x8x128xf32> to vector<2x128xf32>
    %304 = arith.addf %301, %303 : vector<2x128xf32>
    %cst_70 = arith.constant dense<0.000000e+00> : vector<2x128xf32>
    %305 = vector.multi_reduction <add>, %292, %cst_70 [1] : vector<2x8x128xf32> to vector<2x128xf32>
    %cst_71 = arith.constant dense<0.000000e+00> : vector<2x128xf32>
    %306 = vector.multi_reduction <add>, %299, %cst_71 [1] : vector<2x8x128xf32> to vector<2x128xf32>
    %307 = arith.addf %305, %306 : vector<2x128xf32>
    %308 = arith.divf %304, %307 : vector<2x128xf32>
    %c0_72 = arith.constant 0 : index
    %c0_73 = arith.constant 0 : index
    %309 = vector.load %arg13[%c0_72, %c0_73] : memref<2x128xf32, #tpu.memory_space<vmem>>, vector<2x128xf32>
    tpu.vector_store %arg13[%c0_72, %c0_73], %308 {strides = array<i32>} : memref<2x128xf32, #tpu.memory_space<vmem>>, vector<2x128xf32>,
    return
  }
}

</mosaic_0001>

<llo_original>
// kernel: tpu_custom_call.1
$region0: #{tpu_custom_call.1}
  #allocation0 [shape = 'u32[]', space=smem, size = 0x4, offset = 0x4, fixed_abs, tag = 'smem constant byte address 0x4 - core index']
  #allocation1 [shape = 'u32[144,128]{1,0:T(1,128)}', space=vmem, size = 0x12000, scoped, tag = 'internal scratch']
  %s0 = inlined_call_operand.vmem [shape: f32[128,2], index: 0, kind: input, shape index: {}]
  %s1 = inlined_call_operand.hbm [shape: f32[16,20], index: 1, kind: input, shape index: {}]
  %s2 = inlined_call_operand.hbm [shape: f32[2,8], index: 2, kind: input, shape index: {}]
  %s3 = inlined_call_operand.vmem [shape: f32[1,8], index: 3, kind: input, shape index: {}]
  %s4 = inlined_call_operand.vmem [shape: f32[24,10], index: 4, kind: input, shape index: {}]
  %s5 = inlined_call_operand.vmem [shape: f32[1,10], index: 5, kind: input, shape index: {}]
  %s6 = inlined_call_operand.vmem [shape: f32[10,512], index: 6, kind: input, shape index: {}]
  %s7 = inlined_call_operand.hbm [shape: f32[128,512], index: 7, kind: input, shape index: {}]
  %s8 = inlined_call_operand.vmem [shape: f32[1,512], index: 8, kind: input, shape index: {}]
  %s9 = inlined_call_operand.vmem [shape: f32[20,80], index: 9, kind: input, shape index: {}]
  %s10 = inlined_call_operand.vmem [shape: f32[1,80], index: 10, kind: input, shape index: {}]
  %s11 = inlined_call_operand.vmem [shape: f32[80,128], index: 11, kind: input, shape index: {}]
  %s12 = inlined_call_operand.vmem [shape: f32[1,128], index: 12, kind: input, shape index: {}]
  %s13 = inlined_call_operand.hbm [shape: f32[2,128], index: 13, kind: output, shape index: {}]
  %s14 = sld [smem:[#allocation0]]
  $region74: #{tpu_custom_call.1} parent=0
    _
  %s16 = ssub.s32 1, %s14
  %s17 = scalar_select 0, %s16, %s14
  $region1: #{tpu_custom_call.1} parent=0
    #allocation2 [shape = 'u8[8192]{0}', space=vmem, size = 0x2000, scoped, tag = 'input window, operand 1, single buffered']
    #allocation3 [shape = 's32[1]{0}', space=sflag, size = 0x4, scoped, tag = 'scoped memory for tpu_custom_call.1']
    #allocation4 [shape = 's32[1]{0}', space=sflag, size = 0x4, scoped, tag = 'scoped memory for tpu_custom_call.1']
    #allocation5 [shape = 'u8[1024]{0}', space=vmem, size = 0x400, scoped, tag = 'input window, operand 2, single buffered']
    #allocation6 [shape = 's32[1]{0}', space=sflag, size = 0x4, scoped, tag = 'scoped memory for tpu_custom_call.1']
    #allocation7 [shape = 'u8[262144]{0}', space=vmem, size = 0x40000, scoped, tag = 'input window, operand 7, single buffered']
    #allocation8 [shape = 'u8[1024]{0}', space=vmem, size = 0x400, scoped, tag = 'output window, operand 0, single buffered']
    %18 = vsyncpa [#allocation3], 0
    %19 = vsyncpa [#allocation6], 0
    %20 = vsyncpa [#allocation4], 0
    // Predicated region
    $region2: #{tpu_custom_call.1} parent=1 // pred_check
      _
    $region3: #{tpu_custom_call.1} parent=1 // pred_check_branch
      %22 = sbr.rel (0) target = $region5
    $region4: #{tpu_custom_call.1} parent=1 // pred_region
      _
    $region5: #{tpu_custom_call.1} parent=1 // pred_fallthru
      _
    // Predicated region
    $region6: #{tpu_custom_call.1} parent=1 // pred_check
      _
    $region7: #{tpu_custom_call.1} parent=1 // pred_check_branch
      %24 = sbr.rel (0) target = $region9
    $region8: #{tpu_custom_call.1} parent=1 // pred_region
      %s26 = ssub.s32 256, 256
      %27 = vsyncadd [#allocation3], %s26
      %s28 = sshll.u32 [#allocation2], 4
      %s29 = int_to_ptr.vmem [resolvable:$true] %s28
      %34 = dma.hbm_to_vmem [thread:$0]  %s1, 256, %s29, [#allocation3], 128, 128, 8
    $region9: #{tpu_custom_call.1} parent=1 // pred_fallthru
      _
    // Predicated region
    $region10: #{tpu_custom_call.1} parent=1 // pred_check
      _
    $region11: #{tpu_custom_call.1} parent=1 // pred_check_branch
      %36 = sbr.rel (0) target = $region13
    $region12: #{tpu_custom_call.1} parent=1 // pred_region
      %s38 = ssub.s32 32, 32
      %39 = vsyncadd [#allocation6], %s38
      %s41 = sshll.u32 [#allocation5], 4
      %s42 = int_to_ptr.vmem [resolvable:$true] %s41
      %44 = dma.hbm_to_vmem [thread:$0]  %s2, 32, %s42, [#allocation6]
    $region13: #{tpu_custom_call.1} parent=1 // pred_fallthru
      _
    // Predicated region
    $region14: #{tpu_custom_call.1} parent=1 // pred_check
      _
    $region15: #{tpu_custom_call.1} parent=1 // pred_check_branch
      %46 = sbr.rel (0) target = $region17
    $region16: #{tpu_custom_call.1} parent=1 // pred_region
      _
    $region17: #{tpu_custom_call.1} parent=1 // pred_fallthru
      _
    // Predicated region
    $region18: #{tpu_custom_call.1} parent=1 // pred_check
      _
    $region19: #{tpu_custom_call.1} parent=1 // pred_check_branch
      %48 = sbr.rel (0) target = $region21
    $region20: #{tpu_custom_call.1} parent=1 // pred_region
      _
    $region21: #{tpu_custom_call.1} parent=1 // pred_fallthru
      _
    // Predicated region
    $region22: #{tpu_custom_call.1} parent=1 // pred_check
      _
    $region23: #{tpu_custom_call.1} parent=1 // pred_check_branch
      %50 = sbr.rel (0) target = $region25
    $region24: #{tpu_custom_call.1} parent=1 // pred_region
      _
    $region25: #{tpu_custom_call.1} parent=1 // pred_fallthru
      _
    // Predicated region
    $region26: #{tpu_custom_call.1} parent=1 // pred_check
      _
    $region27: #{tpu_custom_call.1} parent=1 // pred_check_branch
      %52 = sbr.rel (0) target = $region29
    $region28: #{tpu_custom_call.1} parent=1 // pred_region
      _
    $region29: #{tpu_custom_call.1} parent=1 // pred_fallthru
      _
    // Predicated region
    $region30: #{tpu_custom_call.1} parent=1 // pred_check
      _
    $region31: #{tpu_custom_call.1} parent=1 // pred_check_branch
      %54 = sbr.rel (0) target = $region33
    $region32: #{tpu_custom_call.1} parent=1 // pred_region
      %s56 = ssub.s32 8192, 8192
      %57 = vsyncadd [#allocation6], %s56
      %s58 = sshll.u32 [#allocation7], 4
      %s59 = int_to_ptr.vmem [resolvable:$true] %s58
      %64 = dma.hbm_to_vmem [thread:$0]  %s7, 8192, %s59, [#allocation6], 512, 512, 32
    $region33: #{tpu_custom_call.1} parent=1 // pred_fallthru
      _
    // Predicated region
    $region34: #{tpu_custom_call.1} parent=1 // pred_check
      _
    $region35: #{tpu_custom_call.1} parent=1 // pred_check_branch
      %66 = sbr.rel (0) target = $region37
    $region36: #{tpu_custom_call.1} parent=1 // pred_region
      _
    $region37: #{tpu_custom_call.1} parent=1 // pred_fallthru
      _
    // Predicated region
    $region38: #{tpu_custom_call.1} parent=1 // pred_check
      _
    $region39: #{tpu_custom_call.1} parent=1 // pred_check_branch
      %68 = sbr.rel (0) target = $region41
    $region40: #{tpu_custom_call.1} parent=1 // pred_region
      _
    $region41: #{tpu_custom_call.1} parent=1 // pred_fallthru
      _
    // Predicated region
    $region42: #{tpu_custom_call.1} parent=1 // pred_check
      _
    $region43: #{tpu_custom_call.1} parent=1 // pred_check_branch
      %70 = sbr.rel (0) target = $region45
    $region44: #{tpu_custom_call.1} parent=1 // pred_region
      _
    $region45: #{tpu_custom_call.1} parent=1 // pred_fallthru
      _
    // Predicated region
    $region46: #{tpu_custom_call.1} parent=1 // pred_check
      _
    $region47: #{tpu_custom_call.1} parent=1 // pred_check_branch
      %72 = sbr.rel (0) target = $region49
    $region48: #{tpu_custom_call.1} parent=1 // pred_region
      _
    $region49: #{tpu_custom_call.1} parent=1 // pred_fallthru
      _
    // Predicated region
    $region50: #{tpu_custom_call.1} parent=1 // pred_check
      _
    $region51: #{tpu_custom_call.1} parent=1 // pred_check_branch
      %74 = sbr.rel (0) target = $region53
    $region52: #{tpu_custom_call.1} parent=1 // pred_region
      _
    $region53: #{tpu_custom_call.1} parent=1 // pred_fallthru
      _
    // Predicated region
    $region54: #{tpu_custom_call.1} parent=1 // pred_check
      _
    $region55: #{tpu_custom_call.1} parent=1 // pred_check_branch
      %76 = sbr.rel (0) target = $region57
    $region56: #{tpu_custom_call.1} parent=1 // pred_region
      %77 = dma.done [#allocation3], 256
    $region57: #{tpu_custom_call.1} parent=1 // pred_fallthru
      _
    // Predicated region
    $region58: #{tpu_custom_call.1} parent=1 // pred_check
      _
    $region59: #{tpu_custom_call.1} parent=1 // pred_check_branch
      %79 = sbr.rel (0) target = $region61
    $region60: #{tpu_custom_call.1} parent=1 // pred_region
      %80 = dma.done [#allocation6], 32
    $region61: #{tpu_custom_call.1} parent=1 // pred_fallthru
      _
    // Predicated region
    $region62: #{tpu_custom_call.1} parent=1 // pred_check
      _
    $region63: #{tpu_custom_call.1} parent=1 // pred_check_branch
      %82 = sbr.rel (0) target = $region65
    $region64: #{tpu_custom_call.1} parent=1 // pred_region
      %83 = dma.done [#allocation6], 8192
    $region65: #{tpu_custom_call.1} parent=1 // pred_fallthru
      _
    %v84 = vld [vmem:[%s0] sm:$0xff]
    %v85 = vld [vmem:[%s0 + $0x8] sm:$0xff]
    %v86 = vld [vmem:[%s0 + $0x10] sm:$0xff]
    %v87 = vld [vmem:[%s0 + $0x18] sm:$0xff]
    %v88 = vld [vmem:[%s0 + $0x20] sm:$0xff]
    %v89 = vld [vmem:[%s0 + $0x28] sm:$0xff]
    %v90 = vld [vmem:[%s0 + $0x30] sm:$0xff]
    %v91 = vld [vmem:[%s0 + $0x38] sm:$0xff]
    %v92 = vld [vmem:[%s0 + $0x40] sm:$0xff]
    %v93 = vld [vmem:[%s0 + $0x48] sm:$0xff]
    %v94 = vld [vmem:[%s0 + $0x50] sm:$0xff]
    %v95 = vld [vmem:[%s0 + $0x58] sm:$0xff]
    %v96 = vld [vmem:[%s0 + $0x60] sm:$0xff]
    %v97 = vld [vmem:[%s0 + $0x68] sm:$0xff]
    %v98 = vld [vmem:[%s0 + $0x70] sm:$0xff]
    %v99 = vld [vmem:[%s0 + $0x78] sm:$0xff]
    %v100 = vld [vmem:[#allocation5] sm:$0x3]
    %102 = vset.pattern.permute.xlu0 0
    %103 = vperm.xlu0 %102, %v84
    %v104 = vpop.permute.xlu0 %103
    %107 = vset.pattern.permute.xlu0 0
    %108 = vperm.xlu0 %107, %v85
    %v109 = vpop.permute.xlu0 %108
    %112 = vset.pattern.permute.xlu0 0
    %113 = vperm.xlu0 %112, %v86
    %v114 = vpop.permute.xlu0 %113
    %117 = vset.pattern.permute.xlu0 0
    %118 = vperm.xlu0 %117, %v87
    %v119 = vpop.permute.xlu0 %118
    %122 = vset.pattern.permute.xlu0 0
    %123 = vperm.xlu0 %122, %v88
    %v124 = vpop.permute.xlu0 %123
    %127 = vset.pattern.permute.xlu0 0
    %128 = vperm.xlu0 %127, %v89
    %v129 = vpop.permute.xlu0 %128
    %132 = vset.pattern.permute.xlu0 0
    %133 = vperm.xlu0 %132, %v90
    %v134 = vpop.permute.xlu0 %133
    %137 = vset.pattern.permute.xlu0 0
    %138 = vperm.xlu0 %137, %v91
    %v139 = vpop.permute.xlu0 %138
    %142 = vset.pattern.permute.xlu0 0
    %143 = vperm.xlu0 %142, %v92
    %v144 = vpop.permute.xlu0 %143
    %147 = vset.pattern.permute.xlu0 0
    %148 = vperm.xlu0 %147, %v93
    %v149 = vpop.permute.xlu0 %148
    %152 = vset.pattern.permute.xlu0 0
    %153 = vperm.xlu0 %152, %v94
    %v154 = vpop.permute.xlu0 %153
    %157 = vset.pattern.permute.xlu0 0
    %158 = vperm.xlu0 %157, %v95
    %v159 = vpop.permute.xlu0 %158
    %162 = vset.pattern.permute.xlu0 0
    %163 = vperm.xlu0 %162, %v96
    %v164 = vpop.permute.xlu0 %163
    %167 = vset.pattern.permute.xlu0 0
    %168 = vperm.xlu0 %167, %v97
    %v169 = vpop.permute.xlu0 %168
    %172 = vset.pattern.permute.xlu0 0
    %173 = vperm.xlu0 %172, %v98
    %v174 = vpop.permute.xlu0 %173
    %177 = vset.pattern.permute.xlu0 0
    %178 = vperm.xlu0 %177, %v99
    %v179 = vpop.permute.xlu0 %178
    %v181 = vlaneseq
    %v182 = vshrl.u32 %v181, 7
    %v183 = vsub.s32 0, %v182
    %v184 = vrot.slane %v100, %v183
    %v185 = vmul.f32 %v104, %v184
    %v186 = vmul.f32 %v109, %v184
    %v187 = vmul.f32 %v114, %v184
    %v188 = vmul.f32 %v119, %v184
    %v189 = vmul.f32 %v124, %v184
    %v190 = vmul.f32 %v129, %v184
    %v191 = vmul.f32 %v134, %v184
    %v192 = vmul.f32 %v139, %v184
    %v193 = vmul.f32 %v144, %v184
    %v194 = vmul.f32 %v149, %v184
    %v195 = vmul.f32 %v154, %v184
    %v196 = vmul.f32 %v159, %v184
    %v197 = vmul.f32 %v164, %v184
    %v198 = vmul.f32 %v169, %v184
    %v199 = vmul.f32 %v174, %v184
    %v200 = vmul.f32 %v179, %v184
    %201 = vset.pattern.permute.xlu0 1
    %202 = vperm.xlu0 %201, %v84
    %v203 = vpop.permute.xlu0 %202
    %205 = vset.pattern.permute.xlu0 1
    %206 = vperm.xlu0 %205, %v85
    %v207 = vpop.permute.xlu0 %206
    %209 = vset.pattern.permute.xlu0 1
    %210 = vperm.xlu0 %209, %v86
    %v211 = vpop.permute.xlu0 %210
    %213 = vset.pattern.permute.xlu0 1
    %214 = vperm.xlu0 %213, %v87
    %v215 = vpop.permute.xlu0 %214
    %217 = vset.pattern.permute.xlu0 1
    %218 = vperm.xlu0 %217, %v88
    %v219 = vpop.permute.xlu0 %218
    %221 = vset.pattern.permute.xlu0 1
    %222 = vperm.xlu0 %221, %v89
    %v223 = vpop.permute.xlu0 %222
    %225 = vset.pattern.permute.xlu0 1
    %226 = vperm.xlu0 %225, %v90
    %v227 = vpop.permute.xlu0 %226
    %229 = vset.pattern.permute.xlu0 1
    %230 = vperm.xlu0 %229, %v91
    %v231 = vpop.permute.xlu0 %230
    %233 = vset.pattern.permute.xlu0 1
    %234 = vperm.xlu0 %233, %v92
    %v235 = vpop.permute.xlu0 %234
    %237 = vset.pattern.permute.xlu0 1
    %238 = vperm.xlu0 %237, %v93
    %v239 = vpop.permute.xlu0 %238
    %241 = vset.pattern.permute.xlu0 1
    %242 = vperm.xlu0 %241, %v94
    %v243 = vpop.permute.xlu0 %242
    %245 = vset.pattern.permute.xlu0 1
    %246 = vperm.xlu0 %245, %v95
    %v247 = vpop.permute.xlu0 %246
    %249 = vset.pattern.permute.xlu0 1
    %250 = vperm.xlu0 %249, %v96
    %v251 = vpop.permute.xlu0 %250
    %253 = vset.pattern.permute.xlu0 1
    %254 = vperm.xlu0 %253, %v97
    %v255 = vpop.permute.xlu0 %254
    %257 = vset.pattern.permute.xlu0 1
    %258 = vperm.xlu0 %257, %v98
    %v259 = vpop.permute.xlu0 %258
    %261 = vset.pattern.permute.xlu0 1
    %262 = vperm.xlu0 %261, %v99
    %v263 = vpop.permute.xlu0 %262
    %v265 = vlaneseq
    %v266 = vshrl.u32 %v265, 7
    %v267 = vsub.s32 1, %v266
    %v268 = vrot.slane %v100, %v267
    %v269 = vmul.f32 %v203, %v268
    %v270 = vmul.f32 %v207, %v268
    %v271 = vmul.f32 %v211, %v268
    %v272 = vmul.f32 %v215, %v268
    %v273 = vmul.f32 %v219, %v268
    %v274 = vmul.f32 %v223, %v268
    %v275 = vmul.f32 %v227, %v268
    %v276 = vmul.f32 %v231, %v268
    %v277 = vmul.f32 %v235, %v268
    %v278 = vmul.f32 %v239, %v268
    %v279 = vmul.f32 %v243, %v268
    %v280 = vmul.f32 %v247, %v268
    %v281 = vmul.f32 %v251, %v268
    %v282 = vmul.f32 %v255, %v268
    %v283 = vmul.f32 %v259, %v268
    %v284 = vmul.f32 %v263, %v268
    %v285 = vadd.f32 %v185, %v269
    %v286 = vadd.f32 %v186, %v270
    %v287 = vadd.f32 %v187, %v271
    %v288 = vadd.f32 %v188, %v272
    %v289 = vadd.f32 %v189, %v273
    %v290 = vadd.f32 %v190, %v274
    %v291 = vadd.f32 %v191, %v275
    %v292 = vadd.f32 %v192, %v276
    %v293 = vadd.f32 %v193, %v277
    %v294 = vadd.f32 %v194, %v278
    %v295 = vadd.f32 %v195, %v279
    %v296 = vadd.f32 %v196, %v280
    %v297 = vadd.f32 %v197, %v281
    %v298 = vadd.f32 %v198, %v282
    %v299 = vadd.f32 %v199, %v283
    %v300 = vadd.f32 %v200, %v284
    %v301 = vld [vmem:[%s3] sm:$0x1]
    %v303 = vlaneseq
    %v304 = vshrl.u32 %v303, 7
    %v305 = vsub.s32 0, %v304
    %v306 = vrot.slane %v301, %v305
    %v308 = vadd.f32 %v285, %v306
    %v309 = vadd.f32 %v286, %v306
    %v310 = vadd.f32 %v287, %v306
    %v311 = vadd.f32 %v288, %v306
    %v312 = vadd.f32 %v289, %v306
    %v313 = vadd.f32 %v290, %v306
    %v314 = vadd.f32 %v291, %v306
    %v315 = vadd.f32 %v292, %v306
    %v316 = vadd.f32 %v293, %v306
    %v317 = vadd.f32 %v294, %v306
    %v318 = vadd.f32 %v295, %v306
    %v319 = vadd.f32 %v296, %v306
    %v320 = vadd.f32 %v297, %v306
    %v321 = vadd.f32 %v298, %v306
    %v322 = vadd.f32 %v299, %v306
    %v323 = vadd.f32 %v300, %v306
    %v324 = vtanh.pop %v308
    %v325 = vtanh.pop %v309
    %v326 = vtanh.pop %v310
    %v327 = vtanh.pop %v311
    %v328 = vtanh.pop %v312
    %v329 = vtanh.pop %v313
    %v330 = vtanh.pop %v314
    %v331 = vtanh.pop %v315
    %v332 = vtanh.pop %v316
    %v333 = vtanh.pop %v317
    %v334 = vtanh.pop %v318
    %v335 = vtanh.pop %v319
    %v336 = vtanh.pop %v320
    %v337 = vtanh.pop %v321
    %v338 = vtanh.pop %v322
    %v339 = vtanh.pop %v323
    %356 = vrot.lane.b32.xlu0 %v324, 8
    %v357 = vpop.permute.xlu0 %356
    %358 = vrot.lane.b32.xlu0 %v325, 8
    %v359 = vpop.permute.xlu0 %358
    %360 = vrot.lane.b32.xlu0 %v326, 8
    %v361 = vpop.permute.xlu0 %360
    %362 = vrot.lane.b32.xlu0 %v327, 8
    %v363 = vpop.permute.xlu0 %362
    %364 = vrot.lane.b32.xlu0 %v328, 8
    %v365 = vpop.permute.xlu0 %364
    %366 = vrot.lane.b32.xlu0 %v329, 8
    %v367 = vpop.permute.xlu0 %366
    %368 = vrot.lane.b32.xlu0 %v330, 8
    %v369 = vpop.permute.xlu0 %368
    %370 = vrot.lane.b32.xlu0 %v331, 8
    %v371 = vpop.permute.xlu0 %370
    %372 = vrot.lane.b32.xlu0 %v332, 8
    %v373 = vpop.permute.xlu0 %372
    %374 = vrot.lane.b32.xlu0 %v333, 8
    %v375 = vpop.permute.xlu0 %374
    %376 = vrot.lane.b32.xlu0 %v334, 8
    %v377 = vpop.permute.xlu0 %376
    %378 = vrot.lane.b32.xlu0 %v335, 8
    %v379 = vpop.permute.xlu0 %378
    %380 = vrot.lane.b32.xlu0 %v336, 8
    %v381 = vpop.permute.xlu0 %380
    %382 = vrot.lane.b32.xlu0 %v337, 8
    %v383 = vpop.permute.xlu0 %382
    %384 = vrot.lane.b32.xlu0 %v338, 8
    %v385 = vpop.permute.xlu0 %384
    %386 = vrot.lane.b32.xlu0 %v339, 8
    %v387 = vpop.permute.xlu0 %386
    %405 = vrot.lane.b32.xlu0 %v326, 16
    %v406 = vpop.permute.xlu0 %405
    %407 = vrot.lane.b32.xlu0 %v327, 16
    %v408 = vpop.permute.xlu0 %407
    %409 = vrot.lane.b32.xlu0 %v328, 16
    %v410 = vpop.permute.xlu0 %409
    %411 = vrot.lane.b32.xlu0 %v329, 16
    %v412 = vpop.permute.xlu0 %411
    %413 = vrot.lane.b32.xlu0 %v330, 16
    %v414 = vpop.permute.xlu0 %413
    %415 = vrot.lane.b32.xlu0 %v331, 16
    %v416 = vpop.permute.xlu0 %415
    %417 = vrot.lane.b32.xlu0 %v332, 16
    %v418 = vpop.permute.xlu0 %417
    %419 = vrot.lane.b32.xlu0 %v333, 16
    %v420 = vpop.permute.xlu0 %419
    %421 = vrot.lane.b32.xlu0 %v334, 16
    %v422 = vpop.permute.xlu0 %421
    %423 = vrot.lane.b32.xlu0 %v335, 16
    %v424 = vpop.permute.xlu0 %423
    %425 = vrot.lane.b32.xlu0 %v336, 16
    %v426 = vpop.permute.xlu0 %425
    %427 = vrot.lane.b32.xlu0 %v337, 16
    %v428 = vpop.permute.xlu0 %427
    %429 = vrot.lane.b32.xlu0 %v338, 16
    %v430 = vpop.permute.xlu0 %429
    %431 = vrot.lane.b32.xlu0 %v339, 16
    %v432 = vpop.permute.xlu0 %431
    %433 = vrot.lane.b32.xlu0 0.0, 16
    %v434 = vpop.permute.xlu0 %433
    %vm450 = vcmask 64512
    %v451 = vsel %vm450, 0.0, %v357
    %v452 = vsel %vm450, 0.0, %v359
    %v453 = vsel %vm450, %v324, %v361
    %v454 = vsel %vm450, %v325, %v363
    %v455 = vsel %vm450, %v326, %v365
    %v456 = vsel %vm450, %v327, %v367
    %v457 = vsel %vm450, %v328, %v369
    %v458 = vsel %vm450, %v329, %v371
    %v459 = vsel %vm450, %v330, %v373
    %v460 = vsel %vm450, %v331, %v375
    %v461 = vsel %vm450, %v332, %v377
    %v462 = vsel %vm450, %v333, %v379
    %v463 = vsel %vm450, %v334, %v381
    %v464 = vsel %vm450, %v335, %v383
    %v465 = vsel %vm450, %v336, %v385
    %v466 = vsel %vm450, %v337, %v387
    %vm467 = vcmask 130048
    %v468 = vsel %vm467, %v451, %v406
    %v469 = vsel %vm467, %v452, %v408
    %v470 = vsel %vm467, %v453, %v410
    %v471 = vsel %vm467, %v454, %v412
    %v472 = vsel %vm467, %v455, %v414
    %v473 = vsel %vm467, %v456, %v416
    %v474 = vsel %vm467, %v457, %v418
    %v475 = vsel %vm467, %v458, %v420
    %v476 = vsel %vm467, %v459, %v422
    %v477 = vsel %vm467, %v460, %v424
    %v478 = vsel %vm467, %v461, %v426
    %v479 = vsel %vm467, %v462, %v428
    %v480 = vsel %vm467, %v463, %v430
    %v481 = vsel %vm467, %v464, %v432
    %v482 = vsel %vm467, %v465, %v434
    %v483 = vsel %vm467, %v466, %v434
    %v484 = vld [vmem:[%s4] sm:$0xff]
    %v485 = vld [vmem:[%s4 + $0x8] sm:$0xff]
    %v486 = vld [vmem:[%s4 + $0x10] sm:$0xff]
    %v487 = vld [vmem:[%s5] sm:$0x1]
    %v489 = vlaneseq
    %v490 = vshrl.u32 %v489, 7
    %v491 = vsub.s32 0, %v490
    %v492 = vrot.slane %v487, %v491
    %vm494 = vcmask 195584
    %v496 = vsel %vm494, %v468, 0
    %v499 = vsel %vm494, %v469, 0
    %v502 = vsel %vm494, %v470, 0
    %v505 = vsel %vm494, %v471, 0
    %v508 = vsel %vm494, %v472, 0
    %v511 = vsel %vm494, %v473, 0
    %v514 = vsel %vm494, %v474, 0
    %v517 = vsel %vm494, %v475, 0
    %v520 = vsel %vm494, %v476, 0
    %v523 = vsel %vm494, %v477, 0
    %v526 = vsel %vm494, %v478, 0
    %v529 = vsel %vm494, %v479, 0
    %v532 = vsel %vm494, %v480, 0
    %v535 = vsel %vm494, %v481, 0
    %v538 = vsel %vm494, %v482, 0
    %v541 = vsel %vm494, %v483, 0
    %543 = vmatprep.subr.mxu0 0.0
    %544 = vmatpush1.msra.mxu0 0.0
    %545 = vmatprep.subr.mxu0 0.0
    %546 = vmatpush1.msra.mxu0 0.0
    %547 = vmatprep.subr.mxu0 0.0
    %548 = vmatpush1.msra.mxu0 0.0
    %549 = vmatprep.subr.mxu0 0.0
    %550 = vmatpush1.msra.mxu0 0.0
    %551 = vmatprep.subr.mxu0 0.0
    %552 = vmatpush1.msra.mxu0 0.0
    %553 = vmatprep.subr.mxu0 0.0
    %554 = vmatpush1.msra.mxu0 0.0
    %555 = vmatprep.subr.mxu0 0.0
    %556 = vmatpush1.msra.mxu0 0.0
    %557 = vmatprep.subr.mxu0 0.0
    %558 = vmatpush1.msra.mxu0 0.0
    %559 = vmatprep.subr.mxu0 0.0
    %560 = vmatpush1.msra.mxu0 0.0
    %561 = vmatprep.subr.mxu0 0.0
    %562 = vmatpush1.msra.mxu0 0.0
    %563 = vmatprep.subr.mxu0 0.0
    %564 = vmatpush1.msra.mxu0 0.0
    %565 = vmatprep.subr.mxu0 0.0
    %566 = vmatpush1.msra.mxu0 0.0
    %567 = vmatprep.subr.mxu0 0.0
    %568 = vmatpush1.msra.mxu0 0.0
    %569 = vmatprep.subr.mxu0 0.0
    %570 = vmatpush1.msra.mxu0 %v486
    %571 = vmatprep.subr.mxu0 0.0
    %572 = vmatpush1.msra.mxu0 %v485
    %573 = vmatprep.subr.mxu0 0.0
    %574 = vmatpush1.msra.mxu0 %v484
    %575 = vmatprep.subr.mxu0 0.0
    %576 = vmatpush2.msra.mxu0 0.0
    %577 = vmatprep.subr.mxu0 0.0
    %578 = vmatpush2.msra.mxu0 0.0
    %579 = vmatprep.subr.mxu0 0.0
    %580 = vmatpush2.msra.mxu0 0.0
    %581 = vmatprep.subr.mxu0 0.0
    %582 = vmatpush2.msra.mxu0 0.0
    %583 = vmatprep.subr.mxu0 0.0
    %584 = vmatpush2.msra.mxu0 0.0
    %585 = vmatprep.subr.mxu0 0.0
    %586 = vmatpush2.msra.mxu0 0.0
    %587 = vmatprep.subr.mxu0 0.0
    %588 = vmatpush2.msra.mxu0 0.0
    %589 = vmatprep.subr.mxu0 0.0
    %590 = vmatpush2.msra.mxu0 0.0
    %591 = vmatprep.subr.mxu0 0.0
    %592 = vmatpush2.msra.mxu0 0.0
    %593 = vmatprep.subr.mxu0 0.0
    %594 = vmatpush2.msra.mxu0 0.0
    %595 = vmatprep.subr.mxu0 0.0
    %596 = vmatpush2.msra.mxu0 0.0
    %597 = vmatprep.subr.mxu0 0.0
    %598 = vmatpush2.msra.mxu0 0.0
    %599 = vmatprep.subr.mxu0 0.0
    %600 = vmatpush2.msra.mxu0 0.0
    %601 = vmatprep.subr.mxu0 0.0
    %602 = vmatpush2.msra.mxu0 0.0
    %603 = vmatprep.subr.mxu0 0.0
    %604 = vmatpush2.msra.mxu0 0.0
    %605 = vmatprep.subr.mxu0 0.0
    %606 = vmatpush2.msra.mxu0 0.0
    %607 = vmatprep.mubr.f32.mxu0 0.0
    %608 = vmatmul.mubr.f32.gmra.mxu0 %v496
    %v609 = vpop.f32.mrf.mxu0
    %v610 = vadd.f32 %v492, %v609
    %v611 = vpop.f32.mrf.mxu0
    %612 = vmatprep.mubr.f32.mxu0 0.0
    %613 = vmatmul.mubr.f32.gmra.mxu0 %v499
    %v614 = vpop.f32.mrf.mxu0
    %v615 = vadd.f32 %v492, %v614
    %v616 = vpop.f32.mrf.mxu0
    %617 = vmatprep.mubr.f32.mxu0 0.0
    %618 = vmatmul.mubr.f32.gmra.mxu0 %v502
    %v619 = vpop.f32.mrf.mxu0
    %v620 = vadd.f32 %v492, %v619
    %v621 = vpop.f32.mrf.mxu0
    %622 = vmatprep.mubr.f32.mxu0 0.0
    %623 = vmatmul.mubr.f32.gmra.mxu0 %v505
    %v624 = vpop.f32.mrf.mxu0
    %v625 = vadd.f32 %v492, %v624
    %v626 = vpop.f32.mrf.mxu0
    %627 = vmatprep.mubr.f32.mxu0 0.0
    %628 = vmatmul.mubr.f32.gmra.mxu0 %v508
    %v629 = vpop.f32.mrf.mxu0
    %v630 = vadd.f32 %v492, %v629
    %v631 = vpop.f32.mrf.mxu0
    %632 = vmatprep.mubr.f32.mxu0 0.0
    %633 = vmatmul.mubr.f32.gmra.mxu0 %v511
    %v634 = vpop.f32.mrf.mxu0
    %v635 = vadd.f32 %v492, %v634
    %v636 = vpop.f32.mrf.mxu0
    %637 = vmatprep.mubr.f32.mxu0 0.0
    %638 = vmatmul.mubr.f32.gmra.mxu0 %v514
    %v639 = vpop.f32.mrf.mxu0
    %v640 = vadd.f32 %v492, %v639
    %v641 = vpop.f32.mrf.mxu0
    %642 = vmatprep.mubr.f32.mxu0 0.0
    %643 = vmatmul.mubr.f32.gmra.mxu0 %v517
    %v644 = vpop.f32.mrf.mxu0
    %v645 = vadd.f32 %v492, %v644
    %v646 = vpop.f32.mrf.mxu0
    %647 = vmatprep.mubr.f32.mxu0 0.0
    %648 = vmatmul.mubr.f32.gmra.mxu0 %v520
    %v649 = vpop.f32.mrf.mxu0
    %v650 = vadd.f32 %v492, %v649
    %v651 = vpop.f32.mrf.mxu0
    %652 = vmatprep.mubr.f32.mxu0 0.0
    %653 = vmatmul.mubr.f32.gmra.mxu0 %v523
    %v654 = vpop.f32.mrf.mxu0
    %v655 = vadd.f32 %v492, %v654
    %v656 = vpop.f32.mrf.mxu0
    %657 = vmatprep.mubr.f32.mxu0 0.0
    %658 = vmatmul.mubr.f32.gmra.mxu0 %v526
    %v659 = vpop.f32.mrf.mxu0
    %v660 = vadd.f32 %v492, %v659
    %v661 = vpop.f32.mrf.mxu0
    %662 = vmatprep.mubr.f32.mxu0 0.0
    %663 = vmatmul.mubr.f32.gmra.mxu0 %v529
    %v664 = vpop.f32.mrf.mxu0
    %v665 = vadd.f32 %v492, %v664
    %v666 = vpop.f32.mrf.mxu0
    %667 = vmatprep.mubr.f32.mxu0 0.0
    %668 = vmatmul.mubr.f32.gmra.mxu0 %v532
    %v669 = vpop.f32.mrf.mxu0
    %v670 = vadd.f32 %v492, %v669
    %v671 = vpop.f32.mrf.mxu0
    %672 = vmatprep.mubr.f32.mxu0 0.0
    %673 = vmatmul.mubr.f32.gmra.mxu0 %v535
    %v674 = vpop.f32.mrf.mxu0
    %v675 = vadd.f32 %v492, %v674
    %v676 = vpop.f32.mrf.mxu0
    %677 = vmatprep.mubr.f32.mxu0 0.0
    %678 = vmatmul.mubr.f32.gmra.mxu0 %v538
    %v679 = vpop.f32.mrf.mxu0
    %v680 = vadd.f32 %v492, %v679
    %v681 = vpop.f32.mrf.mxu0
    %682 = vmatprep.mubr.f32.mxu0 0.0
    %683 = vmatmul.mubr.f32.gmra.mxu0 %v541
    %v684 = vpop.f32.mrf.mxu0
    %v685 = vadd.f32 %v492, %v684
    %v686 = vpop.f32.mrf.mxu0
    %687 = vdwg.mxu0
    %v688 = vtanh.pop %v610
    %v689 = vtanh.pop %v615
    %v690 = vtanh.pop %v620
    %v691 = vtanh.pop %v625
    %v692 = vtanh.pop %v630
    %v693 = vtanh.pop %v635
    %v694 = vtanh.pop %v640
    %v695 = vtanh.pop %v645
    %v696 = vtanh.pop %v650
    %v697 = vtanh.pop %v655
    %v698 = vtanh.pop %v660
    %v699 = vtanh.pop %v665
    %v700 = vtanh.pop %v670
    %v701 = vtanh.pop %v675
    %v702 = vtanh.pop %v680
    %v703 = vtanh.pop %v685
    %v704 = vld [vmem:[%s6] sm:$0xff]
    %v705 = vld [vmem:[%s6 + $0x8] sm:$0xff]
    %v706 = vld [vmem:[%s6 + $0x10] sm:$0xff]
    %v707 = vld [vmem:[%s6 + $0x18] sm:$0xff]
    %v708 = vld [vmem:[%s6 + $0x20] sm:$0x3]
    %v709 = vld [vmem:[%s6 + $0x28] sm:$0x3]
    %v710 = vld [vmem:[%s6 + $0x30] sm:$0x3]
    %v711 = vld [vmem:[%s6 + $0x38] sm:$0x3]
    %v712 = vld [vmem:[%s8] sm:$0xf]
    %v714 = vlaneseq
    %v715 = vshrl.u32 %v714, 7
    %v716 = vsub.s32 0, %v715
    %v717 = vrot.slane %v712, %v716
    %v718 = vlaneseq
    %v719 = vshrl.u32 %v718, 7
    %v720 = vsub.s32 1, %v719
    %v721 = vrot.slane %v712, %v720
    %v722 = vlaneseq
    %v723 = vshrl.u32 %v722, 7
    %v724 = vsub.s32 2, %v723
    %v725 = vrot.slane %v712, %v724
    %v726 = vlaneseq
    %v727 = vshrl.u32 %v726, 7
    %v728 = vsub.s32 3, %v727
    %v729 = vrot.slane %v712, %v728
    %vm734 = vcmask 80896
    %v736 = vsel %vm734, %v688, 0
    %v739 = vsel %vm734, %v689, 0
    %v742 = vsel %vm734, %v690, 0
    %v745 = vsel %vm734, %v691, 0
    %v748 = vsel %vm734, %v692, 0
    %v751 = vsel %vm734, %v693, 0
    %v754 = vsel %vm734, %v694, 0
    %v757 = vsel %vm734, %v695, 0
    %v760 = vsel %vm734, %v696, 0
    %v763 = vsel %vm734, %v697, 0
    %v766 = vsel %vm734, %v698, 0
    %v769 = vsel %vm734, %v699, 0
    %v772 = vsel %vm734, %v700, 0
    %v775 = vsel %vm734, %v701, 0
    %v778 = vsel %vm734, %v702, 0
    %v781 = vsel %vm734, %v703, 0
    %vm783 = vcmask 1041408
    %v785 = vsel %vm783, %v708, 0
    %v788 = vsel %vm783, %v709, 0
    %v791 = vsel %vm783, %v710, 0
    %v794 = vsel %vm783, %v711, 0
    %796 = vmatprep.subr.mxu0 0.0
    %797 = vmatpush1.msra.mxu0 0.0
    %798 = vmatprep.subr.mxu0 0.0
    %799 = vmatpush1.msra.mxu0 0.0
    %800 = vmatprep.subr.mxu0 0.0
    %801 = vmatpush1.msra.mxu0 0.0
    %802 = vmatprep.subr.mxu0 0.0
    %803 = vmatpush1.msra.mxu0 0.0
    %804 = vmatprep.subr.mxu0 0.0
    %805 = vmatpush1.msra.mxu0 0.0
    %806 = vmatprep.subr.mxu0 0.0
    %807 = vmatpush1.msra.mxu0 0.0
    %808 = vmatprep.subr.mxu0 0.0
    %809 = vmatpush1.msra.mxu0 0.0
    %810 = vmatprep.subr.mxu0 0.0
    %811 = vmatpush1.msra.mxu0 0.0
    %812 = vmatprep.subr.mxu0 0.0
    %813 = vmatpush1.msra.mxu0 0.0
    %814 = vmatprep.subr.mxu0 0.0
    %815 = vmatpush1.msra.mxu0 0.0
    %816 = vmatprep.subr.mxu0 0.0
    %817 = vmatpush1.msra.mxu0 0.0
    %818 = vmatprep.subr.mxu0 0.0
    %819 = vmatpush1.msra.mxu0 0.0
    %820 = vmatprep.subr.mxu0 0.0
    %821 = vmatpush1.msra.mxu0 0.0
    %822 = vmatprep.subr.mxu0 0.0
    %823 = vmatpush1.msra.mxu0 0.0
    %824 = vmatprep.subr.mxu0 %v788
    %825 = vmatpush1.msra.mxu0 %v785
    %826 = vmatprep.subr.mxu0 %v705
    %827 = vmatpush1.msra.mxu0 %v704
    %828 = vmatprep.subr.mxu0 0.0
    %829 = vmatpush2.msra.mxu0 0.0
    %830 = vmatprep.subr.mxu0 0.0
    %831 = vmatpush2.msra.mxu0 0.0
    %832 = vmatprep.subr.mxu0 0.0
    %833 = vmatpush2.msra.mxu0 0.0
    %834 = vmatprep.subr.mxu0 0.0
    %835 = vmatpush2.msra.mxu0 0.0
    %836 = vmatprep.subr.mxu0 0.0
    %837 = vmatpush2.msra.mxu0 0.0
    %838 = vmatprep.subr.mxu0 0.0
    %839 = vmatpush2.msra.mxu0 0.0
    %840 = vmatprep.subr.mxu0 0.0
    %841 = vmatpush2.msra.mxu0 0.0
    %842 = vmatprep.subr.mxu0 0.0
    %843 = vmatpush2.msra.mxu0 0.0
    %844 = vmatprep.subr.mxu0 0.0
    %845 = vmatpush2.msra.mxu0 0.0
    %846 = vmatprep.subr.mxu0 0.0
    %847 = vmatpush2.msra.mxu0 0.0
    %848 = vmatprep.subr.mxu0 0.0
    %849 = vmatpush2.msra.mxu0 0.0
    %850 = vmatprep.subr.mxu0 0.0
    %851 = vmatpush2.msra.mxu0 0.0
    %852 = vmatprep.subr.mxu0 0.0
    %853 = vmatpush2.msra.mxu0 0.0
    %854 = vmatprep.subr.mxu0 0.0
    %855 = vmatpush2.msra.mxu0 0.0
    %856 = vmatprep.subr.mxu0 0.0
    %857 = vmatpush2.msra.mxu0 0.0
    %858 = vmatprep.subr.mxu0 0.0
    %859 = vmatpush2.msra.mxu0 0.0
    %860 = vmatprep.mubr.f32.mxu0 0.0
    %861 = vmatmul.mubr.f32.gmra.mxu0 %v736
    %v862 = vpop.f32.mrf.mxu0
    %v863 = vadd.f32 %v717, %v862
    %v864 = vpop.f32.mrf.mxu0
    %v865 = vadd.f32 %v721, %v864
    %866 = vmatprep.mubr.f32.mxu0 0.0
    %867 = vmatmul.mubr.f32.gmra.mxu0 %v739
    %v868 = vpop.f32.mrf.mxu0
    %v869 = vadd.f32 %v717, %v868
    %v870 = vpop.f32.mrf.mxu0
    %v871 = vadd.f32 %v721, %v870
    %872 = vmatprep.mubr.f32.mxu0 0.0
    %873 = vmatmul.mubr.f32.gmra.mxu0 %v742
    %v874 = vpop.f32.mrf.mxu0
    %v875 = vadd.f32 %v717, %v874
    %v876 = vpop.f32.mrf.mxu0
    %v877 = vadd.f32 %v721, %v876
    %878 = vmatprep.mubr.f32.mxu0 0.0
    %879 = vmatmul.mubr.f32.gmra.mxu0 %v745
    %v880 = vpop.f32.mrf.mxu0
    %v881 = vadd.f32 %v717, %v880
    %v882 = vpop.f32.mrf.mxu0
    %v883 = vadd.f32 %v721, %v882
    %884 = vmatprep.mubr.f32.mxu0 0.0
    %885 = vmatmul.mubr.f32.gmra.mxu0 %v748
    %v886 = vpop.f32.mrf.mxu0
    %v887 = vadd.f32 %v717, %v886
    %v888 = vpop.f32.mrf.mxu0
    %v889 = vadd.f32 %v721, %v888
    %890 = vmatprep.mubr.f32.mxu0 0.0
    %891 = vmatmul.mubr.f32.gmra.mxu0 %v751
    %v892 = vpop.f32.mrf.mxu0
    %v893 = vadd.f32 %v717, %v892
    %v894 = vpop.f32.mrf.mxu0
    %v895 = vadd.f32 %v721, %v894
    %896 = vmatprep.mubr.f32.mxu0 0.0
    %897 = vmatmul.mubr.f32.gmra.mxu0 %v754
    %v898 = vpop.f32.mrf.mxu0
    %v899 = vadd.f32 %v717, %v898
    %v900 = vpop.f32.mrf.mxu0
    %v901 = vadd.f32 %v721, %v900
    %902 = vmatprep.mubr.f32.mxu0 0.0
    %903 = vmatmul.mubr.f32.gmra.mxu0 %v757
    %v904 = vpop.f32.mrf.mxu0
    %v905 = vadd.f32 %v717, %v904
    %v906 = vpop.f32.mrf.mxu0
    %v907 = vadd.f32 %v721, %v906
    %908 = vmatprep.mubr.f32.mxu0 0.0
    %909 = vmatmul.mubr.f32.gmra.mxu0 %v760
    %v910 = vpop.f32.mrf.mxu0
    %v911 = vadd.f32 %v717, %v910
    %v912 = vpop.f32.mrf.mxu0
    %v913 = vadd.f32 %v721, %v912
    %914 = vmatprep.mubr.f32.mxu0 0.0
    %915 = vmatmul.mubr.f32.gmra.mxu0 %v763
    %v916 = vpop.f32.mrf.mxu0
    %v917 = vadd.f32 %v717, %v916
    %v918 = vpop.f32.mrf.mxu0
    %v919 = vadd.f32 %v721, %v918
    %920 = vmatprep.mubr.f32.mxu0 0.0
    %921 = vmatmul.mubr.f32.gmra.mxu0 %v766
    %v922 = vpop.f32.mrf.mxu0
    %v923 = vadd.f32 %v717, %v922
    %v924 = vpop.f32.mrf.mxu0
    %v925 = vadd.f32 %v721, %v924
    %926 = vmatprep.mubr.f32.mxu0 0.0
    %927 = vmatmul.mubr.f32.gmra.mxu0 %v769
    %v928 = vpop.f32.mrf.mxu0
    %v929 = vadd.f32 %v717, %v928
    %v930 = vpop.f32.mrf.mxu0
    %v931 = vadd.f32 %v721, %v930
    %932 = vmatprep.mubr.f32.mxu0 0.0
    %933 = vmatmul.mubr.f32.gmra.mxu0 %v772
    %v934 = vpop.f32.mrf.mxu0
    %v935 = vadd.f32 %v717, %v934
    %v936 = vpop.f32.mrf.mxu0
    %v937 = vadd.f32 %v721, %v936
    %938 = vmatprep.mubr.f32.mxu0 0.0
    %939 = vmatmul.mubr.f32.gmra.mxu0 %v775
    %v940 = vpop.f32.mrf.mxu0
    %v941 = vadd.f32 %v717, %v940
    %v942 = vpop.f32.mrf.mxu0
    %v943 = vadd.f32 %v721, %v942
    %944 = vmatprep.mubr.f32.mxu0 0.0
    %945 = vmatmul.mubr.f32.gmra.mxu0 %v778
    %v946 = vpop.f32.mrf.mxu0
    %v947 = vadd.f32 %v717, %v946
    %v948 = vpop.f32.mrf.mxu0
    %v949 = vadd.f32 %v721, %v948
    %950 = vmatprep.mubr.f32.mxu0 0.0
    %951 = vmatmul.mubr.f32.gmra.mxu0 %v781
    %v952 = vpop.f32.mrf.mxu0
    %v953 = vadd.f32 %v717, %v952
    %v954 = vpop.f32.mrf.mxu0
    %v955 = vadd.f32 %v721, %v954
    %956 = vdwg.mxu0
    %957 = vmatprep.subr.mxu0 0.0
    %958 = vmatpush1.msra.mxu0 0.0
    %959 = vmatprep.subr.mxu0 0.0
    %960 = vmatpush1.msra.mxu0 0.0
    %961 = vmatprep.subr.mxu0 0.0
    %962 = vmatpush1.msra.mxu0 0.0
    %963 = vmatprep.subr.mxu0 0.0
    %964 = vmatpush1.msra.mxu0 0.0
    %965 = vmatprep.subr.mxu0 0.0
    %966 = vmatpush1.msra.mxu0 0.0
    %967 = vmatprep.subr.mxu0 0.0
    %968 = vmatpush1.msra.mxu0 0.0
    %969 = vmatprep.subr.mxu0 0.0
    %970 = vmatpush1.msra.mxu0 0.0
    %971 = vmatprep.subr.mxu0 0.0
    %972 = vmatpush1.msra.mxu0 0.0
    %973 = vmatprep.subr.mxu0 0.0
    %974 = vmatpush1.msra.mxu0 0.0
    %975 = vmatprep.subr.mxu0 0.0
    %976 = vmatpush1.msra.mxu0 0.0
    %977 = vmatprep.subr.mxu0 0.0
    %978 = vmatpush1.msra.mxu0 0.0
    %979 = vmatprep.subr.mxu0 0.0
    %980 = vmatpush1.msra.mxu0 0.0
    %981 = vmatprep.subr.mxu0 0.0
    %982 = vmatpush1.msra.mxu0 0.0
    %983 = vmatprep.subr.mxu0 0.0
    %984 = vmatpush1.msra.mxu0 0.0
    %985 = vmatprep.subr.mxu0 %v794
    %986 = vmatpush1.msra.mxu0 %v791
    %987 = vmatprep.subr.mxu0 %v707
    %988 = vmatpush1.msra.mxu0 %v706
    %989 = vmatprep.subr.mxu0 0.0
    %990 = vmatpush2.msra.mxu0 0.0
    %991 = vmatprep.subr.mxu0 0.0
    %992 = vmatpush2.msra.mxu0 0.0
    %993 = vmatprep.subr.mxu0 0.0
    %994 = vmatpush2.msra.mxu0 0.0
    %995 = vmatprep.subr.mxu0 0.0
    %996 = vmatpush2.msra.mxu0 0.0
    %997 = vmatprep.subr.mxu0 0.0
    %998 = vmatpush2.msra.mxu0 0.0
    %999 = vmatprep.subr.mxu0 0.0
    %1000 = vmatpush2.msra.mxu0 0.0
    %1001 = vmatprep.subr.mxu0 0.0
    %1002 = vmatpush2.msra.mxu0 0.0
    %1003 = vmatprep.subr.mxu0 0.0
    %1004 = vmatpush2.msra.mxu0 0.0
    %1005 = vmatprep.subr.mxu0 0.0
    %1006 = vmatpush2.msra.mxu0 0.0
    %1007 = vmatprep.subr.mxu0 0.0
    %1008 = vmatpush2.msra.mxu0 0.0
    %1009 = vmatprep.subr.mxu0 0.0
    %1010 = vmatpush2.msra.mxu0 0.0
    %1011 = vmatprep.subr.mxu0 0.0
    %1012 = vmatpush2.msra.mxu0 0.0
    %1013 = vmatprep.subr.mxu0 0.0
    %1014 = vmatpush2.msra.mxu0 0.0
    %1015 = vmatprep.subr.mxu0 0.0
    %1016 = vmatpush2.msra.mxu0 0.0
    %1017 = vmatprep.subr.mxu0 0.0
    %1018 = vmatpush2.msra.mxu0 0.0
    %1019 = vmatprep.subr.mxu0 0.0
    %1020 = vmatpush2.msra.mxu0 0.0
    %1021 = vmatprep.mubr.f32.mxu0 0.0
    %1022 = vmatmul.mubr.f32.gmra.mxu0 %v736
    %v1023 = vpop.f32.mrf.mxu0
    %v1024 = vadd.f32 %v725, %v1023
    %v1025 = vpop.f32.mrf.mxu0
    %v1026 = vadd.f32 %v729, %v1025
    %1027 = vmatprep.mubr.f32.mxu0 0.0
    %1028 = vmatmul.mubr.f32.gmra.mxu0 %v739
    %v1029 = vpop.f32.mrf.mxu0
    %v1030 = vadd.f32 %v725, %v1029
    %v1031 = vpop.f32.mrf.mxu0
    %v1032 = vadd.f32 %v729, %v1031
    %1033 = vmatprep.mubr.f32.mxu0 0.0
    %1034 = vmatmul.mubr.f32.gmra.mxu0 %v742
    %v1035 = vpop.f32.mrf.mxu0
    %v1036 = vadd.f32 %v725, %v1035
    %v1037 = vpop.f32.mrf.mxu0
    %v1038 = vadd.f32 %v729, %v1037
    %1039 = vmatprep.mubr.f32.mxu0 0.0
    %1040 = vmatmul.mubr.f32.gmra.mxu0 %v745
    %v1041 = vpop.f32.mrf.mxu0
    %v1042 = vadd.f32 %v725, %v1041
    %v1043 = vpop.f32.mrf.mxu0
    %v1044 = vadd.f32 %v729, %v1043
    %1045 = vmatprep.mubr.f32.mxu0 0.0
    %1046 = vmatmul.mubr.f32.gmra.mxu0 %v748
    %v1047 = vpop.f32.mrf.mxu0
    %v1048 = vadd.f32 %v725, %v1047
    %v1049 = vpop.f32.mrf.mxu0
    %v1050 = vadd.f32 %v729, %v1049
    %1051 = vmatprep.mubr.f32.mxu0 0.0
    %1052 = vmatmul.mubr.f32.gmra.mxu0 %v751
    %v1053 = vpop.f32.mrf.mxu0
    %v1054 = vadd.f32 %v725, %v1053
    %v1055 = vpop.f32.mrf.mxu0
    %v1056 = vadd.f32 %v729, %v1055
    %1057 = vmatprep.mubr.f32.mxu0 0.0
    %1058 = vmatmul.mubr.f32.gmra.mxu0 %v754
    %v1059 = vpop.f32.mrf.mxu0
    %v1060 = vadd.f32 %v725, %v1059
    %v1061 = vpop.f32.mrf.mxu0
    %v1062 = vadd.f32 %v729, %v1061
    %1063 = vmatprep.mubr.f32.mxu0 0.0
    %1064 = vmatmul.mubr.f32.gmra.mxu0 %v757
    %v1065 = vpop.f32.mrf.mxu0
    %v1066 = vadd.f32 %v725, %v1065
    %v1067 = vpop.f32.mrf.mxu0
    %v1068 = vadd.f32 %v729, %v1067
    %1069 = vmatprep.mubr.f32.mxu0 0.0
    %1070 = vmatmul.mubr.f32.gmra.mxu0 %v760
    %v1071 = vpop.f32.mrf.mxu0
    %v1072 = vadd.f32 %v725, %v1071
    %v1073 = vpop.f32.mrf.mxu0
    %v1074 = vadd.f32 %v729, %v1073
    %1075 = vmatprep.mubr.f32.mxu0 0.0
    %1076 = vmatmul.mubr.f32.gmra.mxu0 %v763
    %v1077 = vpop.f32.mrf.mxu0
    %v1078 = vadd.f32 %v725, %v1077
    %v1079 = vpop.f32.mrf.mxu0
    %v1080 = vadd.f32 %v729, %v1079
    %1081 = vmatprep.mubr.f32.mxu0 0.0
    %1082 = vmatmul.mubr.f32.gmra.mxu0 %v766
    %v1083 = vpop.f32.mrf.mxu0
    %v1084 = vadd.f32 %v725, %v1083
    %v1085 = vpop.f32.mrf.mxu0
    %v1086 = vadd.f32 %v729, %v1085
    %1087 = vmatprep.mubr.f32.mxu0 0.0
    %1088 = vmatmul.mubr.f32.gmra.mxu0 %v769
    %v1089 = vpop.f32.mrf.mxu0
    %v1090 = vadd.f32 %v725, %v1089
    %v1091 = vpop.f32.mrf.mxu0
    %v1092 = vadd.f32 %v729, %v1091
    %1093 = vmatprep.mubr.f32.mxu0 0.0
    %1094 = vmatmul.mubr.f32.gmra.mxu0 %v772
    %v1095 = vpop.f32.mrf.mxu0
    %v1096 = vadd.f32 %v725, %v1095
    %v1097 = vpop.f32.mrf.mxu0
    %v1098 = vadd.f32 %v729, %v1097
    %1099 = vmatprep.mubr.f32.mxu0 0.0
    %1100 = vmatmul.mubr.f32.gmra.mxu0 %v775
    %v1101 = vpop.f32.mrf.mxu0
    %v1102 = vadd.f32 %v725, %v1101
    %v1103 = vpop.f32.mrf.mxu0
    %v1104 = vadd.f32 %v729, %v1103
    %1105 = vmatprep.mubr.f32.mxu0 0.0
    %1106 = vmatmul.mubr.f32.gmra.mxu0 %v778
    %v1107 = vpop.f32.mrf.mxu0
    %v1108 = vadd.f32 %v725, %v1107
    %v1109 = vpop.f32.mrf.mxu0
    %1110 = vmatprep.mubr.f32.mxu0 0.0
    %1111 = vmatmul.mubr.f32.gmra.mxu0 %v781
    %v1112 = vpop.f32.mrf.mxu0
    %v1113 = vadd.f32 %v725, %v1112
    %v1114 = vpop.f32.mrf.mxu0
    %1115 = vdwg.mxu0
    %v1116 = vld [vmem:[#allocation7] sm:$0xff]
    %v1117 = vld [vmem:[#allocation7 + $0x8] sm:$0xff]
    %v1118 = vld [vmem:[#allocation7 + $0x10] sm:$0xff]
    %v1119 = vld [vmem:[#allocation7 + $0x18] sm:$0xff]
    %v1120 = vld [vmem:[#allocation7 + $0x20] sm:$0xff]
    %v1121 = vld [vmem:[#allocation7 + $0x28] sm:$0xff]
    %v1122 = vld [vmem:[#allocation7 + $0x30] sm:$0xff]
    %v1123 = vld [vmem:[#allocation7 + $0x38] sm:$0xff]
    %v1124 = vld [vmem:[#allocation7 + $0x40] sm:$0xff]
    %v1125 = vld [vmem:[#allocation7 + $0x48] sm:$0xff]
    %v1126 = vld [vmem:[#allocation7 + $0x50] sm:$0xff]
    %v1127 = vld [vmem:[#allocation7 + $0x58] sm:$0xff]
    %v1128 = vld [vmem:[#allocation7 + $0x60] sm:$0xff]
    %v1129 = vld [vmem:[#allocation7 + $0x68] sm:$0xff]
    %v1130 = vld [vmem:[#allocation7 + $0x70] sm:$0xff]
    %v1131 = vld [vmem:[#allocation7 + $0x78] sm:$0xff]
    %v1132 = vld [vmem:[#allocation7 + $0x80] sm:$0xff]
    %v1133 = vld [vmem:[#allocation7 + $0x88] sm:$0xff]
    %v1134 = vld [vmem:[#allocation7 + $0x90] sm:$0xff]
    %v1135 = vld [vmem:[#allocation7 + $0x98] sm:$0xff]
    %v1136 = vld [vmem:[#allocation7 + $0xa0] sm:$0xff]
    %v1137 = vld [vmem:[#allocation7 + $0xa8] sm:$0xff]
    %v1138 = vld [vmem:[#allocation7 + $0xb0] sm:$0xff]
    %v1139 = vld [vmem:[#allocation7 + $0xb8] sm:$0xff]
    %v1140 = vld [vmem:[#allocation7 + $0xc0] sm:$0xff]
    %v1141 = vld [vmem:[#allocation7 + $0xc8] sm:$0xff]
    %v1142 = vld [vmem:[#allocation7 + $0xd0] sm:$0xff]
    %v1143 = vld [vmem:[#allocation7 + $0xd8] sm:$0xff]
    %v1144 = vld [vmem:[#allocation7 + $0xe0] sm:$0xff]
    %v1145 = vld [vmem:[#allocation7 + $0xe8] sm:$0xff]
    %v1146 = vld [vmem:[#allocation7 + $0xf0] sm:$0xff]
    %v1147 = vld [vmem:[#allocation7 + $0xf8] sm:$0xff]
    %v1148 = vld [vmem:[#allocation7 + $0x100] sm:$0xff]
    %v1149 = vld [vmem:[#allocation7 + $0x108] sm:$0xff]
    %v1150 = vld [vmem:[#allocation7 + $0x110] sm:$0xff]
    %v1151 = vld [vmem:[#allocation7 + $0x118] sm:$0xff]
    %v1152 = vld [vmem:[#allocation7 + $0x120] sm:$0xff]
    %v1153 = vld [vmem:[#allocation7 + $0x128] sm:$0xff]
    %v1154 = vld [vmem:[#allocation7 + $0x130] sm:$0xff]
    %v1155 = vld [vmem:[#allocation7 + $0x138] sm:$0xff]
    %v1156 = vld [vmem:[#allocation7 + $0x140] sm:$0xff]
    %v1157 = vld [vmem:[#allocation7 + $0x148] sm:$0xff]
    %v1158 = vld [vmem:[#allocation7 + $0x150] sm:$0xff]
    %v1159 = vld [vmem:[#allocation7 + $0x158] sm:$0xff]
    %v1160 = vld [vmem:[#allocation7 + $0x160] sm:$0xff]
    %v1161 = vld [vmem:[#allocation7 + $0x168] sm:$0xff]
    %v1162 = vld [vmem:[#allocation7 + $0x170] sm:$0xff]
    %v1163 = vld [vmem:[#allocation7 + $0x178] sm:$0xff]
    %v1164 = vld [vmem:[#allocation7 + $0x180] sm:$0xff]
    %v1165 = vld [vmem:[#allocation7 + $0x188] sm:$0xff]
    %v1166 = vld [vmem:[#allocation7 + $0x190] sm:$0xff]
    %v1167 = vld [vmem:[#allocation7 + $0x198] sm:$0xff]
    %v1168 = vld [vmem:[#allocation7 + $0x1a0] sm:$0xff]
    %v1169 = vld [vmem:[#allocation7 + $0x1a8] sm:$0xff]
    %v1170 = vld [vmem:[#allocation7 + $0x1b0] sm:$0xff]
    %v1171 = vld [vmem:[#allocation7 + $0x1b8] sm:$0xff]
    %v1172 = vld [vmem:[#allocation7 + $0x1c0] sm:$0xff]
    %v1173 = vld [vmem:[#allocation7 + $0x1c8] sm:$0xff]
    %v1174 = vld [vmem:[#allocation7 + $0x1d0] sm:$0xff]
    %v1175 = vld [vmem:[#allocation7 + $0x1d8] sm:$0xff]
    %v1176 = vld [vmem:[#allocation7 + $0x1e0] sm:$0xff]
    %v1177 = vld [vmem:[#allocation7 + $0x1e8] sm:$0xff]
    %v1178 = vld [vmem:[#allocation7 + $0x1f0] sm:$0xff]
    %v1179 = vld [vmem:[#allocation7 + $0x1f8] sm:$0xff]
    %1180 = vmatprep.subr.mxu0 %v1177
    %1181 = vmatpush1.msra.mxu0 %v1176
    %1182 = vmatprep.subr.mxu0 %v1173
    %1183 = vmatpush1.msra.mxu0 %v1172
    %1184 = vmatprep.subr.mxu0 %v1169
    %1185 = vmatpush1.msra.mxu0 %v1168
    %1186 = vmatprep.subr.mxu0 %v1165
    %1187 = vmatpush1.msra.mxu0 %v1164
    %1188 = vmatprep.subr.mxu0 %v1161
    %1189 = vmatpush1.msra.mxu0 %v1160
    %1190 = vmatprep.subr.mxu0 %v1157
    %1191 = vmatpush1.msra.mxu0 %v1156
    %1192 = vmatprep.subr.mxu0 %v1153
    %1193 = vmatpush1.msra.mxu0 %v1152
    %1194 = vmatprep.subr.mxu0 %v1149
    %1195 = vmatpush1.msra.mxu0 %v1148
    %1196 = vmatprep.subr.mxu0 %v1145
    %1197 = vmatpush1.msra.mxu0 %v1144
    %1198 = vmatprep.subr.mxu0 %v1141
    %1199 = vmatpush1.msra.mxu0 %v1140
    %1200 = vmatprep.subr.mxu0 %v1137
    %1201 = vmatpush1.msra.mxu0 %v1136
    %1202 = vmatprep.subr.mxu0 %v1133
    %1203 = vmatpush1.msra.mxu0 %v1132
    %1204 = vmatprep.subr.mxu0 %v1129
    %1205 = vmatpush1.msra.mxu0 %v1128
    %1206 = vmatprep.subr.mxu0 %v1125
    %1207 = vmatpush1.msra.mxu0 %v1124
    %1208 = vmatprep.subr.mxu0 %v1121
    %1209 = vmatpush1.msra.mxu0 %v1120
    %1210 = vmatprep.subr.mxu0 %v1117
    %1211 = vmatpush1.msra.mxu0 %v1116
    %1212 = vmatprep.subr.mxu0 0.0
    %1213 = vmatpush2.msra.mxu0 0.0
    %1214 = vmatprep.subr.mxu0 0.0
    %1215 = vmatpush2.msra.mxu0 0.0
    %1216 = vmatprep.subr.mxu0 0.0
    %1217 = vmatpush2.msra.mxu0 0.0
    %1218 = vmatprep.subr.mxu0 0.0
    %1219 = vmatpush2.msra.mxu0 0.0
    %1220 = vmatprep.subr.mxu0 0.0
    %1221 = vmatpush2.msra.mxu0 0.0
    %1222 = vmatprep.subr.mxu0 0.0
    %1223 = vmatpush2.msra.mxu0 0.0
    %1224 = vmatprep.subr.mxu0 0.0
    %1225 = vmatpush2.msra.mxu0 0.0
    %1226 = vmatprep.subr.mxu0 0.0
    %1227 = vmatpush2.msra.mxu0 0.0
    %1228 = vmatprep.subr.mxu0 0.0
    %1229 = vmatpush2.msra.mxu0 0.0
    %1230 = vmatprep.subr.mxu0 0.0
    %1231 = vmatpush2.msra.mxu0 0.0
    %1232 = vmatprep.subr.mxu0 0.0
    %1233 = vmatpush2.msra.mxu0 0.0
    %1234 = vmatprep.subr.mxu0 0.0
    %1235 = vmatpush2.msra.mxu0 0.0
    %1236 = vmatprep.subr.mxu0 0.0
    %1237 = vmatpush2.msra.mxu0 0.0
    %1238 = vmatprep.subr.mxu0 0.0
    %1239 = vmatpush2.msra.mxu0 0.0
    %1240 = vmatprep.subr.mxu0 0.0
    %1241 = vmatpush2.msra.mxu0 0.0
    %1242 = vmatprep.subr.mxu0 0.0
    %1243 = vmatpush2.msra.mxu0 0.0
    %1244 = vmatprep.mubr.f32.mxu0 0.0
    %1245 = vmatmul.mubr.f32.gmra.mxu0 0.0
    %v1246 = vpop.f32.mrf.mxu0
    %v1247 = vadd.f32 0.0, %v1246
    %v1248 = vpop.f32.mrf.mxu0
    %v1249 = vadd.f32 0.0, %v1248
    %1250 = vmatprep.mubr.f32.mxu0 0.0
    %1251 = vmatmul.mubr.f32.gmra.mxu0 0.0
    %v1252 = vpop.f32.mrf.mxu0
    %v1253 = vadd.f32 0.0, %v1252
    %v1254 = vpop.f32.mrf.mxu0
    %v1255 = vadd.f32 0.0, %v1254
    %1256 = vdwg.mxu0
    %1257 = vmatprep.subr.mxu0 %v1179
    %1258 = vmatpush1.msra.mxu0 %v1178
    %1259 = vmatprep.subr.mxu0 %v1175
    %1260 = vmatpush1.msra.mxu0 %v1174
    %1261 = vmatprep.subr.mxu0 %v1171
    %1262 = vmatpush1.msra.mxu0 %v1170
    %1263 = vmatprep.subr.mxu0 %v1167
    %1264 = vmatpush1.msra.mxu0 %v1166
    %1265 = vmatprep.subr.mxu0 %v1163
    %1266 = vmatpush1.msra.mxu0 %v1162
    %1267 = vmatprep.subr.mxu0 %v1159
    %1268 = vmatpush1.msra.mxu0 %v1158
    %1269 = vmatprep.subr.mxu0 %v1155
    %1270 = vmatpush1.msra.mxu0 %v1154
    %1271 = vmatprep.subr.mxu0 %v1151
    %1272 = vmatpush1.msra.mxu0 %v1150
    %1273 = vmatprep.subr.mxu0 %v1147
    %1274 = vmatpush1.msra.mxu0 %v1146
    %1275 = vmatprep.subr.mxu0 %v1143
    %1276 = vmatpush1.msra.mxu0 %v1142
    %1277 = vmatprep.subr.mxu0 %v1139
    %1278 = vmatpush1.msra.mxu0 %v1138
    %1279 = vmatprep.subr.mxu0 %v1135
    %1280 = vmatpush1.msra.mxu0 %v1134
    %1281 = vmatprep.subr.mxu0 %v1131
    %1282 = vmatpush1.msra.mxu0 %v1130
    %1283 = vmatprep.subr.mxu0 %v1127
    %1284 = vmatpush1.msra.mxu0 %v1126
    %1285 = vmatprep.subr.mxu0 %v1123
    %1286 = vmatpush1.msra.mxu0 %v1122
    %1287 = vmatprep.subr.mxu0 %v1119
    %1288 = vmatpush1.msra.mxu0 %v1118
    %1289 = vmatprep.subr.mxu0 0.0
    %1290 = vmatpush2.msra.mxu0 0.0
    %1291 = vmatprep.subr.mxu0 0.0
    %1292 = vmatpush2.msra.mxu0 0.0
    %1293 = vmatprep.subr.mxu0 0.0
    %1294 = vmatpush2.msra.mxu0 0.0
    %1295 = vmatprep.subr.mxu0 0.0
    %1296 = vmatpush2.msra.mxu0 0.0
    %1297 = vmatprep.subr.mxu0 0.0
    %1298 = vmatpush2.msra.mxu0 0.0
    %1299 = vmatprep.subr.mxu0 0.0
    %1300 = vmatpush2.msra.mxu0 0.0
    %1301 = vmatprep.subr.mxu0 0.0
    %1302 = vmatpush2.msra.mxu0 0.0
    %1303 = vmatprep.subr.mxu0 0.0
    %1304 = vmatpush2.msra.mxu0 0.0
    %1305 = vmatprep.subr.mxu0 0.0
    %1306 = vmatpush2.msra.mxu0 0.0
    %1307 = vmatprep.subr.mxu0 0.0
    %1308 = vmatpush2.msra.mxu0 0.0
    %1309 = vmatprep.subr.mxu0 0.0
    %1310 = vmatpush2.msra.mxu0 0.0
    %1311 = vmatprep.subr.mxu0 0.0
    %1312 = vmatpush2.msra.mxu0 0.0
    %1313 = vmatprep.subr.mxu0 0.0
    %1314 = vmatpush2.msra.mxu0 0.0
    %1315 = vmatprep.subr.mxu0 0.0
    %1316 = vmatpush2.msra.mxu0 0.0
    %1317 = vmatprep.subr.mxu0 0.0
    %1318 = vmatpush2.msra.mxu0 0.0
    %1319 = vmatprep.subr.mxu0 0.0
    %1320 = vmatpush2.msra.mxu0 0.0
    %1321 = vmatprep.mubr.f32.mxu0 0.0
    %1322 = vmatmul.mubr.f32.gmra.mxu0 0.0
    %v1323 = vpop.f32.mrf.mxu0
    %v1324 = vadd.f32 0.0, %v1323
    %v1325 = vpop.f32.mrf.mxu0
    %v1326 = vadd.f32 0.0, %v1325
    %1327 = vmatprep.mubr.f32.mxu0 0.0
    %1328 = vmatmul.mubr.f32.gmra.mxu0 0.0
    %v1329 = vpop.f32.mrf.mxu0
    %v1330 = vadd.f32 0.0, %v1329
    %v1331 = vpop.f32.mrf.mxu0
    %v1332 = vadd.f32 0.0, %v1331
    %1333 = vdwg.mxu0
    %v1334 = vadd.f32 %v863, %v1247
    %v1335 = vadd.f32 %v865, %v1249
    %v1336 = vadd.f32 %v1024, %v1324
    %v1337 = vadd.f32 %v1026, %v1326
    %v1338 = vadd.f32 %v869, %v1253
    %v1339 = vadd.f32 %v871, %v1255
    %v1340 = vadd.f32 %v1030, %v1330
    %v1341 = vadd.f32 %v1032, %v1332
    %v1342 = vxor.u32 %v1334, 2147483648
    %v1343 = vxor.u32 %v1338, 2147483648
    %v1344 = vmul.f32 %v1342, 1.442695
    %v1345 = vpow.pop %v1344
    %v1346 = vmul.f32 %v1343, 1.442695
    %v1347 = vpow.pop %v1346
    %v1348 = vadd.f32 %v1345, 1.0
    %v1349 = vadd.f32 %v1347, 1.0
    %v1350 = vrcp.pop %v1348
    %v1351 = vmul.f32 1.0, %v1350
    %v1352 = vrcp.pop %v1349
    %v1353 = vmul.f32 1.0, %v1352
    %v1354 = vxor.u32 %v1335, 2147483648
    %v1355 = vxor.u32 %v1339, 2147483648
    %v1356 = vmul.f32 %v1354, 1.442695
    %v1357 = vpow.pop %v1356
    %v1358 = vmul.f32 %v1355, 1.442695
    %v1359 = vpow.pop %v1358
    %v1360 = vadd.f32 %v1357, 1.0
    %v1361 = vadd.f32 %v1359, 1.0
    %v1362 = vrcp.pop %v1360
    %v1363 = vmul.f32 1.0, %v1362
    %v1364 = vrcp.pop %v1361
    %v1365 = vmul.f32 1.0, %v1364
    %v1366 = vtanh.pop %v1336
    %v1367 = vtanh.pop %v1340
    %v1368 = vxor.u32 %v1337, 2147483648
    %v1369 = vxor.u32 %v1341, 2147483648
    %v1370 = vmul.f32 %v1368, 1.442695
    %v1371 = vpow.pop %v1370
    %v1372 = vmul.f32 %v1369, 1.442695
    %v1373 = vpow.pop %v1372
    %v1374 = vadd.f32 %v1371, 1.0
    %v1375 = vadd.f32 %v1373, 1.0
    %v1376 = vrcp.pop %v1374
    %v1377 = vmul.f32 1.0, %v1376
    %v1378 = vrcp.pop %v1375
    %v1379 = vmul.f32 1.0, %v1378
    %v1380 = vmul.f32 %v1363, 0.0
    %v1381 = vmul.f32 %v1365, 0.0
    %v1382 = vmul.f32 %v1351, %v1366
    %v1383 = vmul.f32 %v1353, %v1367
    %v1384 = vadd.f32 %v1380, %v1382
    %v1385 = vadd.f32 %v1381, %v1383
    %v1386 = vtanh.pop %v1384
    %v1387 = vtanh.pop %v1385
    %v1388 = vmul.f32 %v1377, %v1386
    %v1389 = vmul.f32 %v1379, %v1387
    %1390 = vmatprep.subr.mxu0 %v1177
    %1391 = vmatpush1.msra.mxu0 %v1176
    %1392 = vmatprep.subr.mxu0 %v1173
    %1393 = vmatpush1.msra.mxu0 %v1172
    %1394 = vmatprep.subr.mxu0 %v1169
    %1395 = vmatpush1.msra.mxu0 %v1168
    %1396 = vmatprep.subr.mxu0 %v1165
    %1397 = vmatpush1.msra.mxu0 %v1164
    %1398 = vmatprep.subr.mxu0 %v1161
    %1399 = vmatpush1.msra.mxu0 %v1160
    %1400 = vmatprep.subr.mxu0 %v1157
    %1401 = vmatpush1.msra.mxu0 %v1156
    %1402 = vmatprep.subr.mxu0 %v1153
    %1403 = vmatpush1.msra.mxu0 %v1152
    %1404 = vmatprep.subr.mxu0 %v1149
    %1405 = vmatpush1.msra.mxu0 %v1148
    %1406 = vmatprep.subr.mxu0 %v1145
    %1407 = vmatpush1.msra.mxu0 %v1144
    %1408 = vmatprep.subr.mxu0 %v1141
    %1409 = vmatpush1.msra.mxu0 %v1140
    %1410 = vmatprep.subr.mxu0 %v1137
    %1411 = vmatpush1.msra.mxu0 %v1136
    %1412 = vmatprep.subr.mxu0 %v1133
    %1413 = vmatpush1.msra.mxu0 %v1132
    %1414 = vmatprep.subr.mxu0 %v1129
    %1415 = vmatpush1.msra.mxu0 %v1128
    %1416 = vmatprep.subr.mxu0 %v1125
    %1417 = vmatpush1.msra.mxu0 %v1124
    %1418 = vmatprep.subr.mxu0 %v1121
    %1419 = vmatpush1.msra.mxu0 %v1120
    %1420 = vmatprep.subr.mxu0 %v1117
    %1421 = vmatpush1.msra.mxu0 %v1116
    %1422 = vmatprep.subr.mxu0 0.0
    %1423 = vmatpush2.msra.mxu0 0.0
    %1424 = vmatprep.subr.mxu0 0.0
    %1425 = vmatpush2.msra.mxu0 0.0
    %1426 = vmatprep.subr.mxu0 0.0
    %1427 = vmatpush2.msra.mxu0 0.0
    %1428 = vmatprep.subr.mxu0 0.0
    %1429 = vmatpush2.msra.mxu0 0.0
    %1430 = vmatprep.subr.mxu0 0.0
    %1431 = vmatpush2.msra.mxu0 0.0
    %1432 = vmatprep.subr.mxu0 0.0
    %1433 = vmatpush2.msra.mxu0 0.0
    %1434 = vmatprep.subr.mxu0 0.0
    %1435 = vmatpush2.msra.mxu0 0.0
    %1436 = vmatprep.subr.mxu0 0.0
    %1437 = vmatpush2.msra.mxu0 0.0
    %1438 = vmatprep.subr.mxu0 0.0
    %1439 = vmatpush2.msra.mxu0 0.0
    %1440 = vmatprep.subr.mxu0 0.0
    %1441 = vmatpush2.msra.mxu0 0.0
    %1442 = vmatprep.subr.mxu0 0.0
    %1443 = vmatpush2.msra.mxu0 0.0
    %1444 = vmatprep.subr.mxu0 0.0
    %1445 = vmatpush2.msra.mxu0 0.0
    %1446 = vmatprep.subr.mxu0 0.0
    %1447 = vmatpush2.msra.mxu0 0.0
    %1448 = vmatprep.subr.mxu0 0.0
    %1449 = vmatpush2.msra.mxu0 0.0
    %1450 = vmatprep.subr.mxu0 0.0
    %1451 = vmatpush2.msra.mxu0 0.0
    %1452 = vmatprep.subr.mxu0 0.0
    %1453 = vmatpush2.msra.mxu0 0.0
    %1454 = vmatprep.mubr.f32.mxu0 0.0
    %1455 = vmatmul.mubr.f32.gmra.mxu0 %v1388
    %v1456 = vpop.f32.mrf.mxu0
    %v1457 = vadd.f32 0.0, %v1456
    %v1458 = vpop.f32.mrf.mxu0
    %v1459 = vadd.f32 0.0, %v1458
    %1460 = vmatprep.mubr.f32.mxu0 0.0
    %1461 = vmatmul.mubr.f32.gmra.mxu0 %v1389
    %v1462 = vpop.f32.mrf.mxu0
    %v1463 = vadd.f32 0.0, %v1462
    %v1464 = vpop.f32.mrf.mxu0
    %v1465 = vadd.f32 0.0, %v1464
    %1466 = vdwg.mxu0
    %1467 = vmatprep.subr.mxu0 %v1179
    %1468 = vmatpush1.msra.mxu0 %v1178
    %1469 = vmatprep.subr.mxu0 %v1175
    %1470 = vmatpush1.msra.mxu0 %v1174
    %1471 = vmatprep.subr.mxu0 %v1171
    %1472 = vmatpush1.msra.mxu0 %v1170
    %1473 = vmatprep.subr.mxu0 %v1167
    %1474 = vmatpush1.msra.mxu0 %v1166
    %1475 = vmatprep.subr.mxu0 %v1163
    %1476 = vmatpush1.msra.mxu0 %v1162
    %1477 = vmatprep.subr.mxu0 %v1159
    %1478 = vmatpush1.msra.mxu0 %v1158
    %1479 = vmatprep.subr.mxu0 %v1155
    %1480 = vmatpush1.msra.mxu0 %v1154
    %1481 = vmatprep.subr.mxu0 %v1151
    %1482 = vmatpush1.msra.mxu0 %v1150
    %1483 = vmatprep.subr.mxu0 %v1147
    %1484 = vmatpush1.msra.mxu0 %v1146
    %1485 = vmatprep.subr.mxu0 %v1143
    %1486 = vmatpush1.msra.mxu0 %v1142
    %1487 = vmatprep.subr.mxu0 %v1139
    %1488 = vmatpush1.msra.mxu0 %v1138
    %1489 = vmatprep.subr.mxu0 %v1135
    %1490 = vmatpush1.msra.mxu0 %v1134
    %1491 = vmatprep.subr.mxu0 %v1131
    %1492 = vmatpush1.msra.mxu0 %v1130
    %1493 = vmatprep.subr.mxu0 %v1127
    %1494 = vmatpush1.msra.mxu0 %v1126
    %1495 = vmatprep.subr.mxu0 %v1123
    %1496 = vmatpush1.msra.mxu0 %v1122
    %1497 = vmatprep.subr.mxu0 %v1119
    %1498 = vmatpush1.msra.mxu0 %v1118
    %1499 = vmatprep.subr.mxu0 0.0
    %1500 = vmatpush2.msra.mxu0 0.0
    %1501 = vmatprep.subr.mxu0 0.0
    %1502 = vmatpush2.msra.mxu0 0.0
    %1503 = vmatprep.subr.mxu0 0.0
    %1504 = vmatpush2.msra.mxu0 0.0
    %1505 = vmatprep.subr.mxu0 0.0
    %1506 = vmatpush2.msra.mxu0 0.0
    %1507 = vmatprep.subr.mxu0 0.0
    %1508 = vmatpush2.msra.mxu0 0.0
    %1509 = vmatprep.subr.mxu0 0.0
    %1510 = vmatpush2.msra.mxu0 0.0
    %1511 = vmatprep.subr.mxu0 0.0
    %1512 = vmatpush2.msra.mxu0 0.0
    %1513 = vmatprep.subr.mxu0 0.0
    %1514 = vmatpush2.msra.mxu0 0.0
    %1515 = vmatprep.subr.mxu0 0.0
    %1516 = vmatpush2.msra.mxu0 0.0
    %1517 = vmatprep.subr.mxu0 0.0
    %1518 = vmatpush2.msra.mxu0 0.0
    %1519 = vmatprep.subr.mxu0 0.0
    %1520 = vmatpush2.msra.mxu0 0.0
    %1521 = vmatprep.subr.mxu0 0.0
    %1522 = vmatpush2.msra.mxu0 0.0
    %1523 = vmatprep.subr.mxu0 0.0
    %1524 = vmatpush2.msra.mxu0 0.0
    %1525 = vmatprep.subr.mxu0 0.0
    %1526 = vmatpush2.msra.mxu0 0.0
    %1527 = vmatprep.subr.mxu0 0.0
    %1528 = vmatpush2.msra.mxu0 0.0
    %1529 = vmatprep.subr.mxu0 0.0
    %1530 = vmatpush2.msra.mxu0 0.0
    %1531 = vmatprep.mubr.f32.mxu0 0.0
    %1532 = vmatmul.mubr.f32.gmra.mxu0 %v1388
    %v1533 = vpop.f32.mrf.mxu0
    %v1534 = vadd.f32 0.0, %v1533
    %v1535 = vpop.f32.mrf.mxu0
    %v1536 = vadd.f32 0.0, %v1535
    %1537 = vmatprep.mubr.f32.mxu0 0.0
    %1538 = vmatmul.mubr.f32.gmra.mxu0 %v1389
    %v1539 = vpop.f32.mrf.mxu0
    %v1540 = vadd.f32 0.0, %v1539
    %v1541 = vpop.f32.mrf.mxu0
    %v1542 = vadd.f32 0.0, %v1541
    %1543 = vdwg.mxu0
    %v1544 = vadd.f32 %v875, %v1457
    %v1545 = vadd.f32 %v877, %v1459
    %v1546 = vadd.f32 %v1036, %v1534
    %v1547 = vadd.f32 %v1038, %v1536
    %v1548 = vadd.f32 %v881, %v1463
    %v1549 = vadd.f32 %v883, %v1465
    %v1550 = vadd.f32 %v1042, %v1540
    %v1551 = vadd.f32 %v1044, %v1542
    %v1552 = vxor.u32 %v1544, 2147483648
    %v1553 = vxor.u32 %v1548, 2147483648
    %v1554 = vmul.f32 %v1552, 1.442695
    %v1555 = vpow.pop %v1554
    %v1556 = vmul.f32 %v1553, 1.442695
    %v1557 = vpow.pop %v1556
    %v1558 = vadd.f32 %v1555, 1.0
    %v1559 = vadd.f32 %v1557, 1.0
    %v1560 = vrcp.pop %v1558
    %v1561 = vmul.f32 1.0, %v1560
    %v1562 = vrcp.pop %v1559
    %v1563 = vmul.f32 1.0, %v1562
    %v1564 = vxor.u32 %v1545, 2147483648
    %v1565 = vxor.u32 %v1549, 2147483648
    %v1566 = vmul.f32 %v1564, 1.442695
    %v1567 = vpow.pop %v1566
    %v1568 = vmul.f32 %v1565, 1.442695
    %v1569 = vpow.pop %v1568
    %v1570 = vadd.f32 %v1567, 1.0
    %v1571 = vadd.f32 %v1569, 1.0
    %v1572 = vrcp.pop %v1570
    %v1573 = vmul.f32 1.0, %v1572
    %v1574 = vrcp.pop %v1571
    %v1575 = vmul.f32 1.0, %v1574
    %v1576 = vtanh.pop %v1546
    %v1577 = vtanh.pop %v1550
    %v1578 = vxor.u32 %v1547, 2147483648
    %v1579 = vxor.u32 %v1551, 2147483648
    %v1580 = vmul.f32 %v1578, 1.442695
    %v1581 = vpow.pop %v1580
    %v1582 = vmul.f32 %v1579, 1.442695
    %v1583 = vpow.pop %v1582
    %v1584 = vadd.f32 %v1581, 1.0
    %v1585 = vadd.f32 %v1583, 1.0
    %v1586 = vrcp.pop %v1584
    %v1587 = vmul.f32 1.0, %v1586
    %v1588 = vrcp.pop %v1585
    %v1589 = vmul.f32 1.0, %v1588
    %v1590 = vmul.f32 %v1573, %v1384
    %v1591 = vmul.f32 %v1575, %v1385
    %v1592 = vmul.f32 %v1561, %v1576
    %v1593 = vmul.f32 %v1563, %v1577
    %v1594 = vadd.f32 %v1590, %v1592
    %v1595 = vadd.f32 %v1591, %v1593
    %v1596 = vtanh.pop %v1594
    %v1597 = vtanh.pop %v1595
    %v1598 = vmul.f32 %v1587, %v1596
    %v1599 = vmul.f32 %v1589, %v1597
    %1600 = vmatprep.subr.mxu0 %v1177
    %1601 = vmatpush1.msra.mxu0 %v1176
    %1602 = vmatprep.subr.mxu0 %v1173
    %1603 = vmatpush1.msra.mxu0 %v1172
    %1604 = vmatprep.subr.mxu0 %v1169
    %1605 = vmatpush1.msra.mxu0 %v1168
    %1606 = vmatprep.subr.mxu0 %v1165
    %1607 = vmatpush1.msra.mxu0 %v1164
    %1608 = vmatprep.subr.mxu0 %v1161
    %1609 = vmatpush1.msra.mxu0 %v1160
    %1610 = vmatprep.subr.mxu0 %v1157
    %1611 = vmatpush1.msra.mxu0 %v1156
    %1612 = vmatprep.subr.mxu0 %v1153
    %1613 = vmatpush1.msra.mxu0 %v1152
    %1614 = vmatprep.subr.mxu0 %v1149
    %1615 = vmatpush1.msra.mxu0 %v1148
    %1616 = vmatprep.subr.mxu0 %v1145
    %1617 = vmatpush1.msra.mxu0 %v1144
    %1618 = vmatprep.subr.mxu0 %v1141
    %1619 = vmatpush1.msra.mxu0 %v1140
    %1620 = vmatprep.subr.mxu0 %v1137
    %1621 = vmatpush1.msra.mxu0 %v1136
    %1622 = vmatprep.subr.mxu0 %v1133
    %1623 = vmatpush1.msra.mxu0 %v1132
    %1624 = vmatprep.subr.mxu0 %v1129
    %1625 = vmatpush1.msra.mxu0 %v1128
    %1626 = vmatprep.subr.mxu0 %v1125
    %1627 = vmatpush1.msra.mxu0 %v1124
    %1628 = vmatprep.subr.mxu0 %v1121
    %1629 = vmatpush1.msra.mxu0 %v1120
    %1630 = vmatprep.subr.mxu0 %v1117
    %1631 = vmatpush1.msra.mxu0 %v1116
    %1632 = vmatprep.subr.mxu0 0.0
    %1633 = vmatpush2.msra.mxu0 0.0
    %1634 = vmatprep.subr.mxu0 0.0
    %1635 = vmatpush2.msra.mxu0 0.0
    %1636 = vmatprep.subr.mxu0 0.0
    %1637 = vmatpush2.msra.mxu0 0.0
    %1638 = vmatprep.subr.mxu0 0.0
    %1639 = vmatpush2.msra.mxu0 0.0
    %1640 = vmatprep.subr.mxu0 0.0
    %1641 = vmatpush2.msra.mxu0 0.0
    %1642 = vmatprep.subr.mxu0 0.0
    %1643 = vmatpush2.msra.mxu0 0.0
    %1644 = vmatprep.subr.mxu0 0.0
    %1645 = vmatpush2.msra.mxu0 0.0
    %1646 = vmatprep.subr.mxu0 0.0
    %1647 = vmatpush2.msra.mxu0 0.0
    %1648 = vmatprep.subr.mxu0 0.0
    %1649 = vmatpush2.msra.mxu0 0.0
    %1650 = vmatprep.subr.mxu0 0.0
    %1651 = vmatpush2.msra.mxu0 0.0
    %1652 = vmatprep.subr.mxu0 0.0
    %1653 = vmatpush2.msra.mxu0 0.0
    %1654 = vmatprep.subr.mxu0 0.0
    %1655 = vmatpush2.msra.mxu0 0.0
    %1656 = vmatprep.subr.mxu0 0.0
    %1657 = vmatpush2.msra.mxu0 0.0
    %1658 = vmatprep.subr.mxu0 0.0
    %1659 = vmatpush2.msra.mxu0 0.0
    %1660 = vmatprep.subr.mxu0 0.0
    %1661 = vmatpush2.msra.mxu0 0.0
    %1662 = vmatprep.subr.mxu0 0.0
    %1663 = vmatpush2.msra.mxu0 0.0
    %1664 = vmatprep.mubr.f32.mxu0 0.0
    %1665 = vmatmul.mubr.f32.gmra.mxu0 %v1598
    %v1666 = vpop.f32.mrf.mxu0
    %v1667 = vadd.f32 0.0, %v1666
    %v1668 = vpop.f32.mrf.mxu0
    %v1669 = vadd.f32 0.0, %v1668
    %1670 = vmatprep.mubr.f32.mxu0 0.0
    %1671 = vmatmul.mubr.f32.gmra.mxu0 %v1599
    %v1672 = vpop.f32.mrf.mxu0
    %v1673 = vadd.f32 0.0, %v1672
    %v1674 = vpop.f32.mrf.mxu0
    %v1675 = vadd.f32 0.0, %v1674
    %1676 = vdwg.mxu0
    %1677 = vmatprep.subr.mxu0 %v1179
    %1678 = vmatpush1.msra.mxu0 %v1178
    %1679 = vmatprep.subr.mxu0 %v1175
    %1680 = vmatpush1.msra.mxu0 %v1174
    %1681 = vmatprep.subr.mxu0 %v1171
    %1682 = vmatpush1.msra.mxu0 %v1170
    %1683 = vmatprep.subr.mxu0 %v1167
    %1684 = vmatpush1.msra.mxu0 %v1166
    %1685 = vmatprep.subr.mxu0 %v1163
    %1686 = vmatpush1.msra.mxu0 %v1162
    %1687 = vmatprep.subr.mxu0 %v1159
    %1688 = vmatpush1.msra.mxu0 %v1158
    %1689 = vmatprep.subr.mxu0 %v1155
    %1690 = vmatpush1.msra.mxu0 %v1154
    %1691 = vmatprep.subr.mxu0 %v1151
    %1692 = vmatpush1.msra.mxu0 %v1150
    %1693 = vmatprep.subr.mxu0 %v1147
    %1694 = vmatpush1.msra.mxu0 %v1146
    %1695 = vmatprep.subr.mxu0 %v1143
    %1696 = vmatpush1.msra.mxu0 %v1142
    %1697 = vmatprep.subr.mxu0 %v1139
    %1698 = vmatpush1.msra.mxu0 %v1138
    %1699 = vmatprep.subr.mxu0 %v1135
    %1700 = vmatpush1.msra.mxu0 %v1134
    %1701 = vmatprep.subr.mxu0 %v1131
    %1702 = vmatpush1.msra.mxu0 %v1130
    %1703 = vmatprep.subr.mxu0 %v1127
    %1704 = vmatpush1.msra.mxu0 %v1126
    %1705 = vmatprep.subr.mxu0 %v1123
    %1706 = vmatpush1.msra.mxu0 %v1122
    %1707 = vmatprep.subr.mxu0 %v1119
    %1708 = vmatpush1.msra.mxu0 %v1118
    %1709 = vmatprep.subr.mxu0 0.0
    %1710 = vmatpush2.msra.mxu0 0.0
    %1711 = vmatprep.subr.mxu0 0.0
    %1712 = vmatpush2.msra.mxu0 0.0
    %1713 = vmatprep.subr.mxu0 0.0
    %1714 = vmatpush2.msra.mxu0 0.0
    %1715 = vmatprep.subr.mxu0 0.0
    %1716 = vmatpush2.msra.mxu0 0.0
    %1717 = vmatprep.subr.mxu0 0.0
    %1718 = vmatpush2.msra.mxu0 0.0
    %1719 = vmatprep.subr.mxu0 0.0
    %1720 = vmatpush2.msra.mxu0 0.0
    %1721 = vmatprep.subr.mxu0 0.0
    %1722 = vmatpush2.msra.mxu0 0.0
    %1723 = vmatprep.subr.mxu0 0.0
    %1724 = vmatpush2.msra.mxu0 0.0
    %1725 = vmatprep.subr.mxu0 0.0
    %1726 = vmatpush2.msra.mxu0 0.0
    %1727 = vmatprep.subr.mxu0 0.0
    %1728 = vmatpush2.msra.mxu0 0.0
    %1729 = vmatprep.subr.mxu0 0.0
    %1730 = vmatpush2.msra.mxu0 0.0
    %1731 = vmatprep.subr.mxu0 0.0
    %1732 = vmatpush2.msra.mxu0 0.0
    %1733 = vmatprep.subr.mxu0 0.0
    %1734 = vmatpush2.msra.mxu0 0.0
    %1735 = vmatprep.subr.mxu0 0.0
    %1736 = vmatpush2.msra.mxu0 0.0
    %1737 = vmatprep.subr.mxu0 0.0
    %1738 = vmatpush2.msra.mxu0 0.0
    %1739 = vmatprep.subr.mxu0 0.0
    %1740 = vmatpush2.msra.mxu0 0.0
    %1741 = vmatprep.mubr.f32.mxu0 0.0
    %1742 = vmatmul.mubr.f32.gmra.mxu0 %v1598
    %v1743 = vpop.f32.mrf.mxu0
    %v1744 = vadd.f32 0.0, %v1743
    %v1745 = vpop.f32.mrf.mxu0
    %v1746 = vadd.f32 0.0, %v1745
    %1747 = vmatprep.mubr.f32.mxu0 0.0
    %1748 = vmatmul.mubr.f32.gmra.mxu0 %v1599
    %v1749 = vpop.f32.mrf.mxu0
    %v1750 = vadd.f32 0.0, %v1749
    %v1751 = vpop.f32.mrf.mxu0
    %v1752 = vadd.f32 0.0, %v1751
    %1753 = vdwg.mxu0
    %v1754 = vadd.f32 %v887, %v1667
    %v1755 = vadd.f32 %v889, %v1669
    %v1756 = vadd.f32 %v1048, %v1744
    %v1757 = vadd.f32 %v1050, %v1746
    %v1758 = vadd.f32 %v893, %v1673
    %v1759 = vadd.f32 %v895, %v1675
    %v1760 = vadd.f32 %v1054, %v1750
    %v1761 = vadd.f32 %v1056, %v1752
    %v1762 = vxor.u32 %v1754, 2147483648
    %v1763 = vxor.u32 %v1758, 2147483648
    %v1764 = vmul.f32 %v1762, 1.442695
    %v1765 = vpow.pop %v1764
    %v1766 = vmul.f32 %v1763, 1.442695
    %v1767 = vpow.pop %v1766
    %v1768 = vadd.f32 %v1765, 1.0
    %v1769 = vadd.f32 %v1767, 1.0
    %v1770 = vrcp.pop %v1768
    %v1771 = vmul.f32 1.0, %v1770
    %v1772 = vrcp.pop %v1769
    %v1773 = vmul.f32 1.0, %v1772
    %v1774 = vxor.u32 %v1755, 2147483648
    %v1775 = vxor.u32 %v1759, 2147483648
    %v1776 = vmul.f32 %v1774, 1.442695
    %v1777 = vpow.pop %v1776
    %v1778 = vmul.f32 %v1775, 1.442695
    %v1779 = vpow.pop %v1778
    %v1780 = vadd.f32 %v1777, 1.0
    %v1781 = vadd.f32 %v1779, 1.0
    %v1782 = vrcp.pop %v1780
    %v1783 = vmul.f32 1.0, %v1782
    %v1784 = vrcp.pop %v1781
    %v1785 = vmul.f32 1.0, %v1784
    %v1786 = vtanh.pop %v1756
    %v1787 = vtanh.pop %v1760
    %v1788 = vxor.u32 %v1757, 2147483648
    %v1789 = vxor.u32 %v1761, 2147483648
    %v1790 = vmul.f32 %v1788, 1.442695
    %v1791 = vpow.pop %v1790
    %v1792 = vmul.f32 %v1789, 1.442695
    %v1793 = vpow.pop %v1792
    %v1794 = vadd.f32 %v1791, 1.0
    %v1795 = vadd.f32 %v1793, 1.0
    %v1796 = vrcp.pop %v1794
    %v1797 = vmul.f32 1.0, %v1796
    %v1798 = vrcp.pop %v1795
    %v1799 = vmul.f32 1.0, %v1798
    %v1800 = vmul.f32 %v1783, %v1594
    %v1801 = vmul.f32 %v1785, %v1595
    %v1802 = vmul.f32 %v1771, %v1786
    %v1803 = vmul.f32 %v1773, %v1787
    %v1804 = vadd.f32 %v1800, %v1802
    %v1805 = vadd.f32 %v1801, %v1803
    %v1806 = vtanh.pop %v1804
    %v1807 = vtanh.pop %v1805
    %v1808 = vmul.f32 %v1797, %v1806
    %v1809 = vmul.f32 %v1799, %v1807
    %1810 = vmatprep.subr.mxu0 %v1177
    %1811 = vmatpush1.msra.mxu0 %v1176
    %1812 = vmatprep.subr.mxu0 %v1173
    %1813 = vmatpush1.msra.mxu0 %v1172
    %1814 = vmatprep.subr.mxu0 %v1169
    %1815 = vmatpush1.msra.mxu0 %v1168
    %1816 = vmatprep.subr.mxu0 %v1165
    %1817 = vmatpush1.msra.mxu0 %v1164
    %1818 = vmatprep.subr.mxu0 %v1161
    %1819 = vmatpush1.msra.mxu0 %v1160
    %1820 = vmatprep.subr.mxu0 %v1157
    %1821 = vmatpush1.msra.mxu0 %v1156
    %1822 = vmatprep.subr.mxu0 %v1153
    %1823 = vmatpush1.msra.mxu0 %v1152
    %1824 = vmatprep.subr.mxu0 %v1149
    %1825 = vmatpush1.msra.mxu0 %v1148
    %1826 = vmatprep.subr.mxu0 %v1145
    %1827 = vmatpush1.msra.mxu0 %v1144
    %1828 = vmatprep.subr.mxu0 %v1141
    %1829 = vmatpush1.msra.mxu0 %v1140
    %1830 = vmatprep.subr.mxu0 %v1137
    %1831 = vmatpush1.msra.mxu0 %v1136
    %1832 = vmatprep.subr.mxu0 %v1133
    %1833 = vmatpush1.msra.mxu0 %v1132
    %1834 = vmatprep.subr.mxu0 %v1129
    %1835 = vmatpush1.msra.mxu0 %v1128
    %1836 = vmatprep.subr.mxu0 %v1125
    %1837 = vmatpush1.msra.mxu0 %v1124
    %1838 = vmatprep.subr.mxu0 %v1121
    %1839 = vmatpush1.msra.mxu0 %v1120
    %1840 = vmatprep.subr.mxu0 %v1117
    %1841 = vmatpush1.msra.mxu0 %v1116
    %1842 = vmatprep.subr.mxu0 0.0
    %1843 = vmatpush2.msra.mxu0 0.0
    %1844 = vmatprep.subr.mxu0 0.0
    %1845 = vmatpush2.msra.mxu0 0.0
    %1846 = vmatprep.subr.mxu0 0.0
    %1847 = vmatpush2.msra.mxu0 0.0
    %1848 = vmatprep.subr.mxu0 0.0
    %1849 = vmatpush2.msra.mxu0 0.0
    %1850 = vmatprep.subr.mxu0 0.0
    %1851 = vmatpush2.msra.mxu0 0.0
    %1852 = vmatprep.subr.mxu0 0.0
    %1853 = vmatpush2.msra.mxu0 0.0
    %1854 = vmatprep.subr.mxu0 0.0
    %1855 = vmatpush2.msra.mxu0 0.0
    %1856 = vmatprep.subr.mxu0 0.0
    %1857 = vmatpush2.msra.mxu0 0.0
    %1858 = vmatprep.subr.mxu0 0.0
    %1859 = vmatpush2.msra.mxu0 0.0
    %1860 = vmatprep.subr.mxu0 0.0
    %1861 = vmatpush2.msra.mxu0 0.0
    %1862 = vmatprep.subr.mxu0 0.0
    %1863 = vmatpush2.msra.mxu0 0.0
    %1864 = vmatprep.subr.mxu0 0.0
    %1865 = vmatpush2.msra.mxu0 0.0
    %1866 = vmatprep.subr.mxu0 0.0
    %1867 = vmatpush2.msra.mxu0 0.0
    %1868 = vmatprep.subr.mxu0 0.0
    %1869 = vmatpush2.msra.mxu0 0.0
    %1870 = vmatprep.subr.mxu0 0.0
    %1871 = vmatpush2.msra.mxu0 0.0
    %1872 = vmatprep.subr.mxu0 0.0
    %1873 = vmatpush2.msra.mxu0 0.0
    %1874 = vmatprep.mubr.f32.mxu0 0.0
    %1875 = vmatmul.mubr.f32.gmra.mxu0 %v1808
    %v1876 = vpop.f32.mrf.mxu0
    %v1877 = vadd.f32 0.0, %v1876
    %v1878 = vpop.f32.mrf.mxu0
    %v1879 = vadd.f32 0.0, %v1878
    %1880 = vmatprep.mubr.f32.mxu0 0.0
    %1881 = vmatmul.mubr.f32.gmra.mxu0 %v1809
    %v1882 = vpop.f32.mrf.mxu0
    %v1883 = vadd.f32 0.0, %v1882
    %v1884 = vpop.f32.mrf.mxu0
    %v1885 = vadd.f32 0.0, %v1884
    %1886 = vdwg.mxu0
    %1887 = vmatprep.subr.mxu0 %v1179
    %1888 = vmatpush1.msra.mxu0 %v1178
    %1889 = vmatprep.subr.mxu0 %v1175
    %1890 = vmatpush1.msra.mxu0 %v1174
    %1891 = vmatprep.subr.mxu0 %v1171
    %1892 = vmatpush1.msra.mxu0 %v1170
    %1893 = vmatprep.subr.mxu0 %v1167
    %1894 = vmatpush1.msra.mxu0 %v1166
    %1895 = vmatprep.subr.mxu0 %v1163
    %1896 = vmatpush1.msra.mxu0 %v1162
    %1897 = vmatprep.subr.mxu0 %v1159
    %1898 = vmatpush1.msra.mxu0 %v1158
    %1899 = vmatprep.subr.mxu0 %v1155
    %1900 = vmatpush1.msra.mxu0 %v1154
    %1901 = vmatprep.subr.mxu0 %v1151
    %1902 = vmatpush1.msra.mxu0 %v1150
    %1903 = vmatprep.subr.mxu0 %v1147
    %1904 = vmatpush1.msra.mxu0 %v1146
    %1905 = vmatprep.subr.mxu0 %v1143
    %1906 = vmatpush1.msra.mxu0 %v1142
    %1907 = vmatprep.subr.mxu0 %v1139
    %1908 = vmatpush1.msra.mxu0 %v1138
    %1909 = vmatprep.subr.mxu0 %v1135
    %1910 = vmatpush1.msra.mxu0 %v1134
    %1911 = vmatprep.subr.mxu0 %v1131
    %1912 = vmatpush1.msra.mxu0 %v1130
    %1913 = vmatprep.subr.mxu0 %v1127
    %1914 = vmatpush1.msra.mxu0 %v1126
    %1915 = vmatprep.subr.mxu0 %v1123
    %1916 = vmatpush1.msra.mxu0 %v1122
    %1917 = vmatprep.subr.mxu0 %v1119
    %1918 = vmatpush1.msra.mxu0 %v1118
    %1919 = vmatprep.subr.mxu0 0.0
    %1920 = vmatpush2.msra.mxu0 0.0
    %1921 = vmatprep.subr.mxu0 0.0
    %1922 = vmatpush2.msra.mxu0 0.0
    %1923 = vmatprep.subr.mxu0 0.0
    %1924 = vmatpush2.msra.mxu0 0.0
    %1925 = vmatprep.subr.mxu0 0.0
    %1926 = vmatpush2.msra.mxu0 0.0
    %1927 = vmatprep.subr.mxu0 0.0
    %1928 = vmatpush2.msra.mxu0 0.0
    %1929 = vmatprep.subr.mxu0 0.0
    %1930 = vmatpush2.msra.mxu0 0.0
    %1931 = vmatprep.subr.mxu0 0.0
    %1932 = vmatpush2.msra.mxu0 0.0
    %1933 = vmatprep.subr.mxu0 0.0
    %1934 = vmatpush2.msra.mxu0 0.0
    %1935 = vmatprep.subr.mxu0 0.0
    %1936 = vmatpush2.msra.mxu0 0.0
    %1937 = vmatprep.subr.mxu0 0.0
    %1938 = vmatpush2.msra.mxu0 0.0
    %1939 = vmatprep.subr.mxu0 0.0
    %1940 = vmatpush2.msra.mxu0 0.0
    %1941 = vmatprep.subr.mxu0 0.0
    %1942 = vmatpush2.msra.mxu0 0.0
    %1943 = vmatprep.subr.mxu0 0.0
    %1944 = vmatpush2.msra.mxu0 0.0
    %1945 = vmatprep.subr.mxu0 0.0
    %1946 = vmatpush2.msra.mxu0 0.0
    %1947 = vmatprep.subr.mxu0 0.0
    %1948 = vmatpush2.msra.mxu0 0.0
    %1949 = vmatprep.subr.mxu0 0.0
    %1950 = vmatpush2.msra.mxu0 0.0
    %1951 = vmatprep.mubr.f32.mxu0 0.0
    %1952 = vmatmul.mubr.f32.gmra.mxu0 %v1808
    %v1953 = vpop.f32.mrf.mxu0
    %v1954 = vadd.f32 0.0, %v1953
    %v1955 = vpop.f32.mrf.mxu0
    %v1956 = vadd.f32 0.0, %v1955
    %1957 = vmatprep.mubr.f32.mxu0 0.0
    %1958 = vmatmul.mubr.f32.gmra.mxu0 %v1809
    %v1959 = vpop.f32.mrf.mxu0
    %v1960 = vadd.f32 0.0, %v1959
    %v1961 = vpop.f32.mrf.mxu0
    %v1962 = vadd.f32 0.0, %v1961
    %1963 = vdwg.mxu0
    %v1964 = vadd.f32 %v899, %v1877
    %v1965 = vadd.f32 %v901, %v1879
    %v1966 = vadd.f32 %v1060, %v1954
    %v1967 = vadd.f32 %v1062, %v1956
    %v1968 = vadd.f32 %v905, %v1883
    %v1969 = vadd.f32 %v907, %v1885
    %v1970 = vadd.f32 %v1066, %v1960
    %v1971 = vadd.f32 %v1068, %v1962
    %v1972 = vxor.u32 %v1964, 2147483648
    %v1973 = vxor.u32 %v1968, 2147483648
    %v1974 = vmul.f32 %v1972, 1.442695
    %v1975 = vpow.pop %v1974
    %v1976 = vmul.f32 %v1973, 1.442695
    %v1977 = vpow.pop %v1976
    %v1978 = vadd.f32 %v1975, 1.0
    %v1979 = vadd.f32 %v1977, 1.0
    %v1980 = vrcp.pop %v1978
    %v1981 = vmul.f32 1.0, %v1980
    %v1982 = vrcp.pop %v1979
    %v1983 = vmul.f32 1.0, %v1982
    %v1984 = vxor.u32 %v1965, 2147483648
    %v1985 = vxor.u32 %v1969, 2147483648
    %v1986 = vmul.f32 %v1984, 1.442695
    %v1987 = vpow.pop %v1986
    %v1988 = vmul.f32 %v1985, 1.442695
    %v1989 = vpow.pop %v1988
    %v1990 = vadd.f32 %v1987, 1.0
    %v1991 = vadd.f32 %v1989, 1.0
    %v1992 = vrcp.pop %v1990
    %v1993 = vmul.f32 1.0, %v1992
    %v1994 = vrcp.pop %v1991
    %v1995 = vmul.f32 1.0, %v1994
    %v1996 = vtanh.pop %v1966
    %v1997 = vtanh.pop %v1970
    %v1998 = vxor.u32 %v1967, 2147483648
    %v1999 = vxor.u32 %v1971, 2147483648
    %v2000 = vmul.f32 %v1998, 1.442695
    %v2001 = vpow.pop %v2000
    %v2002 = vmul.f32 %v1999, 1.442695
    %v2003 = vpow.pop %v2002
    %v2004 = vadd.f32 %v2001, 1.0
    %v2005 = vadd.f32 %v2003, 1.0
    %v2006 = vrcp.pop %v2004
    %v2007 = vmul.f32 1.0, %v2006
    %v2008 = vrcp.pop %v2005
    %v2009 = vmul.f32 1.0, %v2008
    %v2010 = vmul.f32 %v1993, %v1804
    %v2011 = vmul.f32 %v1995, %v1805
    %v2012 = vmul.f32 %v1981, %v1996
    %v2013 = vmul.f32 %v1983, %v1997
    %v2014 = vadd.f32 %v2010, %v2012
    %v2015 = vadd.f32 %v2011, %v2013
    %v2016 = vtanh.pop %v2014
    %v2017 = vtanh.pop %v2015
    %v2018 = vmul.f32 %v2007, %v2016
    %v2019 = vmul.f32 %v2009, %v2017
    %2020 = vmatprep.subr.mxu0 %v1177
    %2021 = vmatpush1.msra.mxu0 %v1176
    %2022 = vmatprep.subr.mxu0 %v1173
    %2023 = vmatpush1.msra.mxu0 %v1172
    %2024 = vmatprep.subr.mxu0 %v1169
    %2025 = vmatpush1.msra.mxu0 %v1168
    %2026 = vmatprep.subr.mxu0 %v1165
    %2027 = vmatpush1.msra.mxu0 %v1164
    %2028 = vmatprep.subr.mxu0 %v1161
    %2029 = vmatpush1.msra.mxu0 %v1160
    %2030 = vmatprep.subr.mxu0 %v1157
    %2031 = vmatpush1.msra.mxu0 %v1156
    %2032 = vmatprep.subr.mxu0 %v1153
    %2033 = vmatpush1.msra.mxu0 %v1152
    %2034 = vmatprep.subr.mxu0 %v1149
    %2035 = vmatpush1.msra.mxu0 %v1148
    %2036 = vmatprep.subr.mxu0 %v1145
    %2037 = vmatpush1.msra.mxu0 %v1144
    %2038 = vmatprep.subr.mxu0 %v1141
    %2039 = vmatpush1.msra.mxu0 %v1140
    %2040 = vmatprep.subr.mxu0 %v1137
    %2041 = vmatpush1.msra.mxu0 %v1136
    %2042 = vmatprep.subr.mxu0 %v1133
    %2043 = vmatpush1.msra.mxu0 %v1132
    %2044 = vmatprep.subr.mxu0 %v1129
    %2045 = vmatpush1.msra.mxu0 %v1128
    %2046 = vmatprep.subr.mxu0 %v1125
    %2047 = vmatpush1.msra.mxu0 %v1124
    %2048 = vmatprep.subr.mxu0 %v1121
    %2049 = vmatpush1.msra.mxu0 %v1120
    %2050 = vmatprep.subr.mxu0 %v1117
    %2051 = vmatpush1.msra.mxu0 %v1116
    %2052 = vmatprep.subr.mxu0 0.0
    %2053 = vmatpush2.msra.mxu0 0.0
    %2054 = vmatprep.subr.mxu0 0.0
    %2055 = vmatpush2.msra.mxu0 0.0
    %2056 = vmatprep.subr.mxu0 0.0
    %2057 = vmatpush2.msra.mxu0 0.0
    %2058 = vmatprep.subr.mxu0 0.0
    %2059 = vmatpush2.msra.mxu0 0.0
    %2060 = vmatprep.subr.mxu0 0.0
    %2061 = vmatpush2.msra.mxu0 0.0
    %2062 = vmatprep.subr.mxu0 0.0
    %2063 = vmatpush2.msra.mxu0 0.0
    %2064 = vmatprep.subr.mxu0 0.0
    %2065 = vmatpush2.msra.mxu0 0.0
    %2066 = vmatprep.subr.mxu0 0.0
    %2067 = vmatpush2.msra.mxu0 0.0
    %2068 = vmatprep.subr.mxu0 0.0
    %2069 = vmatpush2.msra.mxu0 0.0
    %2070 = vmatprep.subr.mxu0 0.0
    %2071 = vmatpush2.msra.mxu0 0.0
    %2072 = vmatprep.subr.mxu0 0.0
    %2073 = vmatpush2.msra.mxu0 0.0
    %2074 = vmatprep.subr.mxu0 0.0
    %2075 = vmatpush2.msra.mxu0 0.0
    %2076 = vmatprep.subr.mxu0 0.0
    %2077 = vmatpush2.msra.mxu0 0.0
    %2078 = vmatprep.subr.mxu0 0.0
    %2079 = vmatpush2.msra.mxu0 0.0
    %2080 = vmatprep.subr.mxu0 0.0
    %2081 = vmatpush2.msra.mxu0 0.0
    %2082 = vmatprep.subr.mxu0 0.0
    %2083 = vmatpush2.msra.mxu0 0.0
    %2084 = vmatprep.mubr.f32.mxu0 0.0
    %2085 = vmatmul.mubr.f32.gmra.mxu0 %v2018
    %v2086 = vpop.f32.mrf.mxu0
    %v2087 = vadd.f32 0.0, %v2086
    %v2088 = vpop.f32.mrf.mxu0
    %v2089 = vadd.f32 0.0, %v2088
    %2090 = vmatprep.mubr.f32.mxu0 0.0
    %2091 = vmatmul.mubr.f32.gmra.mxu0 %v2019
    %v2092 = vpop.f32.mrf.mxu0
    %v2093 = vadd.f32 0.0, %v2092
    %v2094 = vpop.f32.mrf.mxu0
    %v2095 = vadd.f32 0.0, %v2094
    %2096 = vdwg.mxu0
    %2097 = vmatprep.subr.mxu0 %v1179
    %2098 = vmatpush1.msra.mxu0 %v1178
    %2099 = vmatprep.subr.mxu0 %v1175
    %2100 = vmatpush1.msra.mxu0 %v1174
    %2101 = vmatprep.subr.mxu0 %v1171
    %2102 = vmatpush1.msra.mxu0 %v1170
    %2103 = vmatprep.subr.mxu0 %v1167
    %2104 = vmatpush1.msra.mxu0 %v1166
    %2105 = vmatprep.subr.mxu0 %v1163
    %2106 = vmatpush1.msra.mxu0 %v1162
    %2107 = vmatprep.subr.mxu0 %v1159
    %2108 = vmatpush1.msra.mxu0 %v1158
    %2109 = vmatprep.subr.mxu0 %v1155
    %2110 = vmatpush1.msra.mxu0 %v1154
    %2111 = vmatprep.subr.mxu0 %v1151
    %2112 = vmatpush1.msra.mxu0 %v1150
    %2113 = vmatprep.subr.mxu0 %v1147
    %2114 = vmatpush1.msra.mxu0 %v1146
    %2115 = vmatprep.subr.mxu0 %v1143
    %2116 = vmatpush1.msra.mxu0 %v1142
    %2117 = vmatprep.subr.mxu0 %v1139
    %2118 = vmatpush1.msra.mxu0 %v1138
    %2119 = vmatprep.subr.mxu0 %v1135
    %2120 = vmatpush1.msra.mxu0 %v1134
    %2121 = vmatprep.subr.mxu0 %v1131
    %2122 = vmatpush1.msra.mxu0 %v1130
    %2123 = vmatprep.subr.mxu0 %v1127
    %2124 = vmatpush1.msra.mxu0 %v1126
    %2125 = vmatprep.subr.mxu0 %v1123
    %2126 = vmatpush1.msra.mxu0 %v1122
    %2127 = vmatprep.subr.mxu0 %v1119
    %2128 = vmatpush1.msra.mxu0 %v1118
    %2129 = vmatprep.subr.mxu0 0.0
    %2130 = vmatpush2.msra.mxu0 0.0
    %2131 = vmatprep.subr.mxu0 0.0
    %2132 = vmatpush2.msra.mxu0 0.0
    %2133 = vmatprep.subr.mxu0 0.0
    %2134 = vmatpush2.msra.mxu0 0.0
    %2135 = vmatprep.subr.mxu0 0.0
    %2136 = vmatpush2.msra.mxu0 0.0
    %2137 = vmatprep.subr.mxu0 0.0
    %2138 = vmatpush2.msra.mxu0 0.0
    %2139 = vmatprep.subr.mxu0 0.0
    %2140 = vmatpush2.msra.mxu0 0.0
    %2141 = vmatprep.subr.mxu0 0.0
    %2142 = vmatpush2.msra.mxu0 0.0
    %2143 = vmatprep.subr.mxu0 0.0
    %2144 = vmatpush2.msra.mxu0 0.0
    %2145 = vmatprep.subr.mxu0 0.0
    %2146 = vmatpush2.msra.mxu0 0.0
    %2147 = vmatprep.subr.mxu0 0.0
    %2148 = vmatpush2.msra.mxu0 0.0
    %2149 = vmatprep.subr.mxu0 0.0
    %2150 = vmatpush2.msra.mxu0 0.0
    %2151 = vmatprep.subr.mxu0 0.0
    %2152 = vmatpush2.msra.mxu0 0.0
    %2153 = vmatprep.subr.mxu0 0.0
    %2154 = vmatpush2.msra.mxu0 0.0
    %2155 = vmatprep.subr.mxu0 0.0
    %2156 = vmatpush2.msra.mxu0 0.0
    %2157 = vmatprep.subr.mxu0 0.0
    %2158 = vmatpush2.msra.mxu0 0.0
    %2159 = vmatprep.subr.mxu0 0.0
    %2160 = vmatpush2.msra.mxu0 0.0
    %2161 = vmatprep.mubr.f32.mxu0 0.0
    %2162 = vmatmul.mubr.f32.gmra.mxu0 %v2018
    %v2163 = vpop.f32.mrf.mxu0
    %v2164 = vadd.f32 0.0, %v2163
    %v2165 = vpop.f32.mrf.mxu0
    %v2166 = vadd.f32 0.0, %v2165
    %2167 = vmatprep.mubr.f32.mxu0 0.0
    %2168 = vmatmul.mubr.f32.gmra.mxu0 %v2019
    %v2169 = vpop.f32.mrf.mxu0
    %v2170 = vadd.f32 0.0, %v2169
    %v2171 = vpop.f32.mrf.mxu0
    %v2172 = vadd.f32 0.0, %v2171
    %2173 = vdwg.mxu0
    %v2174 = vadd.f32 %v911, %v2087
    %v2175 = vadd.f32 %v913, %v2089
    %v2176 = vadd.f32 %v1072, %v2164
    %v2177 = vadd.f32 %v1074, %v2166
    %v2178 = vadd.f32 %v917, %v2093
    %v2179 = vadd.f32 %v919, %v2095
    %v2180 = vadd.f32 %v1078, %v2170
    %v2181 = vadd.f32 %v1080, %v2172
    %v2182 = vxor.u32 %v2174, 2147483648
    %v2183 = vxor.u32 %v2178, 2147483648
    %v2184 = vmul.f32 %v2182, 1.442695
    %v2185 = vpow.pop %v2184
    %v2186 = vmul.f32 %v2183, 1.442695
    %v2187 = vpow.pop %v2186
    %v2188 = vadd.f32 %v2185, 1.0
    %v2189 = vadd.f32 %v2187, 1.0
    %v2190 = vrcp.pop %v2188
    %v2191 = vmul.f32 1.0, %v2190
    %v2192 = vrcp.pop %v2189
    %v2193 = vmul.f32 1.0, %v2192
    %v2194 = vxor.u32 %v2175, 2147483648
    %v2195 = vxor.u32 %v2179, 2147483648
    %v2196 = vmul.f32 %v2194, 1.442695
    %v2197 = vpow.pop %v2196
    %v2198 = vmul.f32 %v2195, 1.442695
    %v2199 = vpow.pop %v2198
    %v2200 = vadd.f32 %v2197, 1.0
    %v2201 = vadd.f32 %v2199, 1.0
    %v2202 = vrcp.pop %v2200
    %v2203 = vmul.f32 1.0, %v2202
    %v2204 = vrcp.pop %v2201
    %v2205 = vmul.f32 1.0, %v2204
    %v2206 = vtanh.pop %v2176
    %v2207 = vtanh.pop %v2180
    %v2208 = vxor.u32 %v2177, 2147483648
    %v2209 = vxor.u32 %v2181, 2147483648
    %v2210 = vmul.f32 %v2208, 1.442695
    %v2211 = vpow.pop %v2210
    %v2212 = vmul.f32 %v2209, 1.442695
    %v2213 = vpow.pop %v2212
    %v2214 = vadd.f32 %v2211, 1.0
    %v2215 = vadd.f32 %v2213, 1.0
    %v2216 = vrcp.pop %v2214
    %v2217 = vmul.f32 1.0, %v2216
    %v2218 = vrcp.pop %v2215
    %v2219 = vmul.f32 1.0, %v2218
    %v2220 = vmul.f32 %v2203, %v2014
    %v2221 = vmul.f32 %v2205, %v2015
    %v2222 = vmul.f32 %v2191, %v2206
    %v2223 = vmul.f32 %v2193, %v2207
    %v2224 = vadd.f32 %v2220, %v2222
    %v2225 = vadd.f32 %v2221, %v2223
    %v2226 = vtanh.pop %v2224
    %v2227 = vtanh.pop %v2225
    %v2228 = vmul.f32 %v2217, %v2226
    %v2229 = vmul.f32 %v2219, %v2227
    %2230 = vmatprep.subr.mxu0 %v1177
    %2231 = vmatpush1.msra.mxu0 %v1176
    %2232 = vmatprep.subr.mxu0 %v1173
    %2233 = vmatpush1.msra.mxu0 %v1172
    %2234 = vmatprep.subr.mxu0 %v1169
    %2235 = vmatpush1.msra.mxu0 %v1168
    %2236 = vmatprep.subr.mxu0 %v1165
    %2237 = vmatpush1.msra.mxu0 %v1164
    %2238 = vmatprep.subr.mxu0 %v1161
    %2239 = vmatpush1.msra.mxu0 %v1160
    %2240 = vmatprep.subr.mxu0 %v1157
    %2241 = vmatpush1.msra.mxu0 %v1156
    %2242 = vmatprep.subr.mxu0 %v1153
    %2243 = vmatpush1.msra.mxu0 %v1152
    %2244 = vmatprep.subr.mxu0 %v1149
    %2245 = vmatpush1.msra.mxu0 %v1148
    %2246 = vmatprep.subr.mxu0 %v1145
    %2247 = vmatpush1.msra.mxu0 %v1144
    %2248 = vmatprep.subr.mxu0 %v1141
    %2249 = vmatpush1.msra.mxu0 %v1140
    %2250 = vmatprep.subr.mxu0 %v1137
    %2251 = vmatpush1.msra.mxu0 %v1136
    %2252 = vmatprep.subr.mxu0 %v1133
    %2253 = vmatpush1.msra.mxu0 %v1132
    %2254 = vmatprep.subr.mxu0 %v1129
    %2255 = vmatpush1.msra.mxu0 %v1128
    %2256 = vmatprep.subr.mxu0 %v1125
    %2257 = vmatpush1.msra.mxu0 %v1124
    %2258 = vmatprep.subr.mxu0 %v1121
    %2259 = vmatpush1.msra.mxu0 %v1120
    %2260 = vmatprep.subr.mxu0 %v1117
    %2261 = vmatpush1.msra.mxu0 %v1116
    %2262 = vmatprep.subr.mxu0 0.0
    %2263 = vmatpush2.msra.mxu0 0.0
    %2264 = vmatprep.subr.mxu0 0.0
    %2265 = vmatpush2.msra.mxu0 0.0
    %2266 = vmatprep.subr.mxu0 0.0
    %2267 = vmatpush2.msra.mxu0 0.0
    %2268 = vmatprep.subr.mxu0 0.0
    %2269 = vmatpush2.msra.mxu0 0.0
    %2270 = vmatprep.subr.mxu0 0.0
    %2271 = vmatpush2.msra.mxu0 0.0
    %2272 = vmatprep.subr.mxu0 0.0
    %2273 = vmatpush2.msra.mxu0 0.0
    %2274 = vmatprep.subr.mxu0 0.0
    %2275 = vmatpush2.msra.mxu0 0.0
    %2276 = vmatprep.subr.mxu0 0.0
    %2277 = vmatpush2.msra.mxu0 0.0
    %2278 = vmatprep.subr.mxu0 0.0
    %2279 = vmatpush2.msra.mxu0 0.0
    %2280 = vmatprep.subr.mxu0 0.0
    %2281 = vmatpush2.msra.mxu0 0.0
    %2282 = vmatprep.subr.mxu0 0.0
    %2283 = vmatpush2.msra.mxu0 0.0
    %2284 = vmatprep.subr.mxu0 0.0
    %2285 = vmatpush2.msra.mxu0 0.0
    %2286 = vmatprep.subr.mxu0 0.0
    %2287 = vmatpush2.msra.mxu0 0.0
    %2288 = vmatprep.subr.mxu0 0.0
    %2289 = vmatpush2.msra.mxu0 0.0
    %2290 = vmatprep.subr.mxu0 0.0
    %2291 = vmatpush2.msra.mxu0 0.0
    %2292 = vmatprep.subr.mxu0 0.0
    %2293 = vmatpush2.msra.mxu0 0.0
    %2294 = vmatprep.mubr.f32.mxu0 0.0
    %2295 = vmatmul.mubr.f32.gmra.mxu0 %v2228
    %v2296 = vpop.f32.mrf.mxu0
    %v2297 = vadd.f32 0.0, %v2296
    %v2298 = vpop.f32.mrf.mxu0
    %v2299 = vadd.f32 0.0, %v2298
    %2300 = vmatprep.mubr.f32.mxu0 0.0
    %2301 = vmatmul.mubr.f32.gmra.mxu0 %v2229
    %v2302 = vpop.f32.mrf.mxu0
    %v2303 = vadd.f32 0.0, %v2302
    %v2304 = vpop.f32.mrf.mxu0
    %v2305 = vadd.f32 0.0, %v2304
    %2306 = vdwg.mxu0
    %2307 = vmatprep.subr.mxu0 %v1179
    %2308 = vmatpush1.msra.mxu0 %v1178
    %2309 = vmatprep.subr.mxu0 %v1175
    %2310 = vmatpush1.msra.mxu0 %v1174
    %2311 = vmatprep.subr.mxu0 %v1171
    %2312 = vmatpush1.msra.mxu0 %v1170
    %2313 = vmatprep.subr.mxu0 %v1167
    %2314 = vmatpush1.msra.mxu0 %v1166
    %2315 = vmatprep.subr.mxu0 %v1163
    %2316 = vmatpush1.msra.mxu0 %v1162
    %2317 = vmatprep.subr.mxu0 %v1159
    %2318 = vmatpush1.msra.mxu0 %v1158
    %2319 = vmatprep.subr.mxu0 %v1155
    %2320 = vmatpush1.msra.mxu0 %v1154
    %2321 = vmatprep.subr.mxu0 %v1151
    %2322 = vmatpush1.msra.mxu0 %v1150
    %2323 = vmatprep.subr.mxu0 %v1147
    %2324 = vmatpush1.msra.mxu0 %v1146
    %2325 = vmatprep.subr.mxu0 %v1143
    %2326 = vmatpush1.msra.mxu0 %v1142
    %2327 = vmatprep.subr.mxu0 %v1139
    %2328 = vmatpush1.msra.mxu0 %v1138
    %2329 = vmatprep.subr.mxu0 %v1135
    %2330 = vmatpush1.msra.mxu0 %v1134
    %2331 = vmatprep.subr.mxu0 %v1131
    %2332 = vmatpush1.msra.mxu0 %v1130
    %2333 = vmatprep.subr.mxu0 %v1127
    %2334 = vmatpush1.msra.mxu0 %v1126
    %2335 = vmatprep.subr.mxu0 %v1123
    %2336 = vmatpush1.msra.mxu0 %v1122
    %2337 = vmatprep.subr.mxu0 %v1119
    %2338 = vmatpush1.msra.mxu0 %v1118
    %2339 = vmatprep.subr.mxu0 0.0
    %2340 = vmatpush2.msra.mxu0 0.0
    %2341 = vmatprep.subr.mxu0 0.0
    %2342 = vmatpush2.msra.mxu0 0.0
    %2343 = vmatprep.subr.mxu0 0.0
    %2344 = vmatpush2.msra.mxu0 0.0
    %2345 = vmatprep.subr.mxu0 0.0
    %2346 = vmatpush2.msra.mxu0 0.0
    %2347 = vmatprep.subr.mxu0 0.0
    %2348 = vmatpush2.msra.mxu0 0.0
    %2349 = vmatprep.subr.mxu0 0.0
    %2350 = vmatpush2.msra.mxu0 0.0
    %2351 = vmatprep.subr.mxu0 0.0
    %2352 = vmatpush2.msra.mxu0 0.0
    %2353 = vmatprep.subr.mxu0 0.0
    %2354 = vmatpush2.msra.mxu0 0.0
    %2355 = vmatprep.subr.mxu0 0.0
    %2356 = vmatpush2.msra.mxu0 0.0
    %2357 = vmatprep.subr.mxu0 0.0
    %2358 = vmatpush2.msra.mxu0 0.0
    %2359 = vmatprep.subr.mxu0 0.0
    %2360 = vmatpush2.msra.mxu0 0.0
    %2361 = vmatprep.subr.mxu0 0.0
    %2362 = vmatpush2.msra.mxu0 0.0
    %2363 = vmatprep.subr.mxu0 0.0
    %2364 = vmatpush2.msra.mxu0 0.0
    %2365 = vmatprep.subr.mxu0 0.0
    %2366 = vmatpush2.msra.mxu0 0.0
    %2367 = vmatprep.subr.mxu0 0.0
    %2368 = vmatpush2.msra.mxu0 0.0
    %2369 = vmatprep.subr.mxu0 0.0
    %2370 = vmatpush2.msra.mxu0 0.0
    %2371 = vmatprep.mubr.f32.mxu0 0.0
    %2372 = vmatmul.mubr.f32.gmra.mxu0 %v2228
    %v2373 = vpop.f32.mrf.mxu0
    %v2374 = vadd.f32 0.0, %v2373
    %v2375 = vpop.f32.mrf.mxu0
    %v2376 = vadd.f32 0.0, %v2375
    %2377 = vmatprep.mubr.f32.mxu0 0.0
    %2378 = vmatmul.mubr.f32.gmra.mxu0 %v2229
    %v2379 = vpop.f32.mrf.mxu0
    %v2380 = vadd.f32 0.0, %v2379
    %v2381 = vpop.f32.mrf.mxu0
    %v2382 = vadd.f32 0.0, %v2381
    %2383 = vdwg.mxu0
    %v2384 = vadd.f32 %v923, %v2297
    %v2385 = vadd.f32 %v925, %v2299
    %v2386 = vadd.f32 %v1084, %v2374
    %v2387 = vadd.f32 %v1086, %v2376
    %v2388 = vadd.f32 %v929, %v2303
    %v2389 = vadd.f32 %v931, %v2305
    %v2390 = vadd.f32 %v1090, %v2380
    %v2391 = vadd.f32 %v1092, %v2382
    %v2392 = vxor.u32 %v2384, 2147483648
    %v2393 = vxor.u32 %v2388, 2147483648
    %v2394 = vmul.f32 %v2392, 1.442695
    %v2395 = vpow.pop %v2394
    %v2396 = vmul.f32 %v2393, 1.442695
    %v2397 = vpow.pop %v2396
    %v2398 = vadd.f32 %v2395, 1.0
    %v2399 = vadd.f32 %v2397, 1.0
    %v2400 = vrcp.pop %v2398
    %v2401 = vmul.f32 1.0, %v2400
    %v2402 = vrcp.pop %v2399
    %v2403 = vmul.f32 1.0, %v2402
    %v2404 = vxor.u32 %v2385, 2147483648
    %v2405 = vxor.u32 %v2389, 2147483648
    %v2406 = vmul.f32 %v2404, 1.442695
    %v2407 = vpow.pop %v2406
    %v2408 = vmul.f32 %v2405, 1.442695
    %v2409 = vpow.pop %v2408
    %v2410 = vadd.f32 %v2407, 1.0
    %v2411 = vadd.f32 %v2409, 1.0
    %v2412 = vrcp.pop %v2410
    %v2413 = vmul.f32 1.0, %v2412
    %v2414 = vrcp.pop %v2411
    %v2415 = vmul.f32 1.0, %v2414
    %v2416 = vtanh.pop %v2386
    %v2417 = vtanh.pop %v2390
    %v2418 = vxor.u32 %v2387, 2147483648
    %v2419 = vxor.u32 %v2391, 2147483648
    %v2420 = vmul.f32 %v2418, 1.442695
    %v2421 = vpow.pop %v2420
    %v2422 = vmul.f32 %v2419, 1.442695
    %v2423 = vpow.pop %v2422
    %v2424 = vadd.f32 %v2421, 1.0
    %v2425 = vadd.f32 %v2423, 1.0
    %v2426 = vrcp.pop %v2424
    %v2427 = vmul.f32 1.0, %v2426
    %v2428 = vrcp.pop %v2425
    %v2429 = vmul.f32 1.0, %v2428
    %v2430 = vmul.f32 %v2413, %v2224
    %v2431 = vmul.f32 %v2415, %v2225
    %v2432 = vmul.f32 %v2401, %v2416
    %v2433 = vmul.f32 %v2403, %v2417
    %v2434 = vadd.f32 %v2430, %v2432
    %v2435 = vadd.f32 %v2431, %v2433
    %v2436 = vtanh.pop %v2434
    %v2437 = vtanh.pop %v2435
    %v2438 = vmul.f32 %v2427, %v2436
    %v2439 = vmul.f32 %v2429, %v2437
    %2440 = vmatprep.subr.mxu0 %v1177
    %2441 = vmatpush1.msra.mxu0 %v1176
    %2442 = vmatprep.subr.mxu0 %v1173
    %2443 = vmatpush1.msra.mxu0 %v1172
    %2444 = vmatprep.subr.mxu0 %v1169
    %2445 = vmatpush1.msra.mxu0 %v1168
    %2446 = vmatprep.subr.mxu0 %v1165
    %2447 = vmatpush1.msra.mxu0 %v1164
    %2448 = vmatprep.subr.mxu0 %v1161
    %2449 = vmatpush1.msra.mxu0 %v1160
    %2450 = vmatprep.subr.mxu0 %v1157
    %2451 = vmatpush1.msra.mxu0 %v1156
    %2452 = vmatprep.subr.mxu0 %v1153
    %2453 = vmatpush1.msra.mxu0 %v1152
    %2454 = vmatprep.subr.mxu0 %v1149
    %2455 = vmatpush1.msra.mxu0 %v1148
    %2456 = vmatprep.subr.mxu0 %v1145
    %2457 = vmatpush1.msra.mxu0 %v1144
    %2458 = vmatprep.subr.mxu0 %v1141
    %2459 = vmatpush1.msra.mxu0 %v1140
    %2460 = vmatprep.subr.mxu0 %v1137
    %2461 = vmatpush1.msra.mxu0 %v1136
    %2462 = vmatprep.subr.mxu0 %v1133
    %2463 = vmatpush1.msra.mxu0 %v1132
    %2464 = vmatprep.subr.mxu0 %v1129
    %2465 = vmatpush1.msra.mxu0 %v1128
    %2466 = vmatprep.subr.mxu0 %v1125
    %2467 = vmatpush1.msra.mxu0 %v1124
    %2468 = vmatprep.subr.mxu0 %v1121
    %2469 = vmatpush1.msra.mxu0 %v1120
    %2470 = vmatprep.subr.mxu0 %v1117
    %2471 = vmatpush1.msra.mxu0 %v1116
    %2472 = vmatprep.subr.mxu0 0.0
    %2473 = vmatpush2.msra.mxu0 0.0
    %2474 = vmatprep.subr.mxu0 0.0
    %2475 = vmatpush2.msra.mxu0 0.0
    %2476 = vmatprep.subr.mxu0 0.0
    %2477 = vmatpush2.msra.mxu0 0.0
    %2478 = vmatprep.subr.mxu0 0.0
    %2479 = vmatpush2.msra.mxu0 0.0
    %2480 = vmatprep.subr.mxu0 0.0
    %2481 = vmatpush2.msra.mxu0 0.0
    %2482 = vmatprep.subr.mxu0 0.0
    %2483 = vmatpush2.msra.mxu0 0.0
    %2484 = vmatprep.subr.mxu0 0.0
    %2485 = vmatpush2.msra.mxu0 0.0
    %2486 = vmatprep.subr.mxu0 0.0
    %2487 = vmatpush2.msra.mxu0 0.0
    %2488 = vmatprep.subr.mxu0 0.0
    %2489 = vmatpush2.msra.mxu0 0.0
    %2490 = vmatprep.subr.mxu0 0.0
    %2491 = vmatpush2.msra.mxu0 0.0
    %2492 = vmatprep.subr.mxu0 0.0
    %2493 = vmatpush2.msra.mxu0 0.0
    %2494 = vmatprep.subr.mxu0 0.0
    %2495 = vmatpush2.msra.mxu0 0.0
    %2496 = vmatprep.subr.mxu0 0.0
    %2497 = vmatpush2.msra.mxu0 0.0
    %2498 = vmatprep.subr.mxu0 0.0
    %2499 = vmatpush2.msra.mxu0 0.0
    %2500 = vmatprep.subr.mxu0 0.0
    %2501 = vmatpush2.msra.mxu0 0.0
    %2502 = vmatprep.subr.mxu0 0.0
    %2503 = vmatpush2.msra.mxu0 0.0
    %2504 = vmatprep.mubr.f32.mxu0 0.0
    %2505 = vmatmul.mubr.f32.gmra.mxu0 %v2438
    %v2506 = vpop.f32.mrf.mxu0
    %v2507 = vadd.f32 0.0, %v2506
    %v2508 = vpop.f32.mrf.mxu0
    %v2509 = vadd.f32 0.0, %v2508
    %2510 = vmatprep.mubr.f32.mxu0 0.0
    %2511 = vmatmul.mubr.f32.gmra.mxu0 %v2439
    %v2512 = vpop.f32.mrf.mxu0
    %v2513 = vadd.f32 0.0, %v2512
    %v2514 = vpop.f32.mrf.mxu0
    %v2515 = vadd.f32 0.0, %v2514
    %2516 = vdwg.mxu0
    %2517 = vmatprep.subr.mxu0 %v1179
    %2518 = vmatpush1.msra.mxu0 %v1178
    %2519 = vmatprep.subr.mxu0 %v1175
    %2520 = vmatpush1.msra.mxu0 %v1174
    %2521 = vmatprep.subr.mxu0 %v1171
    %2522 = vmatpush1.msra.mxu0 %v1170
    %2523 = vmatprep.subr.mxu0 %v1167
    %2524 = vmatpush1.msra.mxu0 %v1166
    %2525 = vmatprep.subr.mxu0 %v1163
    %2526 = vmatpush1.msra.mxu0 %v1162
    %2527 = vmatprep.subr.mxu0 %v1159
    %2528 = vmatpush1.msra.mxu0 %v1158
    %2529 = vmatprep.subr.mxu0 %v1155
    %2530 = vmatpush1.msra.mxu0 %v1154
    %2531 = vmatprep.subr.mxu0 %v1151
    %2532 = vmatpush1.msra.mxu0 %v1150
    %2533 = vmatprep.subr.mxu0 %v1147
    %2534 = vmatpush1.msra.mxu0 %v1146
    %2535 = vmatprep.subr.mxu0 %v1143
    %2536 = vmatpush1.msra.mxu0 %v1142
    %2537 = vmatprep.subr.mxu0 %v1139
    %2538 = vmatpush1.msra.mxu0 %v1138
    %2539 = vmatprep.subr.mxu0 %v1135
    %2540 = vmatpush1.msra.mxu0 %v1134
    %2541 = vmatprep.subr.mxu0 %v1131
    %2542 = vmatpush1.msra.mxu0 %v1130
    %2543 = vmatprep.subr.mxu0 %v1127
    %2544 = vmatpush1.msra.mxu0 %v1126
    %2545 = vmatprep.subr.mxu0 %v1123
    %2546 = vmatpush1.msra.mxu0 %v1122
    %2547 = vmatprep.subr.mxu0 %v1119
    %2548 = vmatpush1.msra.mxu0 %v1118
    %2549 = vmatprep.subr.mxu0 0.0
    %2550 = vmatpush2.msra.mxu0 0.0
    %2551 = vmatprep.subr.mxu0 0.0
    %2552 = vmatpush2.msra.mxu0 0.0
    %2553 = vmatprep.subr.mxu0 0.0
    %2554 = vmatpush2.msra.mxu0 0.0
    %2555 = vmatprep.subr.mxu0 0.0
    %2556 = vmatpush2.msra.mxu0 0.0
    %2557 = vmatprep.subr.mxu0 0.0
    %2558 = vmatpush2.msra.mxu0 0.0
    %2559 = vmatprep.subr.mxu0 0.0
    %2560 = vmatpush2.msra.mxu0 0.0
    %2561 = vmatprep.subr.mxu0 0.0
    %2562 = vmatpush2.msra.mxu0 0.0
    %2563 = vmatprep.subr.mxu0 0.0
    %2564 = vmatpush2.msra.mxu0 0.0
    %2565 = vmatprep.subr.mxu0 0.0
    %2566 = vmatpush2.msra.mxu0 0.0
    %2567 = vmatprep.subr.mxu0 0.0
    %2568 = vmatpush2.msra.mxu0 0.0
    %2569 = vmatprep.subr.mxu0 0.0
    %2570 = vmatpush2.msra.mxu0 0.0
    %2571 = vmatprep.subr.mxu0 0.0
    %2572 = vmatpush2.msra.mxu0 0.0
    %2573 = vmatprep.subr.mxu0 0.0
    %2574 = vmatpush2.msra.mxu0 0.0
    %2575 = vmatprep.subr.mxu0 0.0
    %2576 = vmatpush2.msra.mxu0 0.0
    %2577 = vmatprep.subr.mxu0 0.0
    %2578 = vmatpush2.msra.mxu0 0.0
    %2579 = vmatprep.subr.mxu0 0.0
    %2580 = vmatpush2.msra.mxu0 0.0
    %2581 = vmatprep.mubr.f32.mxu0 0.0
    %2582 = vmatmul.mubr.f32.gmra.mxu0 %v2438
    %v2583 = vpop.f32.mrf.mxu0
    %v2584 = vadd.f32 0.0, %v2583
    %v2585 = vpop.f32.mrf.mxu0
    %v2586 = vadd.f32 0.0, %v2585
    %2587 = vmatprep.mubr.f32.mxu0 0.0
    %2588 = vmatmul.mubr.f32.gmra.mxu0 %v2439
    %v2589 = vpop.f32.mrf.mxu0
    %v2590 = vadd.f32 0.0, %v2589
    %v2591 = vpop.f32.mrf.mxu0
    %v2592 = vadd.f32 0.0, %v2591
    %2593 = vdwg.mxu0
    %v2594 = vadd.f32 %v935, %v2507
    %v2595 = vadd.f32 %v937, %v2509
    %v2596 = vadd.f32 %v1096, %v2584
    %v2597 = vadd.f32 %v1098, %v2586
    %v2598 = vadd.f32 %v941, %v2513
    %v2599 = vadd.f32 %v943, %v2515
    %v2600 = vadd.f32 %v1102, %v2590
    %v2601 = vadd.f32 %v1104, %v2592
    %v2602 = vxor.u32 %v2594, 2147483648
    %v2603 = vxor.u32 %v2598, 2147483648
    %v2604 = vmul.f32 %v2602, 1.442695
    %v2605 = vpow.pop %v2604
    %v2606 = vmul.f32 %v2603, 1.442695
    %v2607 = vpow.pop %v2606
    %v2608 = vadd.f32 %v2605, 1.0
    %v2609 = vadd.f32 %v2607, 1.0
    %v2610 = vrcp.pop %v2608
    %v2611 = vmul.f32 1.0, %v2610
    %v2612 = vrcp.pop %v2609
    %v2613 = vmul.f32 1.0, %v2612
    %v2614 = vxor.u32 %v2595, 2147483648
    %v2615 = vxor.u32 %v2599, 2147483648
    %v2616 = vmul.f32 %v2614, 1.442695
    %v2617 = vpow.pop %v2616
    %v2618 = vmul.f32 %v2615, 1.442695
    %v2619 = vpow.pop %v2618
    %v2620 = vadd.f32 %v2617, 1.0
    %v2621 = vadd.f32 %v2619, 1.0
    %v2622 = vrcp.pop %v2620
    %v2623 = vmul.f32 1.0, %v2622
    %v2624 = vrcp.pop %v2621
    %v2625 = vmul.f32 1.0, %v2624
    %v2626 = vtanh.pop %v2596
    %v2627 = vtanh.pop %v2600
    %v2628 = vxor.u32 %v2597, 2147483648
    %v2629 = vxor.u32 %v2601, 2147483648
    %v2630 = vmul.f32 %v2628, 1.442695
    %v2631 = vpow.pop %v2630
    %v2632 = vmul.f32 %v2629, 1.442695
    %v2633 = vpow.pop %v2632
    %v2634 = vadd.f32 %v2631, 1.0
    %v2635 = vadd.f32 %v2633, 1.0
    %v2636 = vrcp.pop %v2634
    %v2637 = vmul.f32 1.0, %v2636
    %v2638 = vrcp.pop %v2635
    %v2639 = vmul.f32 1.0, %v2638
    %v2640 = vmul.f32 %v2623, %v2434
    %v2641 = vmul.f32 %v2625, %v2435
    %v2642 = vmul.f32 %v2611, %v2626
    %v2643 = vmul.f32 %v2613, %v2627
    %v2644 = vadd.f32 %v2640, %v2642
    %v2645 = vadd.f32 %v2641, %v2643
    %v2646 = vtanh.pop %v2644
    %v2647 = vtanh.pop %v2645
    %v2648 = vmul.f32 %v2637, %v2646
    %v2649 = vmul.f32 %v2639, %v2647
    %2650 = vmatprep.subr.mxu0 %v1177
    %2651 = vmatpush1.msra.mxu0 %v1176
    %2652 = vmatprep.subr.mxu0 %v1173
    %2653 = vmatpush1.msra.mxu0 %v1172
    %2654 = vmatprep.subr.mxu0 %v1169
    %2655 = vmatpush1.msra.mxu0 %v1168
    %2656 = vmatprep.subr.mxu0 %v1165
    %2657 = vmatpush1.msra.mxu0 %v1164
    %2658 = vmatprep.subr.mxu0 %v1161
    %2659 = vmatpush1.msra.mxu0 %v1160
    %2660 = vmatprep.subr.mxu0 %v1157
    %2661 = vmatpush1.msra.mxu0 %v1156
    %2662 = vmatprep.subr.mxu0 %v1153
    %2663 = vmatpush1.msra.mxu0 %v1152
    %2664 = vmatprep.subr.mxu0 %v1149
    %2665 = vmatpush1.msra.mxu0 %v1148
    %2666 = vmatprep.subr.mxu0 %v1145
    %2667 = vmatpush1.msra.mxu0 %v1144
    %2668 = vmatprep.subr.mxu0 %v1141
    %2669 = vmatpush1.msra.mxu0 %v1140
    %2670 = vmatprep.subr.mxu0 %v1137
    %2671 = vmatpush1.msra.mxu0 %v1136
    %2672 = vmatprep.subr.mxu0 %v1133
    %2673 = vmatpush1.msra.mxu0 %v1132
    %2674 = vmatprep.subr.mxu0 %v1129
    %2675 = vmatpush1.msra.mxu0 %v1128
    %2676 = vmatprep.subr.mxu0 %v1125
    %2677 = vmatpush1.msra.mxu0 %v1124
    %2678 = vmatprep.subr.mxu0 %v1121
    %2679 = vmatpush1.msra.mxu0 %v1120
    %2680 = vmatprep.subr.mxu0 %v1117
    %2681 = vmatpush1.msra.mxu0 %v1116
    %2682 = vmatprep.subr.mxu0 0.0
    %2683 = vmatpush2.msra.mxu0 0.0
    %2684 = vmatprep.subr.mxu0 0.0
    %2685 = vmatpush2.msra.mxu0 0.0
    %2686 = vmatprep.subr.mxu0 0.0
    %2687 = vmatpush2.msra.mxu0 0.0
    %2688 = vmatprep.subr.mxu0 0.0
    %2689 = vmatpush2.msra.mxu0 0.0
    %2690 = vmatprep.subr.mxu0 0.0
    %2691 = vmatpush2.msra.mxu0 0.0
    %2692 = vmatprep.subr.mxu0 0.0
    %2693 = vmatpush2.msra.mxu0 0.0
    %2694 = vmatprep.subr.mxu0 0.0
    %2695 = vmatpush2.msra.mxu0 0.0
    %2696 = vmatprep.subr.mxu0 0.0
    %2697 = vmatpush2.msra.mxu0 0.0
    %2698 = vmatprep.subr.mxu0 0.0
    %2699 = vmatpush2.msra.mxu0 0.0
    %2700 = vmatprep.subr.mxu0 0.0
    %2701 = vmatpush2.msra.mxu0 0.0
    %2702 = vmatprep.subr.mxu0 0.0
    %2703 = vmatpush2.msra.mxu0 0.0
    %2704 = vmatprep.subr.mxu0 0.0
    %2705 = vmatpush2.msra.mxu0 0.0
    %2706 = vmatprep.subr.mxu0 0.0
    %2707 = vmatpush2.msra.mxu0 0.0
    %2708 = vmatprep.subr.mxu0 0.0
    %2709 = vmatpush2.msra.mxu0 0.0
    %2710 = vmatprep.subr.mxu0 0.0
    %2711 = vmatpush2.msra.mxu0 0.0
    %2712 = vmatprep.subr.mxu0 0.0
    %2713 = vmatpush2.msra.mxu0 0.0
    %2714 = vmatprep.mubr.f32.mxu0 0.0
    %2715 = vmatmul.mubr.f32.gmra.mxu0 %v2648
    %v2716 = vpop.f32.mrf.mxu0
    %v2717 = vadd.f32 0.0, %v2716
    %v2718 = vpop.f32.mrf.mxu0
    %v2719 = vadd.f32 0.0, %v2718
    %2720 = vmatprep.mubr.f32.mxu0 0.0
    %2721 = vmatmul.mubr.f32.gmra.mxu0 %v2649
    %v2722 = vpop.f32.mrf.mxu0
    %v2723 = vadd.f32 0.0, %v2722
    %v2724 = vpop.f32.mrf.mxu0
    %v2725 = vadd.f32 0.0, %v2724
    %2726 = vdwg.mxu0
    %2727 = vmatprep.subr.mxu0 %v1179
    %2728 = vmatpush1.msra.mxu0 %v1178
    %2729 = vmatprep.subr.mxu0 %v1175
    %2730 = vmatpush1.msra.mxu0 %v1174
    %2731 = vmatprep.subr.mxu0 %v1171
    %2732 = vmatpush1.msra.mxu0 %v1170
    %2733 = vmatprep.subr.mxu0 %v1167
    %2734 = vmatpush1.msra.mxu0 %v1166
    %2735 = vmatprep.subr.mxu0 %v1163
    %2736 = vmatpush1.msra.mxu0 %v1162
    %2737 = vmatprep.subr.mxu0 %v1159
    %2738 = vmatpush1.msra.mxu0 %v1158
    %2739 = vmatprep.subr.mxu0 %v1155
    %2740 = vmatpush1.msra.mxu0 %v1154
    %2741 = vmatprep.subr.mxu0 %v1151
    %2742 = vmatpush1.msra.mxu0 %v1150
    %2743 = vmatprep.subr.mxu0 %v1147
    %2744 = vmatpush1.msra.mxu0 %v1146
    %2745 = vmatprep.subr.mxu0 %v1143
    %2746 = vmatpush1.msra.mxu0 %v1142
    %2747 = vmatprep.subr.mxu0 %v1139
    %2748 = vmatpush1.msra.mxu0 %v1138
    %2749 = vmatprep.subr.mxu0 %v1135
    %2750 = vmatpush1.msra.mxu0 %v1134
    %2751 = vmatprep.subr.mxu0 %v1131
    %2752 = vmatpush1.msra.mxu0 %v1130
    %2753 = vmatprep.subr.mxu0 %v1127
    %2754 = vmatpush1.msra.mxu0 %v1126
    %2755 = vmatprep.subr.mxu0 %v1123
    %2756 = vmatpush1.msra.mxu0 %v1122
    %2757 = vmatprep.subr.mxu0 %v1119
    %2758 = vmatpush1.msra.mxu0 %v1118
    %2759 = vmatprep.subr.mxu0 0.0
    %2760 = vmatpush2.msra.mxu0 0.0
    %2761 = vmatprep.subr.mxu0 0.0
    %2762 = vmatpush2.msra.mxu0 0.0
    %2763 = vmatprep.subr.mxu0 0.0
    %2764 = vmatpush2.msra.mxu0 0.0
    %2765 = vmatprep.subr.mxu0 0.0
    %2766 = vmatpush2.msra.mxu0 0.0
    %2767 = vmatprep.subr.mxu0 0.0
    %2768 = vmatpush2.msra.mxu0 0.0
    %2769 = vmatprep.subr.mxu0 0.0
    %2770 = vmatpush2.msra.mxu0 0.0
    %2771 = vmatprep.subr.mxu0 0.0
    %2772 = vmatpush2.msra.mxu0 0.0
    %2773 = vmatprep.subr.mxu0 0.0
    %2774 = vmatpush2.msra.mxu0 0.0
    %2775 = vmatprep.subr.mxu0 0.0
    %2776 = vmatpush2.msra.mxu0 0.0
    %2777 = vmatprep.subr.mxu0 0.0
    %2778 = vmatpush2.msra.mxu0 0.0
    %2779 = vmatprep.subr.mxu0 0.0
    %2780 = vmatpush2.msra.mxu0 0.0
    %2781 = vmatprep.subr.mxu0 0.0
    %2782 = vmatpush2.msra.mxu0 0.0
    %2783 = vmatprep.subr.mxu0 0.0
    %2784 = vmatpush2.msra.mxu0 0.0
    %2785 = vmatprep.subr.mxu0 0.0
    %2786 = vmatpush2.msra.mxu0 0.0
    %2787 = vmatprep.subr.mxu0 0.0
    %2788 = vmatpush2.msra.mxu0 0.0
    %2789 = vmatprep.subr.mxu0 0.0
    %2790 = vmatpush2.msra.mxu0 0.0
    %2791 = vmatprep.mubr.f32.mxu0 0.0
    %2792 = vmatmul.mubr.f32.gmra.mxu0 %v2648
    %v2793 = vpop.f32.mrf.mxu0
    %v2794 = vadd.f32 0.0, %v2793
    %v2795 = vpop.f32.mrf.mxu0
    %2796 = vmatprep.mubr.f32.mxu0 0.0
    %2797 = vmatmul.mubr.f32.gmra.mxu0 %v2649
    %v2798 = vpop.f32.mrf.mxu0
    %v2799 = vadd.f32 0.0, %v2798
    %v2800 = vpop.f32.mrf.mxu0
    %2801 = vdwg.mxu0
    %v2802 = vadd.f32 %v947, %v2717
    %v2803 = vadd.f32 %v949, %v2719
    %v2804 = vadd.f32 %v1108, %v2794
    %v2805 = vadd.f32 %v953, %v2723
    %v2806 = vadd.f32 %v955, %v2725
    %v2807 = vadd.f32 %v1113, %v2799
    %v2808 = vxor.u32 %v2802, 2147483648
    %v2809 = vxor.u32 %v2805, 2147483648
    %v2810 = vmul.f32 %v2808, 1.442695
    %v2811 = vpow.pop %v2810
    %v2812 = vmul.f32 %v2809, 1.442695
    %v2813 = vpow.pop %v2812
    %v2814 = vadd.f32 %v2811, 1.0
    %v2815 = vadd.f32 %v2813, 1.0
    %v2816 = vrcp.pop %v2814
    %v2817 = vmul.f32 1.0, %v2816
    %v2818 = vrcp.pop %v2815
    %v2819 = vmul.f32 1.0, %v2818
    %v2820 = vxor.u32 %v2803, 2147483648
    %v2821 = vxor.u32 %v2806, 2147483648
    %v2822 = vmul.f32 %v2820, 1.442695
    %v2823 = vpow.pop %v2822
    %v2824 = vmul.f32 %v2821, 1.442695
    %v2825 = vpow.pop %v2824
    %v2826 = vadd.f32 %v2823, 1.0
    %v2827 = vadd.f32 %v2825, 1.0
    %v2828 = vrcp.pop %v2826
    %v2829 = vmul.f32 1.0, %v2828
    %v2830 = vrcp.pop %v2827
    %v2831 = vmul.f32 1.0, %v2830
    %v2832 = vtanh.pop %v2804
    %v2833 = vtanh.pop %v2807
    %v2834 = vmul.f32 %v2829, %v2644
    %v2835 = vmul.f32 %v2831, %v2645
    %v2836 = vmul.f32 %v2817, %v2832
    %v2837 = vmul.f32 %v2819, %v2833
    %v2838 = vadd.f32 %v2834, %v2836
    %v2839 = vadd.f32 %v2835, %v2837
    %v2840 = vld [vmem:[#allocation2] sm:$0xff]
    %v2841 = vld [vmem:[#allocation2 + $0x8] sm:$0xff]
    %v2842 = vld [vmem:[%s9] sm:$0xff]
    %v2843 = vld [vmem:[%s9 + $0x8] sm:$0xff]
    %v2844 = vld [vmem:[%s9 + $0x10] sm:$0xf]
    %v2845 = vld [vmem:[%s10] sm:$0x1]
    %v2847 = vlaneseq
    %v2848 = vshrl.u32 %v2847, 7
    %v2849 = vsub.s32 0, %v2848
    %v2850 = vrot.slane %v2845, %v2849
    %vm2852 = vcmask 162816
    %v2854 = vsel %vm2852, %v2840, 0
    %v2857 = vsel %vm2852, %v2841, 0
    %vm2859 = vcmask 1043456
    %v2861 = vsel %vm2859, %v2844, 0
    %2863 = vmatprep.subr.mxu0 0.0
    %2864 = vmatpush1.msra.mxu0 0.0
    %2865 = vmatprep.subr.mxu0 0.0
    %2866 = vmatpush1.msra.mxu0 0.0
    %2867 = vmatprep.subr.mxu0 0.0
    %2868 = vmatpush1.msra.mxu0 0.0
    %2869 = vmatprep.subr.mxu0 0.0
    %2870 = vmatpush1.msra.mxu0 0.0
    %2871 = vmatprep.subr.mxu0 0.0
    %2872 = vmatpush1.msra.mxu0 0.0
    %2873 = vmatprep.subr.mxu0 0.0
    %2874 = vmatpush1.msra.mxu0 0.0
    %2875 = vmatprep.subr.mxu0 0.0
    %2876 = vmatpush1.msra.mxu0 0.0
    %2877 = vmatprep.subr.mxu0 0.0
    %2878 = vmatpush1.msra.mxu0 0.0
    %2879 = vmatprep.subr.mxu0 0.0
    %2880 = vmatpush1.msra.mxu0 0.0
    %2881 = vmatprep.subr.mxu0 0.0
    %2882 = vmatpush1.msra.mxu0 0.0
    %2883 = vmatprep.subr.mxu0 0.0
    %2884 = vmatpush1.msra.mxu0 0.0
    %2885 = vmatprep.subr.mxu0 0.0
    %2886 = vmatpush1.msra.mxu0 0.0
    %2887 = vmatprep.subr.mxu0 0.0
    %2888 = vmatpush1.msra.mxu0 0.0
    %2889 = vmatprep.subr.mxu0 0.0
    %2890 = vmatpush1.msra.mxu0 %v2861
    %2891 = vmatprep.subr.mxu0 0.0
    %2892 = vmatpush1.msra.mxu0 %v2843
    %2893 = vmatprep.subr.mxu0 0.0
    %2894 = vmatpush1.msra.mxu0 %v2842
    %2895 = vmatprep.subr.mxu0 0.0
    %2896 = vmatpush2.msra.mxu0 0.0
    %2897 = vmatprep.subr.mxu0 0.0
    %2898 = vmatpush2.msra.mxu0 0.0
    %2899 = vmatprep.subr.mxu0 0.0
    %2900 = vmatpush2.msra.mxu0 0.0
    %2901 = vmatprep.subr.mxu0 0.0
    %2902 = vmatpush2.msra.mxu0 0.0
    %2903 = vmatprep.subr.mxu0 0.0
    %2904 = vmatpush2.msra.mxu0 0.0
    %2905 = vmatprep.subr.mxu0 0.0
    %2906 = vmatpush2.msra.mxu0 0.0
    %2907 = vmatprep.subr.mxu0 0.0
    %2908 = vmatpush2.msra.mxu0 0.0
    %2909 = vmatprep.subr.mxu0 0.0
    %2910 = vmatpush2.msra.mxu0 0.0
    %2911 = vmatprep.subr.mxu0 0.0
    %2912 = vmatpush2.msra.mxu0 0.0
    %2913 = vmatprep.subr.mxu0 0.0
    %2914 = vmatpush2.msra.mxu0 0.0
    %2915 = vmatprep.subr.mxu0 0.0
    %2916 = vmatpush2.msra.mxu0 0.0
    %2917 = vmatprep.subr.mxu0 0.0
    %2918 = vmatpush2.msra.mxu0 0.0
    %2919 = vmatprep.subr.mxu0 0.0
    %2920 = vmatpush2.msra.mxu0 0.0
    %2921 = vmatprep.subr.mxu0 0.0
    %2922 = vmatpush2.msra.mxu0 0.0
    %2923 = vmatprep.subr.mxu0 0.0
    %2924 = vmatpush2.msra.mxu0 0.0
    %2925 = vmatprep.subr.mxu0 0.0
    %2926 = vmatpush2.msra.mxu0 0.0
    %2927 = vmatprep.mubr.f32.mxu0 0.0
    %2928 = vmatmul.mubr.f32.gmra.mxu0 %v2854
    %v2929 = vpop.f32.mrf.mxu0
    %v2930 = vadd.f32 %v2850, %v2929
    %v2931 = vpop.f32.mrf.mxu0
    %2932 = vmatprep.mubr.f32.mxu0 0.0
    %2933 = vmatmul.mubr.f32.gmra.mxu0 %v2857
    %v2934 = vpop.f32.mrf.mxu0
    %v2935 = vadd.f32 %v2850, %v2934
    %v2936 = vpop.f32.mrf.mxu0
    %2937 = vdwg.mxu0
    %v2938 = vtanh.pop %v2930
    %v2939 = vtanh.pop %v2935
    %v2940 = vld [vmem:[%s11] sm:$0xff]
    %v2941 = vld [vmem:[%s11 + $0x8] sm:$0xff]
    %v2942 = vld [vmem:[%s11 + $0x10] sm:$0xff]
    %v2943 = vld [vmem:[%s11 + $0x18] sm:$0xff]
    %v2944 = vld [vmem:[%s11 + $0x20] sm:$0xff]
    %v2945 = vld [vmem:[%s11 + $0x28] sm:$0xff]
    %v2946 = vld [vmem:[%s11 + $0x30] sm:$0xff]
    %v2947 = vld [vmem:[%s11 + $0x38] sm:$0xff]
    %v2948 = vld [vmem:[%s11 + $0x40] sm:$0xff]
    %v2949 = vld [vmem:[%s11 + $0x48] sm:$0xff]
    %v2950 = vld [vmem:[%s12] sm:$0x1]
    %v2952 = vlaneseq
    %v2953 = vshrl.u32 %v2952, 7
    %v2954 = vsub.s32 0, %v2953
    %v2955 = vrot.slane %v2950, %v2954
    %vm2957 = vcmask 654336
    %v2959 = vsel %vm2957, %v2938, 0
    %v2962 = vsel %vm2957, %v2939, 0
    %2964 = vmatprep.subr.mxu0 0.0
    %2965 = vmatpush1.msra.mxu0 0.0
    %2966 = vmatprep.subr.mxu0 0.0
    %2967 = vmatpush1.msra.mxu0 0.0
    %2968 = vmatprep.subr.mxu0 0.0
    %2969 = vmatpush1.msra.mxu0 0.0
    %2970 = vmatprep.subr.mxu0 0.0
    %2971 = vmatpush1.msra.mxu0 0.0
    %2972 = vmatprep.subr.mxu0 0.0
    %2973 = vmatpush1.msra.mxu0 0.0
    %2974 = vmatprep.subr.mxu0 0.0
    %2975 = vmatpush1.msra.mxu0 0.0
    %2976 = vmatprep.subr.mxu0 0.0
    %2977 = vmatpush1.msra.mxu0 %v2949
    %2978 = vmatprep.subr.mxu0 0.0
    %2979 = vmatpush1.msra.mxu0 %v2948
    %2980 = vmatprep.subr.mxu0 0.0
    %2981 = vmatpush1.msra.mxu0 %v2947
    %2982 = vmatprep.subr.mxu0 0.0
    %2983 = vmatpush1.msra.mxu0 %v2946
    %2984 = vmatprep.subr.mxu0 0.0
    %2985 = vmatpush1.msra.mxu0 %v2945
    %2986 = vmatprep.subr.mxu0 0.0
    %2987 = vmatpush1.msra.mxu0 %v2944
    %2988 = vmatprep.subr.mxu0 0.0
    %2989 = vmatpush1.msra.mxu0 %v2943
    %2990 = vmatprep.subr.mxu0 0.0
    %2991 = vmatpush1.msra.mxu0 %v2942
    %2992 = vmatprep.subr.mxu0 0.0
    %2993 = vmatpush1.msra.mxu0 %v2941
    %2994 = vmatprep.subr.mxu0 0.0
    %2995 = vmatpush1.msra.mxu0 %v2940
    %2996 = vmatprep.subr.mxu0 0.0
    %2997 = vmatpush2.msra.mxu0 0.0
    %2998 = vmatprep.subr.mxu0 0.0
    %2999 = vmatpush2.msra.mxu0 0.0
    %3000 = vmatprep.subr.mxu0 0.0
    %3001 = vmatpush2.msra.mxu0 0.0
    %3002 = vmatprep.subr.mxu0 0.0
    %3003 = vmatpush2.msra.mxu0 0.0
    %3004 = vmatprep.subr.mxu0 0.0
    %3005 = vmatpush2.msra.mxu0 0.0
    %3006 = vmatprep.subr.mxu0 0.0
    %3007 = vmatpush2.msra.mxu0 0.0
    %3008 = vmatprep.subr.mxu0 0.0
    %3009 = vmatpush2.msra.mxu0 0.0
    %3010 = vmatprep.subr.mxu0 0.0
    %3011 = vmatpush2.msra.mxu0 0.0
    %3012 = vmatprep.subr.mxu0 0.0
    %3013 = vmatpush2.msra.mxu0 0.0
    %3014 = vmatprep.subr.mxu0 0.0
    %3015 = vmatpush2.msra.mxu0 0.0
    %3016 = vmatprep.subr.mxu0 0.0
    %3017 = vmatpush2.msra.mxu0 0.0
    %3018 = vmatprep.subr.mxu0 0.0
    %3019 = vmatpush2.msra.mxu0 0.0
    %3020 = vmatprep.subr.mxu0 0.0
    %3021 = vmatpush2.msra.mxu0 0.0
    %3022 = vmatprep.subr.mxu0 0.0
    %3023 = vmatpush2.msra.mxu0 0.0
    %3024 = vmatprep.subr.mxu0 0.0
    %3025 = vmatpush2.msra.mxu0 0.0
    %3026 = vmatprep.subr.mxu0 0.0
    %3027 = vmatpush2.msra.mxu0 0.0
    %3028 = vmatprep.mubr.f32.mxu0 0.0
    %3029 = vmatmul.mubr.f32.gmra.mxu0 %v2959
    %v3030 = vpop.f32.mrf.mxu0
    %v3031 = vadd.f32 %v2955, %v3030
    %v3032 = vpop.f32.mrf.mxu0
    %3033 = vmatprep.mubr.f32.mxu0 0.0
    %3034 = vmatmul.mubr.f32.gmra.mxu0 %v2962
    %v3035 = vpop.f32.mrf.mxu0
    %v3036 = vadd.f32 %v2955, %v3035
    %v3037 = vpop.f32.mrf.mxu0
    %3038 = vdwg.mxu0
    %v3039 = vlaneseq
    %v3040 = vshrl.u32 %v3039, 7
    %vm3041 = vcmp.lt.s32.totalorder %v3040, 3
    %vm3042 = vcmp.lt.s32.totalorder %v3040, 2
    %v3043 = vsel %vm3041, 1, 0
    %vm3044 = vcmp.eq.s32.totalorder %v3043, 1
    %v3045 = vsel %vm3044, %v2838, -inf
    %v3046 = vsel %vm3044, %v2839, -inf
    %v3047 = vrot.slane %v3045, 4
    %v3048 = vmax.f32 %v3045, %v3047
    %v3049 = vrot.slane %v3048, 2
    %v3050 = vmax.f32 %v3048, %v3049
    %v3051 = vrot.slane %v3050, 1
    %v3052 = vmax.f32 %v3050, %v3051
    %v3053 = vrot.slane %v3046, 4
    %v3054 = vmax.f32 %v3046, %v3053
    %v3055 = vrot.slane %v3054, 2
    %v3056 = vmax.f32 %v3054, %v3055
    %v3057 = vrot.slane %v3056, 1
    %v3058 = vmax.f32 %v3056, %v3057
    %v3059 = vsel %vm3042, 1, 0
    %vm3060 = vcmp.eq.s32.totalorder %v3059, 1
    %v3061 = vsel %vm3060, %v3031, -inf
    %v3062 = vsel %vm3060, %v3036, -inf
    %v3063 = vrot.slane %v3061, 4
    %v3064 = vmax.f32 %v3061, %v3063
    %v3065 = vrot.slane %v3064, 2
    %v3066 = vmax.f32 %v3064, %v3065
    %v3067 = vrot.slane %v3066, 1
    %v3068 = vmax.f32 %v3066, %v3067
    %v3069 = vrot.slane %v3062, 4
    %v3070 = vmax.f32 %v3062, %v3069
    %v3071 = vrot.slane %v3070, 2
    %v3072 = vmax.f32 %v3070, %v3071
    %v3073 = vrot.slane %v3072, 1
    %v3074 = vmax.f32 %v3072, %v3073
    %v3075 = vmax.f32 %v3052, %v3068
    %v3076 = vmax.f32 %v3058, %v3074
    %v3077 = vsub.f32 %v2838, %v3075
    %v3078 = vsub.f32 %v2839, %v3076
    %v3079 = vmul.f32 %v3077, 1.442695
    %v3080 = vpow.pop %v3079
    %v3081 = vmul.f32 %v3078, 1.442695
    %v3082 = vpow.pop %v3081
    %v3083 = vsel %vm3044, %v3080, 0.0
    %v3084 = vsel %vm3044, %v3082, 0.0
    %v3085 = vsub.f32 %v3031, %v3075
    %v3086 = vsub.f32 %v3036, %v3076
    %v3087 = vmul.f32 %v3085, 1.442695
    %v3088 = vpow.pop %v3087
    %v3089 = vmul.f32 %v3086, 1.442695
    %v3090 = vpow.pop %v3089
    %v3091 = vsel %vm3060, %v3088, 0.0
    %v3092 = vsel %vm3060, %v3090, 0.0
    %v3093 = vmul.f32 %v3083, %v2838
    %v3094 = vmul.f32 %v3084, %v2839
    %v3095 = vrot.slane %v3093, 4
    %v3096 = vadd.f32 %v3093, %v3095
    %v3097 = vrot.slane %v3096, 2
    %v3098 = vadd.f32 %v3096, %v3097
    %v3099 = vrot.slane %v3098, 1
    %v3100 = vadd.f32 %v3098, %v3099
    %v3101 = vrot.slane %v3094, 4
    %v3102 = vadd.f32 %v3094, %v3101
    %v3103 = vrot.slane %v3102, 2
    %v3104 = vadd.f32 %v3102, %v3103
    %v3105 = vrot.slane %v3104, 1
    %v3106 = vadd.f32 %v3104, %v3105
    %v3107 = vmul.f32 %v3091, %v3031
    %v3108 = vmul.f32 %v3092, %v3036
    %v3109 = vrot.slane %v3107, 4
    %v3110 = vadd.f32 %v3107, %v3109
    %v3111 = vrot.slane %v3110, 2
    %v3112 = vadd.f32 %v3110, %v3111
    %v3113 = vrot.slane %v3112, 1
    %v3114 = vadd.f32 %v3112, %v3113
    %v3115 = vrot.slane %v3108, 4
    %v3116 = vadd.f32 %v3108, %v3115
    %v3117 = vrot.slane %v3116, 2
    %v3118 = vadd.f32 %v3116, %v3117
    %v3119 = vrot.slane %v3118, 1
    %v3120 = vadd.f32 %v3118, %v3119
    %v3121 = vadd.f32 %v3100, %v3114
    %v3122 = vadd.f32 %v3106, %v3120
    %v3123 = vrot.slane %v3083, 4
    %v3124 = vadd.f32 %v3083, %v3123
    %v3125 = vrot.slane %v3124, 2
    %v3126 = vadd.f32 %v3124, %v3125
    %v3127 = vrot.slane %v3126, 1
    %v3128 = vadd.f32 %v3126, %v3127
    %v3129 = vrot.slane %v3084, 4
    %v3130 = vadd.f32 %v3084, %v3129
    %v3131 = vrot.slane %v3130, 2
    %v3132 = vadd.f32 %v3130, %v3131
    %v3133 = vrot.slane %v3132, 1
    %v3134 = vadd.f32 %v3132, %v3133
    %v3135 = vrot.slane %v3091, 4
    %v3136 = vadd.f32 %v3091, %v3135
    %v3137 = vrot.slane %v3136, 2
    %v3138 = vadd.f32 %v3136, %v3137
    %v3139 = vrot.slane %v3138, 1
    %v3140 = vadd.f32 %v3138, %v3139
    %v3141 = vrot.slane %v3092, 4
    %v3142 = vadd.f32 %v3092, %v3141
    %v3143 = vrot.slane %v3142, 2
    %v3144 = vadd.f32 %v3142, %v3143
    %v3145 = vrot.slane %v3144, 1
    %v3146 = vadd.f32 %v3144, %v3145
    %v3147 = vadd.f32 %v3128, %v3140
    %v3148 = vadd.f32 %v3134, %v3146
    %v3149 = vrcp.pop %v3147
    %v3150 = vmul.f32 %v3121, %v3149
    %v3151 = vrcp.pop %v3148
    %v3152 = vmul.f32 %v3122, %v3151
    %vm3155 = vcmask 1041409
    %v3156 = vsel %vm3155, %v3152, %v3150
    %3158 = vst [vmem:[#allocation8] sm:$0x3] %v3156
    // Predicated region
    $region66: #{tpu_custom_call.1} parent=1 // pred_check
      _
    $region67: #{tpu_custom_call.1} parent=1 // pred_check_branch
      %3160 = sbr.rel (0) target = $region69
    $region68: #{tpu_custom_call.1} parent=1 // pred_region
      %s3162 = ssub.s32 32, 32
      %3163 = vsyncadd [#allocation4], %s3162
      %s3165 = sshll.u32 [#allocation8], 4
      %s3166 = int_to_ptr.vmem [resolvable:$true] %s3165
      %3168 = dma.vmem_to_hbm [thread:$0]  %s3166, 32, %s13, [#allocation4]
    $region69: #{tpu_custom_call.1} parent=1 // pred_fallthru
      _
    // Predicated region
    $region70: #{tpu_custom_call.1} parent=1 // pred_check
      _
    $region71: #{tpu_custom_call.1} parent=1 // pred_check_branch
      %3170 = sbr.rel (0) target = $region73
    $region72: #{tpu_custom_call.1} parent=1 // pred_region
      %3171 = dma.done [#allocation4], 32
    $region73: #{tpu_custom_call.1} parent=1 // pred_fallthru
      _
    %3172 = vsyncpa [#allocation3], 1
    %3173 = vsyncpa [#allocation6], 1
    %3174 = vsyncpa [#allocation4], 1

</llo_original>
